<compile_context>
chip_gen: v7x
topology: tpu7x:2x2x1
jax: 0.10.0
libtpu: 0.0.40
codegen_flags: <defaults>
</compile_context>

<pallas_src>
import functools

import jax
import jax.numpy as jnp
from jax.experimental import pallas as pl
from jax.experimental.pallas import tpu as pltpu


# ----------------------------------------------------------------------------
# helpers
# ----------------------------------------------------------------------------
def _round_up(x, m):
    return ((x + m - 1) // m) * m


def _pad_to(x, shape):
    pads = [(0, t - s) for s, t in zip(x.shape, shape)]
    return jnp.pad(x, pads)


def _make_tap_mask(H, W):
    """[9, H*W] float mask: 1 where the 3x3 tap (di,dj) of pixel p is in bounds."""
    p = jnp.arange(H * W)
    h = p // W
    w = p % W
    rows = []
    for di in (-1, 0, 1):
        for dj in (-1, 0, 1):
            ok = (h + di >= 0) & (h + di < H) & (w + dj >= 0) & (w + dj < W)
            rows.append(ok)
    return jnp.stack(rows, axis=0).astype(jnp.float32)


# ----------------------------------------------------------------------------
# fused Pallas kernel: point MLP -> raster -> conv -> conv stem -> GAP -> head
# ----------------------------------------------------------------------------
def _p2p_fused_kernel(pc_ref, opc_ref, w1_ref, b1_ref, w2_ref, b2_ref,
                      tapmask_ref, encw_ref, encb_ref, stemw_ref, stemb_ref,
                      headw_ref, headb_ref, o_ref, *, H, W, C_IN, N, B_TILE):
    f32 = jnp.float32
    HW = H * W
    BHW = B_TILE * HW
    PAD = W + 1                       # covers the full tap-offset range [-(W+1), W+1]

    # ---- ProjEnc point MLP, batch-stacked along the GEMM M dim: [B_TILE*N, ...] ----
    pts = pc_ref[...]                                                   # [BT*N, 3]
    h = jnp.maximum(
        jnp.dot(pts, w1_ref[...], preferred_element_type=f32) + b1_ref[...], 0.0)
    colors = jnp.maximum(
        jnp.dot(h, w2_ref[...], preferred_element_type=f32) + b2_ref[...], 0.0)
    # colors: [BT*N, 3], >= 0 because of the ReLU (required for the max-raster below)

    # ---- rasterize: scatter-max via one-hot compare + sublane max, channels-major ----
    imgs = []
    for b in range(B_TILE):
        opc_b = opc_ref[b * N:(b + 1) * N, :]                           # [N, 3]
        u = jnp.clip((opc_b[:, 0:1] + 1.0) * 0.5, 0.0, 1.0 - 1e-6)      # [N, 1]
        v = jnp.clip((opc_b[:, 1:2] + 1.0) * 0.5, 0.0, 1.0 - 1e-6)
        xi = (u * W).astype(jnp.int32)
        yi = (v * H).astype(jnp.int32)
        pix = yi * W + xi                                               # [N, 1]
        hw_iota = jax.lax.broadcasted_iota(jnp.int32, (N, HW), 1)
        onehot = (hw_iota == pix).astype(f32)                           # [N, HW]
        colors_b = colors[b * N:(b + 1) * N, :]                         # [N, 3]
        rows = [jnp.max(onehot * colors_b[:, c:c + 1], axis=0, keepdims=True)
                for c in range(C_IN)]                                   # each [1, HW]
        imgs.append(jnp.concatenate(rows, axis=0))                      # [C_IN, HW]
    img = jnp.concatenate(imgs, axis=1)                                 # [C_IN, BT*HW]

    # ---- 3x3 convs: im2col patches [9*C_IN, BT*HW] -> single K=27 GEMM each ----
    # Lane-padded image + lane-dense tap mask (mask zeroes every tap whose source
    # pixel is out of bounds, which also kills row-wrap and cross-batch leakage).
    def conv3x3(w_ref, b_ref, src):
        zpad = jnp.zeros((src.shape[0], PAD), f32)
        srcp = jnp.concatenate([zpad, src, zpad], axis=1)               # [C, BHW+2*PAD]
        taps = []
        for t in range(9):
            di, dj = t // 3 - 1, t % 3 - 1
            delta = di * W + dj
            tap = srcp[:, PAD + delta:PAD + delta + BHW]                # [C, BHW]
            taps.append(tap * tapmask_ref[t:t + 1, :])                  # lane-dense mask
        patches = jnp.concatenate(taps, axis=0)                         # [9*C, BHW]
        out = jnp.dot(w_ref[...], patches, preferred_element_type=f32) + b_ref[...]
        return jnp.maximum(out, 0.0)                                    # [C_out, BHW]

    img2 = conv3x3(encw_ref, encb_ref, img)                             # [C_IN, BHW]
    feats = conv3x3(stemw_ref, stemb_ref, img2)                         # [F, BHW]

    # ---- per-batch GAP + linear head; lane-dense [1, 128] logits store ----
    for b in range(B_TILE):
        pooled = jnp.mean(feats[:, b * HW:(b + 1) * HW], axis=1, keepdims=True)  # [F,1]
        logits = (jnp.sum(pooled * headw_ref[...], axis=0, keepdims=True)
                  + headb_ref[...])                                     # [1, C_P]
        o_ref[b] = logits.astype(o_ref.dtype)


# ----------------------------------------------------------------------------
# P2P forward
# ----------------------------------------------------------------------------
def make_params(key, *, point_hidden=32, stem_features=32, classes=10):
    ks = jax.random.split(key, 10)
    scale = lambda fan_in: 1.0 / jnp.sqrt(fan_in)
    p = {
        # ProjEnc point MLP: 3 -> point_hidden -> 3 (per-point "colors")
        "enc_fc1_w": jax.random.normal(ks[0], (3, point_hidden)) * scale(3),
        "enc_fc1_b": jnp.zeros((1, point_hidden)),
        "enc_fc2_w": jax.random.normal(ks[1], (point_hidden, 3)) * scale(point_hidden),
        "enc_fc2_b": jnp.zeros((1, 3)),
        # ProjEnc 3x3 conv (3 -> 3), stored as GEMM weight [9*3, 3]
        "enc_conv_w": jax.random.normal(ks[2], (9 * 3, 3)) * scale(9 * 3),
        "enc_conv_b": jnp.zeros((1, 3)),
        # base-model conv stem 3x3 (3 -> stem_features), as GEMM [9*3, F]
        "stem_conv_w": jax.random.normal(ks[3], (9 * 3, stem_features)) * scale(9 * 3),
        "stem_conv_b": jnp.zeros((1, stem_features)),
        # classification head (linear): F -> classes
        "head_w": jax.random.normal(ks[4], (stem_features, classes)) * scale(stem_features),
        "head_b": jnp.zeros((1, classes)),
    }
    return p


def p2p_forward(params, pc, original_pc, *, H=16, W=16, B_TILE=2):
    """pc, original_pc: [B, N, 3] float32 point clouds in [-1, 1] -> [B, classes]."""
    B, N, _ = pc.shape
    HW = H * W
    C_IN = 3

    hid = params["enc_fc1_w"].shape[1]
    feat = params["stem_conv_w"].shape[1]
    classes = params["head_w"].shape[1]
    C_P = _round_up(classes, 128)      # only the HBM-stored logits get a lane pad

    # Pad batch to a multiple of B_TILE (padded elements are dropped at the end).
    Bp = _round_up(B, B_TILE)
    if Bp != B:
        pad = Bp - B
        pc = jnp.concatenate([pc, jnp.zeros((pad, N, 3), pc.dtype)], axis=0)
        original_pc = jnp.concatenate(
            [original_pc, jnp.zeros((pad, N, 3), original_pc.dtype)], axis=0)
    G = Bp // B_TILE

    pc_flat = pc.reshape(Bp * N, 3)
    opc_flat = original_pc.reshape(Bp * N, 3)

    # Weights in the layouts the kernel consumes (no 128-rounding except the head).
    w1 = params["enc_fc1_w"]                                  # [3, hid]
    b1 = params["enc_fc1_b"]                                  # [1, hid]
    w2 = params["enc_fc2_w"]                                  # [hid, 3]
    b2 = params["enc_fc2_b"]                                  # [1, 3]
    encw = params["enc_conv_w"].T                             # [3, 27]
    encb = params["enc_conv_b"].T                             # [3, 1]
    stemw = params["stem_conv_w"].T                           # [F, 27]
    stemb = params["stem_conv_b"].T                           # [F, 1]
    headw = _pad_to(params["head_w"], (feat, C_P))            # [F, C_P]
    headb = _pad_to(params["head_b"], (1, C_P))               # [1, C_P]
    tapmask = jnp.tile(_make_tap_mask(H, W), (1, B_TILE))     # [9, B_TILE*HW]

    out = pl.pallas_call(
        functools.partial(_p2p_fused_kernel, H=H, W=W, C_IN=C_IN, N=N,
                          B_TILE=B_TILE),
        out_shape=jax.ShapeDtypeStruct((Bp, 1, C_P), jnp.float32),
        grid=(G,),
        in_specs=[
            pl.BlockSpec((B_TILE * N, 3), lambda g: (g, 0)),          # pc (flat)
            pl.BlockSpec((B_TILE * N, 3), lambda g: (g, 0)),          # original_pc
            pl.BlockSpec((3, hid), lambda g: (0, 0)),                 # w1
            pl.BlockSpec((1, hid), lambda g: (0, 0)),                 # b1
            pl.BlockSpec((hid, 3), lambda g: (0, 0)),                 # w2
            pl.BlockSpec((1, 3), lambda g: (0, 0)),                   # b2
            pl.BlockSpec((9, B_TILE * HW), lambda g: (0, 0)),         # tap mask
            pl.BlockSpec((C_IN, 9 * C_IN), lambda g: (0, 0)),         # enc conv w
            pl.BlockSpec((C_IN, 1), lambda g: (0, 0)),                # enc conv b
            pl.BlockSpec((feat, 9 * C_IN), lambda g: (0, 0)),         # stem conv w
            pl.BlockSpec((feat, 1), lambda g: (0, 0)),                # stem conv b
            pl.BlockSpec((feat, C_P), lambda g: (0, 0)),              # head w
            pl.BlockSpec((1, C_P), lambda g: (0, 0)),                 # head b
        ],
        out_specs=pl.BlockSpec((B_TILE, 1, C_P), lambda g: (g, 0, 0)),
        compiler_params=pltpu.CompilerParams(
            dimension_semantics=("parallel",)),                       # v7x: 2 TCs share G
    )(pc_flat, opc_flat, w1, b1, w2, b2, tapmask,
      encw, encb, stemw, stemb, headw, headb)

    return out.reshape(Bp, C_P)[:B, :classes]


# ----------------------------------------------------------------------------
# plain-JAX reference (same math, un-fused) for correctness checking
# ----------------------------------------------------------------------------
def _reference_forward(params, pc, original_pc, *, H=16, W=16):
    B, N, _ = pc.shape
    hp = jax.lax.Precision.HIGHEST

    pts = pc.reshape(B * N, 3)
    h = jnp.maximum(jnp.dot(pts, params["enc_fc1_w"], precision=hp)
                    + params["enc_fc1_b"], 0.0)
    colors = jnp.maximum(jnp.dot(h, params["enc_fc2_w"], precision=hp)
                         + params["enc_fc2_b"], 0.0).reshape(B, N, 3)

    xy = jnp.clip((original_pc[..., :2] + 1.0) * 0.5, 0.0, 1.0 - 1e-6)
    xi = (xy[..., 0] * W).astype(jnp.int32)
    yi = (xy[..., 1] * H).astype(jnp.int32)
    bidx = jnp.broadcast_to(jnp.arange(B)[:, None], (B, N))
    img = jnp.zeros((B, H, W, 3), jnp.float32).at[bidx, yi, xi].max(colors)

    def im2col(x):
        Bx, Hx, Wx, Cx = x.shape
        xp = jnp.pad(x, ((0, 0), (1, 1), (1, 1), (0, 0)))
        cols = [xp[:, di:di + Hx, dj:dj + Wx, :] for di in range(3) for dj in range(3)]
        return jnp.concatenate(cols, axis=-1).reshape(Bx * Hx * Wx, 9 * Cx)

    img = jnp.maximum(jnp.dot(im2col(img), params["enc_conv_w"], precision=hp)
                      + params["enc_conv_b"], 0.0).reshape(B, H, W, 3)
    feats = jnp.maximum(jnp.dot(im2col(img), params["stem_conv_w"], precision=hp)
                        + params["stem_conv_b"], 0.0).reshape(B, H * W, -1)
    pooled = jnp.mean(feats, axis=1)
    return jnp.dot(pooled, params["head_w"], precision=hp) + params["head_b"]


# ----------------------------------------------------------------------------
if __name__ == "__main__":
    key = jax.random.PRNGKey(0)
    k_param, k_pc, k_opc = jax.random.split(key, 3)

    B, N = 4, 128          # grid = B // B_TILE = 2 steps -> both v7x TCs get work
    H = W = 16
    classes = 10

    params = make_params(k_param, point_hidden=32, stem_features=32,
                         classes=classes)
    pc = jax.random.uniform(k_pc, (B, N, 3), jnp.float32, -1.0, 1.0)
    original_pc = jax.random.uniform(k_opc, (B, N, 3), jnp.float32, -1.0, 1.0)

    fwd = jax.jit(functools.partial(p2p_forward, H=H, W=W, B_TILE=2))
    out = fwd(params, pc, original_pc)
    jax.block_until_ready(out)

    assert out.shape == (B, classes), out.shape
    assert out.dtype == jnp.float32

    ref = jax.jit(functools.partial(_reference_forward, H=H, W=W))(
        params, pc, original_pc)
    jax.block_until_ready(ref)
    assert jnp.allclose(out, ref, atol=1e-2, rtol=1e-2), \
        float(jnp.max(jnp.abs(out - ref)))

    print("KERNEL_OK")
</pallas_src>

<mosaic_0001>
module attributes {stable_mosaic.version = 11 : i64} {
  func.func @_p2p_fused_kernel(%arg0: i32, %arg1: memref<256x3xf32, #tpu.memory_space<vmem>>, %arg2: memref<256x3xf32, #tpu.memory_space<vmem>>, %arg3: memref<3x32xf32, #tpu.memory_space<vmem>>, %arg4: memref<1x32xf32, #tpu.memory_space<vmem>>, %arg5: memref<32x3xf32, #tpu.memory_space<vmem>>, %arg6: memref<1x3xf32, #tpu.memory_space<vmem>>, %arg7: memref<9x512xf32, #tpu.memory_space<vmem>>, %arg8: memref<3x27xf32, #tpu.memory_space<vmem>>, %arg9: memref<3x1xf32, #tpu.memory_space<vmem>>, %arg10: memref<32x27xf32, #tpu.memory_space<vmem>>, %arg11: memref<32x1xf32, #tpu.memory_space<vmem>>, %arg12: memref<32x128xf32, #tpu.memory_space<vmem>>, %arg13: memref<1x128xf32, #tpu.memory_space<vmem>>, %arg14: memref<2x1x128xf32, #tpu.memory_space<vmem>>) attributes {dimension_semantics = [#tpu.dimension_semantics<parallel>], iteration_bounds = array<i64: 2>, scalar_prefetch = 0 : i64, scratch_operands = 0 : i64, tpu.core_type = #tpu.core_type<tc>, window_params = [{transform_indices = @transform_0, window_bounds = array<i64: 256, 3>}, {transform_indices = @transform_1, window_bounds = array<i64: 256, 3>}, {pipeline_mode = #tpu.pipeline_mode<synchronous>, transform_indices = @transform_2, window_bounds = array<i64: 3, 32>}, {pipeline_mode = #tpu.pipeline_mode<synchronous>, transform_indices = @transform_3, window_bounds = array<i64: 1, 32>}, {pipeline_mode = #tpu.pipeline_mode<synchronous>, transform_indices = @transform_4, window_bounds = array<i64: 32, 3>}, {pipeline_mode = #tpu.pipeline_mode<synchronous>, transform_indices = @transform_5, window_bounds = array<i64: 1, 3>}, {pipeline_mode = #tpu.pipeline_mode<synchronous>, transform_indices = @transform_6, window_bounds = array<i64: 9, 512>}, {pipeline_mode = #tpu.pipeline_mode<synchronous>, transform_indices = @transform_7, window_bounds = array<i64: 3, 27>}, {pipeline_mode = #tpu.pipeline_mode<synchronous>, transform_indices = @transform_8, window_bounds = array<i64: 3, 1>}, {pipeline_mode = #tpu.pipeline_mode<synchronous>, transform_indices = @transform_9, window_bounds = array<i64: 32, 27>}, {pipeline_mode = #tpu.pipeline_mode<synchronous>, transform_indices = @transform_10, window_bounds = array<i64: 32, 1>}, {pipeline_mode = #tpu.pipeline_mode<synchronous>, transform_indices = @transform_11, window_bounds = array<i64: 32, 128>}, {pipeline_mode = #tpu.pipeline_mode<synchronous>, transform_indices = @transform_12, window_bounds = array<i64: 1, 128>}, {transform_indices = @transform_13, window_bounds = array<i64: 2, 1, 128>}]} {
    %c0 = arith.constant 0 : index
    %c0_0 = arith.constant 0 : index
    %0 = vector.load %arg1[%c0, %c0_0] : memref<256x3xf32, #tpu.memory_space<vmem>>, vector<256x3xf32>
    %c0_1 = arith.constant 0 : index
    %c0_2 = arith.constant 0 : index
    %1 = vector.load %arg3[%c0_1, %c0_2] : memref<3x32xf32, #tpu.memory_space<vmem>>, vector<3x32xf32>
    %cst = arith.constant dense<0.000000e+00> : vector<256x32xf32>
    %2 = tpu.matmul %0, %1, %cst {dimension_numbers = #tpu.dot_dimension_numbers<[1], [0], [0], [1], [0, 0, 1, 1], [], []>} : vector<256x3xf32>, vector<3x32xf32>, vector<256x32xf32> -> vector<256x32xf32>
    %c0_3 = arith.constant 0 : index
    %c0_4 = arith.constant 0 : index
    %3 = vector.load %arg4[%c0_3, %c0_4] : memref<1x32xf32, #tpu.memory_space<vmem>>, vector<1x32xf32>
    %4 = vector.broadcast %3 : vector<1x32xf32> to vector<256x32xf32>
    %5 = arith.addf %2, %4 : vector<256x32xf32>
    %cst_5 = arith.constant 0.000000e+00 : f32
    %6 = vector.broadcast %cst_5 : f32 to vector<256x32xf32>
    %7 = arith.maximumf %5, %6 : vector<256x32xf32>
    %c0_6 = arith.constant 0 : index
    %c0_7 = arith.constant 0 : index
    %8 = vector.load %arg5[%c0_6, %c0_7] : memref<32x3xf32, #tpu.memory_space<vmem>>, vector<32x3xf32>
    %cst_8 = arith.constant dense<0.000000e+00> : vector<256x3xf32>
    %9 = tpu.matmul %7, %8, %cst_8 {dimension_numbers = #tpu.dot_dimension_numbers<[1], [0], [0], [1], [0, 0, 1, 1], [], []>} : vector<256x32xf32>, vector<32x3xf32>, vector<256x3xf32> -> vector<256x3xf32>
    %c0_9 = arith.constant 0 : index
    %c0_10 = arith.constant 0 : index
    %10 = vector.load %arg6[%c0_9, %c0_10] : memref<1x3xf32, #tpu.memory_space<vmem>>, vector<1x3xf32>
    %11 = vector.broadcast %10 : vector<1x3xf32> to vector<256x3xf32>
    %12 = arith.addf %9, %11 : vector<256x3xf32>
    %cst_11 = arith.constant 0.000000e+00 : f32
    %13 = vector.broadcast %cst_11 : f32 to vector<256x3xf32>
    %14 = arith.maximumf %12, %13 : vector<256x3xf32>
    %c0_12 = arith.constant 0 : index
    %c0_13 = arith.constant 0 : index
    %15 = vector.load %arg2[%c0_12, %c0_13] : memref<256x3xf32, #tpu.memory_space<vmem>>, vector<128x3xf32>
    %16 = vector.extract_strided_slice %15 {offsets = [0, 0], sizes = [128, 1], strides = [1, 1]} : vector<128x3xf32> to vector<128x1xf32>
    %cst_14 = arith.constant 1.000000e+00 : f32
    %17 = vector.broadcast %cst_14 : f32 to vector<128x1xf32>
    %18 = arith.addf %16, %17 : vector<128x1xf32>
    %cst_15 = arith.constant 5.000000e-01 : f32
    %19 = vector.broadcast %cst_15 : f32 to vector<128x1xf32>
    %20 = arith.mulf %18, %19 : vector<128x1xf32>
    %cst_16 = arith.constant 0.000000e+00 : f32
    %cst_17 = arith.constant 0.999998986 : f32
    %21 = vector.broadcast %cst_16 : f32 to vector<128x1xf32>
    %22 = arith.maximumf %21, %20 : vector<128x1xf32>
    %23 = vector.broadcast %cst_17 : f32 to vector<128x1xf32>
    %24 = arith.minimumf %23, %22 : vector<128x1xf32>
    %25 = vector.extract_strided_slice %15 {offsets = [0, 1], sizes = [128, 1], strides = [1, 1]} : vector<128x3xf32> to vector<128x1xf32>
    %cst_18 = arith.constant 1.000000e+00 : f32
    %26 = vector.broadcast %cst_18 : f32 to vector<128x1xf32>
    %27 = arith.addf %25, %26 : vector<128x1xf32>
    %cst_19 = arith.constant 5.000000e-01 : f32
    %28 = vector.broadcast %cst_19 : f32 to vector<128x1xf32>
    %29 = arith.mulf %27, %28 : vector<128x1xf32>
    %cst_20 = arith.constant 0.000000e+00 : f32
    %cst_21 = arith.constant 0.999998986 : f32
    %30 = vector.broadcast %cst_20 : f32 to vector<128x1xf32>
    %31 = arith.maximumf %30, %29 : vector<128x1xf32>
    %32 = vector.broadcast %cst_21 : f32 to vector<128x1xf32>
    %33 = arith.minimumf %32, %31 : vector<128x1xf32>
    %cst_22 = arith.constant 1.600000e+01 : f32
    %34 = vector.broadcast %cst_22 : f32 to vector<128x1xf32>
    %35 = arith.mulf %24, %34 : vector<128x1xf32>
    %36 = arith.fptosi %35 : vector<128x1xf32> to vector<128x1xi32>
    %cst_23 = arith.constant 1.600000e+01 : f32
    %37 = vector.broadcast %cst_23 : f32 to vector<128x1xf32>
    %38 = arith.mulf %33, %37 : vector<128x1xf32>
    %39 = arith.fptosi %38 : vector<128x1xf32> to vector<128x1xi32>
    %c16_i32 = arith.constant 16 : i32
    %40 = vector.broadcast %c16_i32 : i32 to vector<128x1xi32>
    %41 = arith.muli %39, %40 : vector<128x1xi32>
    %42 = arith.addi %41, %36 : vector<128x1xi32>
    %43 = tpu.iota {dimensions = array<i32: 1>} : vector<128x256xi32>
    %44 = vector.broadcast %42 : vector<128x1xi32> to vector<128x256xi32>
    %45 = arith.cmpi eq, %43, %44 : vector<128x256xi32>
    %46 = arith.extui %45 : vector<128x256xi1> to vector<128x256xi32>
    %47 = arith.sitofp %46 : vector<128x256xi32> to vector<128x256xf32>
    %48 = vector.extract_strided_slice %14 {offsets = [0, 0], sizes = [128, 3], strides = [1, 1]} : vector<256x3xf32> to vector<128x3xf32>
    %49 = vector.extract_strided_slice %48 {offsets = [0, 0], sizes = [128, 1], strides = [1, 1]} : vector<128x3xf32> to vector<128x1xf32>
    %50 = vector.broadcast %49 : vector<128x1xf32> to vector<128x256xf32>
    %51 = arith.mulf %47, %50 : vector<128x256xf32>
    %cst_24 = arith.constant dense<0xFF800000> : vector<256xf32>
    %52 = vector.multi_reduction <maximumf>, %51, %cst_24 [0] : vector<128x256xf32> to vector<256xf32>
    %53 = vector.shape_cast %52 : vector<256xf32> to vector<1x256xf32>
    %54 = vector.extract_strided_slice %48 {offsets = [0, 1], sizes = [128, 1], strides = [1, 1]} : vector<128x3xf32> to vector<128x1xf32>
    %55 = vector.broadcast %54 : vector<128x1xf32> to vector<128x256xf32>
    %56 = arith.mulf %47, %55 : vector<128x256xf32>
    %cst_25 = arith.constant dense<0xFF800000> : vector<256xf32>
    %57 = vector.multi_reduction <maximumf>, %56, %cst_25 [0] : vector<128x256xf32> to vector<256xf32>
    %58 = vector.shape_cast %57 : vector<256xf32> to vector<1x256xf32>
    %59 = vector.extract_strided_slice %48 {offsets = [0, 2], sizes = [128, 1], strides = [1, 1]} : vector<128x3xf32> to vector<128x1xf32>
    %60 = vector.broadcast %59 : vector<128x1xf32> to vector<128x256xf32>
    %61 = arith.mulf %47, %60 : vector<128x256xf32>
    %cst_26 = arith.constant dense<0xFF800000> : vector<256xf32>
    %62 = vector.multi_reduction <maximumf>, %61, %cst_26 [0] : vector<128x256xf32> to vector<256xf32>
    %63 = vector.shape_cast %62 : vector<256xf32> to vector<1x256xf32>
    %64 = tpu.concatenate %53, %58, %63 in 0 : vector<1x256xf32>, vector<1x256xf32>, vector<1x256xf32> -> vector<3x256xf32>
    %c128 = arith.constant 128 : index
    %c0_27 = arith.constant 0 : index
    %65 = vector.load %arg2[%c128, %c0_27] : memref<256x3xf32, #tpu.memory_space<vmem>>, vector<128x3xf32>
    %66 = vector.extract_strided_slice %65 {offsets = [0, 0], sizes = [128, 1], strides = [1, 1]} : vector<128x3xf32> to vector<128x1xf32>
    %cst_28 = arith.constant 1.000000e+00 : f32
    %67 = vector.broadcast %cst_28 : f32 to vector<128x1xf32>
    %68 = arith.addf %66, %67 : vector<128x1xf32>
    %cst_29 = arith.constant 5.000000e-01 : f32
    %69 = vector.broadcast %cst_29 : f32 to vector<128x1xf32>
    %70 = arith.mulf %68, %69 : vector<128x1xf32>
    %cst_30 = arith.constant 0.000000e+00 : f32
    %cst_31 = arith.constant 0.999998986 : f32
    %71 = vector.broadcast %cst_30 : f32 to vector<128x1xf32>
    %72 = arith.maximumf %71, %70 : vector<128x1xf32>
    %73 = vector.broadcast %cst_31 : f32 to vector<128x1xf32>
    %74 = arith.minimumf %73, %72 : vector<128x1xf32>
    %75 = vector.extract_strided_slice %65 {offsets = [0, 1], sizes = [128, 1], strides = [1, 1]} : vector<128x3xf32> to vector<128x1xf32>
    %cst_32 = arith.constant 1.000000e+00 : f32
    %76 = vector.broadcast %cst_32 : f32 to vector<128x1xf32>
    %77 = arith.addf %75, %76 : vector<128x1xf32>
    %cst_33 = arith.constant 5.000000e-01 : f32
    %78 = vector.broadcast %cst_33 : f32 to vector<128x1xf32>
    %79 = arith.mulf %77, %78 : vector<128x1xf32>
    %cst_34 = arith.constant 0.000000e+00 : f32
    %cst_35 = arith.constant 0.999998986 : f32
    %80 = vector.broadcast %cst_34 : f32 to vector<128x1xf32>
    %81 = arith.maximumf %80, %79 : vector<128x1xf32>
    %82 = vector.broadcast %cst_35 : f32 to vector<128x1xf32>
    %83 = arith.minimumf %82, %81 : vector<128x1xf32>
    %cst_36 = arith.constant 1.600000e+01 : f32
    %84 = vector.broadcast %cst_36 : f32 to vector<128x1xf32>
    %85 = arith.mulf %74, %84 : vector<128x1xf32>
    %86 = arith.fptosi %85 : vector<128x1xf32> to vector<128x1xi32>
    %cst_37 = arith.constant 1.600000e+01 : f32
    %87 = vector.broadcast %cst_37 : f32 to vector<128x1xf32>
    %88 = arith.mulf %83, %87 : vector<128x1xf32>
    %89 = arith.fptosi %88 : vector<128x1xf32> to vector<128x1xi32>
    %c16_i32_38 = arith.constant 16 : i32
    %90 = vector.broadcast %c16_i32_38 : i32 to vector<128x1xi32>
    %91 = arith.muli %89, %90 : vector<128x1xi32>
    %92 = arith.addi %91, %86 : vector<128x1xi32>
    %93 = tpu.iota {dimensions = array<i32: 1>} : vector<128x256xi32>
    %94 = vector.broadcast %92 : vector<128x1xi32> to vector<128x256xi32>
    %95 = arith.cmpi eq, %93, %94 : vector<128x256xi32>
    %96 = arith.extui %95 : vector<128x256xi1> to vector<128x256xi32>
    %97 = arith.sitofp %96 : vector<128x256xi32> to vector<128x256xf32>
    %98 = vector.extract_strided_slice %14 {offsets = [128, 0], sizes = [128, 3], strides = [1, 1]} : vector<256x3xf32> to vector<128x3xf32>
    %99 = vector.extract_strided_slice %98 {offsets = [0, 0], sizes = [128, 1], strides = [1, 1]} : vector<128x3xf32> to vector<128x1xf32>
    %100 = vector.broadcast %99 : vector<128x1xf32> to vector<128x256xf32>
    %101 = arith.mulf %97, %100 : vector<128x256xf32>
    %cst_39 = arith.constant dense<0xFF800000> : vector<256xf32>
    %102 = vector.multi_reduction <maximumf>, %101, %cst_39 [0] : vector<128x256xf32> to vector<256xf32>
    %103 = vector.shape_cast %102 : vector<256xf32> to vector<1x256xf32>
    %104 = vector.extract_strided_slice %98 {offsets = [0, 1], sizes = [128, 1], strides = [1, 1]} : vector<128x3xf32> to vector<128x1xf32>
    %105 = vector.broadcast %104 : vector<128x1xf32> to vector<128x256xf32>
    %106 = arith.mulf %97, %105 : vector<128x256xf32>
    %cst_40 = arith.constant dense<0xFF800000> : vector<256xf32>
    %107 = vector.multi_reduction <maximumf>, %106, %cst_40 [0] : vector<128x256xf32> to vector<256xf32>
    %108 = vector.shape_cast %107 : vector<256xf32> to vector<1x256xf32>
    %109 = vector.extract_strided_slice %98 {offsets = [0, 2], sizes = [128, 1], strides = [1, 1]} : vector<128x3xf32> to vector<128x1xf32>
    %110 = vector.broadcast %109 : vector<128x1xf32> to vector<128x256xf32>
    %111 = arith.mulf %97, %110 : vector<128x256xf32>
    %cst_41 = arith.constant dense<0xFF800000> : vector<256xf32>
    %112 = vector.multi_reduction <maximumf>, %111, %cst_41 [0] : vector<128x256xf32> to vector<256xf32>
    %113 = vector.shape_cast %112 : vector<256xf32> to vector<1x256xf32>
    %114 = tpu.concatenate %103, %108, %113 in 0 : vector<1x256xf32>, vector<1x256xf32>, vector<1x256xf32> -> vector<3x256xf32>
    %115 = tpu.concatenate %64, %114 in 1 : vector<3x256xf32>, vector<3x256xf32> -> vector<3x512xf32>
    %cst_42 = arith.constant 0.000000e+00 : f32
    %116 = vector.broadcast %cst_42 : f32 to vector<3x17xf32>
    %117 = tpu.concatenate %116, %115, %116 in 1 : vector<3x17xf32>, vector<3x512xf32>, vector<3x17xf32> -> vector<3x546xf32>
    %118 = vector.extract_strided_slice %117 {offsets = [0, 0], sizes = [3, 512], strides = [1, 1]} : vector<3x546xf32> to vector<3x512xf32>
    %c0_43 = arith.constant 0 : index
    %c0_44 = arith.constant 0 : index
    %119 = vector.load %arg7[%c0_43, %c0_44] : memref<9x512xf32, #tpu.memory_space<vmem>>, vector<1x512xf32>
    %120 = vector.broadcast %119 : vector<1x512xf32> to vector<3x512xf32>
    %121 = arith.mulf %118, %120 : vector<3x512xf32>
    %122 = vector.extract_strided_slice %117 {offsets = [0, 1], sizes = [3, 512], strides = [1, 1]} : vector<3x546xf32> to vector<3x512xf32>
    %c1 = arith.constant 1 : index
    %c0_45 = arith.constant 0 : index
    %123 = vector.load %arg7[%c1, %c0_45] : memref<9x512xf32, #tpu.memory_space<vmem>>, vector<1x512xf32>
    %124 = vector.broadcast %123 : vector<1x512xf32> to vector<3x512xf32>
    %125 = arith.mulf %122, %124 : vector<3x512xf32>
    %126 = vector.extract_strided_slice %117 {offsets = [0, 2], sizes = [3, 512], strides = [1, 1]} : vector<3x546xf32> to vector<3x512xf32>
    %c2 = arith.constant 2 : index
    %c0_46 = arith.constant 0 : index
    %127 = vector.load %arg7[%c2, %c0_46] : memref<9x512xf32, #tpu.memory_space<vmem>>, vector<1x512xf32>
    %128 = vector.broadcast %127 : vector<1x512xf32> to vector<3x512xf32>
    %129 = arith.mulf %126, %128 : vector<3x512xf32>
    %130 = vector.extract_strided_slice %117 {offsets = [0, 16], sizes = [3, 512], strides = [1, 1]} : vector<3x546xf32> to vector<3x512xf32>
    %c3 = arith.constant 3 : index
    %c0_47 = arith.constant 0 : index
    %131 = vector.load %arg7[%c3, %c0_47] : memref<9x512xf32, #tpu.memory_space<vmem>>, vector<1x512xf32>
    %132 = vector.broadcast %131 : vector<1x512xf32> to vector<3x512xf32>
    %133 = arith.mulf %130, %132 : vector<3x512xf32>
    %134 = vector.extract_strided_slice %117 {offsets = [0, 17], sizes = [3, 512], strides = [1, 1]} : vector<3x546xf32> to vector<3x512xf32>
    %c4 = arith.constant 4 : index
    %c0_48 = arith.constant 0 : index
    %135 = vector.load %arg7[%c4, %c0_48] : memref<9x512xf32, #tpu.memory_space<vmem>>, vector<1x512xf32>
    %136 = vector.broadcast %135 : vector<1x512xf32> to vector<3x512xf32>
    %137 = arith.mulf %134, %136 : vector<3x512xf32>
    %138 = vector.extract_strided_slice %117 {offsets = [0, 18], sizes = [3, 512], strides = [1, 1]} : vector<3x546xf32> to vector<3x512xf32>
    %c5 = arith.constant 5 : index
    %c0_49 = arith.constant 0 : index
    %139 = vector.load %arg7[%c5, %c0_49] : memref<9x512xf32, #tpu.memory_space<vmem>>, vector<1x512xf32>
    %140 = vector.broadcast %139 : vector<1x512xf32> to vector<3x512xf32>
    %141 = arith.mulf %138, %140 : vector<3x512xf32>
    %142 = vector.extract_strided_slice %117 {offsets = [0, 32], sizes = [3, 512], strides = [1, 1]} : vector<3x546xf32> to vector<3x512xf32>
    %c6 = arith.constant 6 : index
    %c0_50 = arith.constant 0 : index
    %143 = vector.load %arg7[%c6, %c0_50] : memref<9x512xf32, #tpu.memory_space<vmem>>, vector<1x512xf32>
    %144 = vector.broadcast %143 : vector<1x512xf32> to vector<3x512xf32>
    %145 = arith.mulf %142, %144 : vector<3x512xf32>
    %146 = vector.extract_strided_slice %117 {offsets = [0, 33], sizes = [3, 512], strides = [1, 1]} : vector<3x546xf32> to vector<3x512xf32>
    %c7 = arith.constant 7 : index
    %c0_51 = arith.constant 0 : index
    %147 = vector.load %arg7[%c7, %c0_51] : memref<9x512xf32, #tpu.memory_space<vmem>>, vector<1x512xf32>
    %148 = vector.broadcast %147 : vector<1x512xf32> to vector<3x512xf32>
    %149 = arith.mulf %146, %148 : vector<3x512xf32>
    %150 = vector.extract_strided_slice %117 {offsets = [0, 34], sizes = [3, 512], strides = [1, 1]} : vector<3x546xf32> to vector<3x512xf32>
    %c8 = arith.constant 8 : index
    %c0_52 = arith.constant 0 : index
    %151 = vector.load %arg7[%c8, %c0_52] : memref<9x512xf32, #tpu.memory_space<vmem>>, vector<1x512xf32>
    %152 = vector.broadcast %151 : vector<1x512xf32> to vector<3x512xf32>
    %153 = arith.mulf %150, %152 : vector<3x512xf32>
    %154 = tpu.concatenate %121, %125, %129, %133, %137, %141, %145, %149, %153 in 0 : vector<3x512xf32>, vector<3x512xf32>, vector<3x512xf32>, vector<3x512xf32>, vector<3x512xf32>, vector<3x512xf32>, vector<3x512xf32>, vector<3x512xf32>, vector<3x512xf32> -> vector<27x512xf32>
    %c0_53 = arith.constant 0 : index
    %c0_54 = arith.constant 0 : index
    %155 = vector.load %arg8[%c0_53, %c0_54] : memref<3x27xf32, #tpu.memory_space<vmem>>, vector<3x27xf32>
    %cst_55 = arith.constant dense<0.000000e+00> : vector<3x512xf32>
    %156 = tpu.matmul %155, %154, %cst_55 {dimension_numbers = #tpu.dot_dimension_numbers<[1], [0], [0], [1], [0, 0, 1, 1], [], []>} : vector<3x27xf32>, vector<27x512xf32>, vector<3x512xf32> -> vector<3x512xf32>
    %c0_56 = arith.constant 0 : index
    %c0_57 = arith.constant 0 : index
    %157 = vector.load %arg9[%c0_56, %c0_57] : memref<3x1xf32, #tpu.memory_space<vmem>>, vector<3x1xf32>
    %158 = vector.broadcast %157 : vector<3x1xf32> to vector<3x512xf32>
    %159 = arith.addf %156, %158 : vector<3x512xf32>
    %cst_58 = arith.constant 0.000000e+00 : f32
    %160 = vector.broadcast %cst_58 : f32 to vector<3x512xf32>
    %161 = arith.maximumf %159, %160 : vector<3x512xf32>
    %cst_59 = arith.constant 0.000000e+00 : f32
    %162 = vector.broadcast %cst_59 : f32 to vector<3x17xf32>
    %163 = tpu.concatenate %162, %161, %162 in 1 : vector<3x17xf32>, vector<3x512xf32>, vector<3x17xf32> -> vector<3x546xf32>
    %164 = vector.extract_strided_slice %163 {offsets = [0, 0], sizes = [3, 512], strides = [1, 1]} : vector<3x546xf32> to vector<3x512xf32>
    %c0_60 = arith.constant 0 : index
    %c0_61 = arith.constant 0 : index
    %165 = vector.load %arg7[%c0_60, %c0_61] : memref<9x512xf32, #tpu.memory_space<vmem>>, vector<1x512xf32>
    %166 = vector.broadcast %165 : vector<1x512xf32> to vector<3x512xf32>
    %167 = arith.mulf %164, %166 : vector<3x512xf32>
    %168 = vector.extract_strided_slice %163 {offsets = [0, 1], sizes = [3, 512], strides = [1, 1]} : vector<3x546xf32> to vector<3x512xf32>
    %c1_62 = arith.constant 1 : index
    %c0_63 = arith.constant 0 : index
    %169 = vector.load %arg7[%c1_62, %c0_63] : memref<9x512xf32, #tpu.memory_space<vmem>>, vector<1x512xf32>
    %170 = vector.broadcast %169 : vector<1x512xf32> to vector<3x512xf32>
    %171 = arith.mulf %168, %170 : vector<3x512xf32>
    %172 = vector.extract_strided_slice %163 {offsets = [0, 2], sizes = [3, 512], strides = [1, 1]} : vector<3x546xf32> to vector<3x512xf32>
    %c2_64 = arith.constant 2 : index
    %c0_65 = arith.constant 0 : index
    %173 = vector.load %arg7[%c2_64, %c0_65] : memref<9x512xf32, #tpu.memory_space<vmem>>, vector<1x512xf32>
    %174 = vector.broadcast %173 : vector<1x512xf32> to vector<3x512xf32>
    %175 = arith.mulf %172, %174 : vector<3x512xf32>
    %176 = vector.extract_strided_slice %163 {offsets = [0, 16], sizes = [3, 512], strides = [1, 1]} : vector<3x546xf32> to vector<3x512xf32>
    %c3_66 = arith.constant 3 : index
    %c0_67 = arith.constant 0 : index
    %177 = vector.load %arg7[%c3_66, %c0_67] : memref<9x512xf32, #tpu.memory_space<vmem>>, vector<1x512xf32>
    %178 = vector.broadcast %177 : vector<1x512xf32> to vector<3x512xf32>
    %179 = arith.mulf %176, %178 : vector<3x512xf32>
    %180 = vector.extract_strided_slice %163 {offsets = [0, 17], sizes = [3, 512], strides = [1, 1]} : vector<3x546xf32> to vector<3x512xf32>
    %c4_68 = arith.constant 4 : index
    %c0_69 = arith.constant 0 : index
    %181 = vector.load %arg7[%c4_68, %c0_69] : memref<9x512xf32, #tpu.memory_space<vmem>>, vector<1x512xf32>
    %182 = vector.broadcast %181 : vector<1x512xf32> to vector<3x512xf32>
    %183 = arith.mulf %180, %182 : vector<3x512xf32>
    %184 = vector.extract_strided_slice %163 {offsets = [0, 18], sizes = [3, 512], strides = [1, 1]} : vector<3x546xf32> to vector<3x512xf32>
    %c5_70 = arith.constant 5 : index
    %c0_71 = arith.constant 0 : index
    %185 = vector.load %arg7[%c5_70, %c0_71] : memref<9x512xf32, #tpu.memory_space<vmem>>, vector<1x512xf32>
    %186 = vector.broadcast %185 : vector<1x512xf32> to vector<3x512xf32>
    %187 = arith.mulf %184, %186 : vector<3x512xf32>
    %188 = vector.extract_strided_slice %163 {offsets = [0, 32], sizes = [3, 512], strides = [1, 1]} : vector<3x546xf32> to vector<3x512xf32>
    %c6_72 = arith.constant 6 : index
    %c0_73 = arith.constant 0 : index
    %189 = vector.load %arg7[%c6_72, %c0_73] : memref<9x512xf32, #tpu.memory_space<vmem>>, vector<1x512xf32>
    %190 = vector.broadcast %189 : vector<1x512xf32> to vector<3x512xf32>
    %191 = arith.mulf %188, %190 : vector<3x512xf32>
    %192 = vector.extract_strided_slice %163 {offsets = [0, 33], sizes = [3, 512], strides = [1, 1]} : vector<3x546xf32> to vector<3x512xf32>
    %c7_74 = arith.constant 7 : index
    %c0_75 = arith.constant 0 : index
    %193 = vector.load %arg7[%c7_74, %c0_75] : memref<9x512xf32, #tpu.memory_space<vmem>>, vector<1x512xf32>
    %194 = vector.broadcast %193 : vector<1x512xf32> to vector<3x512xf32>
    %195 = arith.mulf %192, %194 : vector<3x512xf32>
    %196 = vector.extract_strided_slice %163 {offsets = [0, 34], sizes = [3, 512], strides = [1, 1]} : vector<3x546xf32> to vector<3x512xf32>
    %c8_76 = arith.constant 8 : index
    %c0_77 = arith.constant 0 : index
    %197 = vector.load %arg7[%c8_76, %c0_77] : memref<9x512xf32, #tpu.memory_space<vmem>>, vector<1x512xf32>
    %198 = vector.broadcast %197 : vector<1x512xf32> to vector<3x512xf32>
    %199 = arith.mulf %196, %198 : vector<3x512xf32>
    %200 = tpu.concatenate %167, %171, %175, %179, %183, %187, %191, %195, %199 in 0 : vector<3x512xf32>, vector<3x512xf32>, vector<3x512xf32>, vector<3x512xf32>, vector<3x512xf32>, vector<3x512xf32>, vector<3x512xf32>, vector<3x512xf32>, vector<3x512xf32> -> vector<27x512xf32>
    %c0_78 = arith.constant 0 : index
    %c0_79 = arith.constant 0 : index
    %201 = vector.load %arg10[%c0_78, %c0_79] : memref<32x27xf32, #tpu.memory_space<vmem>>, vector<32x27xf32>
    %cst_80 = arith.constant dense<0.000000e+00> : vector<32x512xf32>
    %202 = tpu.matmul %201, %200, %cst_80 {dimension_numbers = #tpu.dot_dimension_numbers<[1], [0], [0], [1], [0, 0, 1, 1], [], []>} : vector<32x27xf32>, vector<27x512xf32>, vector<32x512xf32> -> vector<32x512xf32>
    %c0_81 = arith.constant 0 : index
    %c0_82 = arith.constant 0 : index
    %203 = vector.load %arg11[%c0_81, %c0_82] : memref<32x1xf32, #tpu.memory_space<vmem>>, vector<32x1xf32>
    %204 = vector.broadcast %203 : vector<32x1xf32> to vector<32x512xf32>
    %205 = arith.addf %202, %204 : vector<32x512xf32>
    %cst_83 = arith.constant 0.000000e+00 : f32
    %206 = vector.broadcast %cst_83 : f32 to vector<32x512xf32>
    %207 = arith.maximumf %205, %206 : vector<32x512xf32>
    %208 = vector.extract_strided_slice %207 {offsets = [0, 0], sizes = [32, 256], strides = [1, 1]} : vector<32x512xf32> to vector<32x256xf32>
    %cst_84 = arith.constant dense<0.000000e+00> : vector<32xf32>
    %209 = vector.multi_reduction <add>, %208, %cst_84 [1] : vector<32x256xf32> to vector<32xf32>
    %210 = vector.shape_cast %209 : vector<32xf32> to vector<32x1xf32>
    %cst_85 = arith.constant 2.560000e+02 : f32
    %211 = vector.broadcast %cst_85 : f32 to vector<32x1xf32>
    %212 = arith.divf %210, %211 : vector<32x1xf32>
    %c0_86 = arith.constant 0 : index
    %c0_87 = arith.constant 0 : index
    %213 = vector.load %arg12[%c0_86, %c0_87] : memref<32x128xf32, #tpu.memory_space<vmem>>, vector<32x128xf32>
    %214 = vector.broadcast %212 : vector<32x1xf32> to vector<32x128xf32>
    %215 = arith.mulf %214, %213 : vector<32x128xf32>
    %cst_88 = arith.constant dense<0.000000e+00> : vector<128xf32>
    %216 = vector.multi_reduction <add>, %215, %cst_88 [0] : vector<32x128xf32> to vector<128xf32>
    %217 = vector.shape_cast %216 : vector<128xf32> to vector<1x128xf32>
    %c0_89 = arith.constant 0 : index
    %c0_90 = arith.constant 0 : index
    %218 = vector.load %arg13[%c0_89, %c0_90] : memref<1x128xf32, #tpu.memory_space<vmem>>, vector<1x128xf32>
    %219 = arith.addf %217, %218 : vector<1x128xf32>
    %c0_91 = arith.constant 0 : index
    %c0_92 = arith.constant 0 : index
    %c0_93 = arith.constant 0 : index
    %220 = vector.load %arg14[%c0_91, %c0_92, %c0_93] : memref<2x1x128xf32, #tpu.memory_space<vmem>>, vector<1x1x128xf32>
    %221 = vector.shape_cast %220 : vector<1x1x128xf32> to vector<1x128xf32>
    %222 = vector.shape_cast %219 : vector<1x128xf32> to vector<1x1x128xf32>
    tpu.vector_store %arg14[%c0_91, %c0_92, %c0_93], %222 {strides = array<i32>} : memref<2x1x128xf32, #tpu.memory_space<vmem>>, vector<1x1x128xf32>,
    %223 = vector.extract_strided_slice %207 {offsets = [0, 256], sizes = [32, 256], strides = [1, 1]} : vector<32x512xf32> to vector<32x256xf32>
    %cst_94 = arith.constant dense<0.000000e+00> : vector<32xf32>
    %224 = vector.multi_reduction <add>, %223, %cst_94 [1] : vector<32x256xf32> to vector<32xf32>
    %225 = vector.shape_cast %224 : vector<32xf32> to vector<32x1xf32>
    %cst_95 = arith.constant 2.560000e+02 : f32
    %226 = vector.broadcast %cst_95 : f32 to vector<32x1xf32>
    %227 = arith.divf %225, %226 : vector<32x1xf32>
    %c0_96 = arith.constant 0 : index
    %c0_97 = arith.constant 0 : index
    %228 = vector.load %arg12[%c0_96, %c0_97] : memref<32x128xf32, #tpu.memory_space<vmem>>, vector<32x128xf32>
    %229 = vector.broadcast %227 : vector<32x1xf32> to vector<32x128xf32>
    %230 = arith.mulf %229, %228 : vector<32x128xf32>
    %cst_98 = arith.constant dense<0.000000e+00> : vector<128xf32>
    %231 = vector.multi_reduction <add>, %230, %cst_98 [0] : vector<32x128xf32> to vector<128xf32>
    %232 = vector.shape_cast %231 : vector<128xf32> to vector<1x128xf32>
    %c0_99 = arith.constant 0 : index
    %c0_100 = arith.constant 0 : index
    %233 = vector.load %arg13[%c0_99, %c0_100] : memref<1x128xf32, #tpu.memory_space<vmem>>, vector<1x128xf32>
    %234 = arith.addf %232, %233 : vector<1x128xf32>
    %c1_101 = arith.constant 1 : index
    %c0_102 = arith.constant 0 : index
    %c0_103 = arith.constant 0 : index
    %235 = vector.load %arg14[%c1_101, %c0_102, %c0_103] : memref<2x1x128xf32, #tpu.memory_space<vmem>>, vector<1x1x128xf32>
    %236 = vector.shape_cast %235 : vector<1x1x128xf32> to vector<1x128xf32>
    %237 = vector.shape_cast %234 : vector<1x128xf32> to vector<1x1x128xf32>
    tpu.vector_store %arg14[%c1_101, %c0_102, %c0_103], %237 {strides = array<i32>} : memref<2x1x128xf32, #tpu.memory_space<vmem>>, vector<1x1x128xf32>,
    return
  }
  func.func @transform_0(%arg0: i32) -> (i32, i32) {
    %c0_i32 = arith.constant 0 : i32
    %c0_i32_0 = arith.constant 0 : i32
    return %arg0, %c0_i32 : i32, i32
  }
  func.func @transform_1(%arg0: i32) -> (i32, i32) {
    %c0_i32 = arith.constant 0 : i32
    %c0_i32_0 = arith.constant 0 : i32
    return %arg0, %c0_i32 : i32, i32
  }
  func.func @transform_2(%arg0: i32) -> (i32, i32) {
    %c0_i32 = arith.constant 0 : i32
    %c0_i32_0 = arith.constant 0 : i32
    %c0_i32_1 = arith.constant 0 : i32
    return %c0_i32, %c0_i32_0 : i32, i32
  }
  func.func @transform_3(%arg0: i32) -> (i32, i32) {
    %c0_i32 = arith.constant 0 : i32
    %c0_i32_0 = arith.constant 0 : i32
    %c0_i32_1 = arith.constant 0 : i32
    return %c0_i32, %c0_i32_0 : i32, i32
  }
  func.func @transform_4(%arg0: i32) -> (i32, i32) {
    %c0_i32 = arith.constant 0 : i32
    %c0_i32_0 = arith.constant 0 : i32
    %c0_i32_1 = arith.constant 0 : i32
    return %c0_i32, %c0_i32_0 : i32, i32
  }
  func.func @transform_5(%arg0: i32) -> (i32, i32) {
    %c0_i32 = arith.constant 0 : i32
    %c0_i32_0 = arith.constant 0 : i32
    %c0_i32_1 = arith.constant 0 : i32
    return %c0_i32, %c0_i32_0 : i32, i32
  }
  func.func @transform_6(%arg0: i32) -> (i32, i32) {
    %c0_i32 = arith.constant 0 : i32
    %c0_i32_0 = arith.constant 0 : i32
    %c0_i32_1 = arith.constant 0 : i32
    return %c0_i32, %c0_i32_0 : i32, i32
  }
  func.func @transform_7(%arg0: i32) -> (i32, i32) {
    %c0_i32 = arith.constant 0 : i32
    %c0_i32_0 = arith.constant 0 : i32
    %c0_i32_1 = arith.constant 0 : i32
    return %c0_i32, %c0_i32_0 : i32, i32
  }
  func.func @transform_8(%arg0: i32) -> (i32, i32) {
    %c0_i32 = arith.constant 0 : i32
    %c0_i32_0 = arith.constant 0 : i32
    %c0_i32_1 = arith.constant 0 : i32
    return %c0_i32, %c0_i32_0 : i32, i32
  }
  func.func @transform_9(%arg0: i32) -> (i32, i32) {
    %c0_i32 = arith.constant 0 : i32
    %c0_i32_0 = arith.constant 0 : i32
    %c0_i32_1 = arith.constant 0 : i32
    return %c0_i32, %c0_i32_0 : i32, i32
  }
  func.func @transform_10(%arg0: i32) -> (i32, i32) {
    %c0_i32 = arith.constant 0 : i32
    %c0_i32_0 = arith.constant 0 : i32
    %c0_i32_1 = arith.constant 0 : i32
    return %c0_i32, %c0_i32_0 : i32, i32
  }
  func.func @transform_11(%arg0: i32) -> (i32, i32) {
    %c0_i32 = arith.constant 0 : i32
    %c0_i32_0 = arith.constant 0 : i32
    %c0_i32_1 = arith.constant 0 : i32
    return %c0_i32, %c0_i32_0 : i32, i32
  }
  func.func @transform_12(%arg0: i32) -> (i32, i32) {
    %c0_i32 = arith.constant 0 : i32
    %c0_i32_0 = arith.constant 0 : i32
    %c0_i32_1 = arith.constant 0 : i32
    return %c0_i32, %c0_i32_0 : i32, i32
  }
  func.func @transform_13(%arg0: i32) -> (i32, i32, i32) {
    %c0_i32 = arith.constant 0 : i32
    %c0_i32_0 = arith.constant 0 : i32
    %c0_i32_1 = arith.constant 0 : i32
    return %arg0, %c0_i32, %c0_i32_0 : i32, i32, i32
  }
}

</mosaic_0001>

<llo_original>
// kernel: p2p_forward.1
$region0: #{p2p_forward.1}
  #allocation0 [shape = 'u32[]', space=smem, size = 0x4, offset = 0x4, fixed_abs, tag = 'smem constant byte address 0x4 - core index']
  #allocation1 [shape = 'u32[144,128]{1,0:T(1,128)}', space=vmem, size = 0x12000, scoped, tag = 'internal scratch']
  %s0 = inlined_call_operand.vmem [shape: f32[512,3], index: 0, kind: input, shape index: {}]
  %s1 = inlined_call_operand.vmem [shape: f32[512,3], index: 1, kind: input, shape index: {}]
  %s2 = inlined_call_operand.vmem [shape: f32[3,32], index: 2, kind: input, shape index: {}]
  %s3 = inlined_call_operand.vmem [shape: f32[1,32], index: 3, kind: input, shape index: {}]
  %s4 = inlined_call_operand.vmem [shape: f32[32,3], index: 4, kind: input, shape index: {}]
  %s5 = inlined_call_operand.vmem [shape: f32[1,3], index: 5, kind: input, shape index: {}]
  %s6 = inlined_call_operand.vmem [shape: f32[9,512], index: 6, kind: input, shape index: {}]
  %s7 = inlined_call_operand.vmem [shape: f32[3,27], index: 7, kind: input, shape index: {}]
  %s8 = inlined_call_operand.vmem [shape: f32[3,1], index: 8, kind: input, shape index: {}]
  %s9 = inlined_call_operand.vmem [shape: f32[32,27], index: 9, kind: input, shape index: {}]
  %s10 = inlined_call_operand.vmem [shape: f32[32,1], index: 10, kind: input, shape index: {}]
  %s11 = inlined_call_operand.vmem [shape: f32[32,128], index: 11, kind: input, shape index: {}]
  %s12 = inlined_call_operand.vmem [shape: f32[1,128], index: 12, kind: input, shape index: {}]
  %s13 = inlined_call_operand.hbm [shape: f32[4,1,128], index: 13, kind: output, shape index: {}]
  %s14 = sld [smem:[#allocation0]]
  $region85: #{p2p_forward.1} parent=0
    _
  %s16 = ssub.s32 1, %s14
  %s17 = scalar_select 0, %s16, %s14
  $region1: #{p2p_forward.1} parent=0
    #allocation2 [shape = 'u8[2048]{0}', space=vmem, size = 0x800, scoped, tag = 'output window, operand 0']
    #allocation3 [shape = 's32[2]{0}', space=sflag, size = 0x8, scoped, tag = 'scoped memory for p2p_forward.1']
    %18 = vsyncpa [#allocation3], 0
    %s19 = scalar_lea.sflag [#allocation3], 1
    %20 = vsyncpa %s19, 0
    loop: start=0, step=1, limit=4
    $region2: #{p2p_forward.1} parent=1 // loop_pre_header
      _
    $region3: #{p2p_forward.1} parent=1 // loop_header
      %s22 = sphi 0, %s26
      %p23 = scmp.ge.s32.totalorder %s22, 4
      %s32 = sphi 0, %s34
      %s35 = sphi 0, %s32
      %s36 = sphi 0, %s35
      %s52 = sphi 0, %s36
      %s58 = sphi 0, %s60
      %s61 = sphi 0, %s58
      %s62 = sphi 0, %s61
      %s78 = sphi 0, %s62
      %s82 = sphi 0, %s82
      %s84 = sphi 0, %s82
      %s85 = sphi 0, %s84
      %s99 = sphi 0, %s85
      %s103 = sphi 0, %s103
      %s105 = sphi 0, %s103
      %s106 = sphi 0, %s105
      %s120 = sphi 0, %s106
      %s124 = sphi 0, %s124
      %s126 = sphi 0, %s124
      %s127 = sphi 0, %s126
      %s141 = sphi 0, %s127
      %s145 = sphi 0, %s145
      %s147 = sphi 0, %s145
      %s148 = sphi 0, %s147
      %s162 = sphi 0, %s148
      %s166 = sphi 0, %s166
      %s168 = sphi 0, %s166
      %s169 = sphi 0, %s168
      %s183 = sphi 0, %s169
      %s187 = sphi 0, %s187
      %s189 = sphi 0, %s187
      %s190 = sphi 0, %s189
      %s204 = sphi 0, %s190
      %s208 = sphi 0, %s208
      %s210 = sphi 0, %s208
      %s211 = sphi 0, %s210
      %s225 = sphi 0, %s211
      %s229 = sphi 0, %s229
      %s231 = sphi 0, %s229
      %s232 = sphi 0, %s231
      %s246 = sphi 0, %s232
      %s250 = sphi 0, %s250
      %s252 = sphi 0, %s250
      %s253 = sphi 0, %s252
      %s267 = sphi 0, %s253
      %s271 = sphi 0, %s271
      %s273 = sphi 0, %s271
      %s274 = sphi 0, %s273
      %s288 = sphi 0, %s274
      %s292 = sphi 0, %s292
      %s294 = sphi 0, %s292
      %s295 = sphi 0, %s294
      %s309 = sphi 0, %s295
      %s315 = sphi 0, %s317
      %s318 = sphi 0, %s315
      %s319 = sphi 0, %s318
      %s335 = sphi 0, %s319
    $region4: #{p2p_forward.1} parent=1 // loop_header_branch
      %25 = sbr.rel (%p23) target = $region8
    $region5: #{p2p_forward.1} parent=1 // loop_body
      %s27 = ssub.s32 %s22, 1
      %s28 = ssub.s32 %s22, 2
      %s29 = sadd.s32 %s22, 1
      %s30 = ssub.s32 %s22, %s29
      %p31 = scmp.eq.s32.totalorder %s30, 0
      %s33 = sadd.s32 %s32, 1
      %s34 = scalar_select %p31, %s32, %s33
      %p37 = pneg %p31
      %p38 = scmp.eq.s32.totalorder %s22, 1
      %p39 = por %p37, %p38
      %p40 = scmp.ne.s32.totalorder %s32, %s35
      %p41 = scmp.eq.s32.totalorder %s22, 0
      %p42 = por %p40, %p41
      %p43 = scmp.ne.s32.totalorder %s32, %s35
      %p44 = scmp.eq.s32.totalorder %s27, 1
      %p45 = por %p43, %p44
      %p46 = scmp.ne.s32.totalorder %s35, %s36
      %p47 = scmp.eq.s32.totalorder %s27, 0
      %p48 = por %p46, %p47
      %p49 = scmp.ne.s32.totalorder %s35, %s36
      %p50 = scmp.eq.s32.totalorder %s28, 1
      %p51 = por %p49, %p50
      %p53 = scmp.ne.s32.totalorder %s36, %s52
      %p54 = scmp.eq.s32.totalorder %s28, 0
      %p55 = por %p53, %p54
      %s56 = ssub.s32 %s22, %s29
      %p57 = scmp.eq.s32.totalorder %s56, 0
      %s59 = sadd.s32 %s58, 1
      %s60 = scalar_select %p57, %s58, %s59
      %p63 = pneg %p57
      %p64 = scmp.eq.s32.totalorder %s22, 1
      %p65 = por %p63, %p64
      %p66 = scmp.ne.s32.totalorder %s58, %s61
      %p67 = scmp.eq.s32.totalorder %s22, 0
      %p68 = por %p66, %p67
      %p69 = scmp.ne.s32.totalorder %s58, %s61
      %p70 = scmp.eq.s32.totalorder %s27, 1
      %p71 = por %p69, %p70
      %p72 = scmp.ne.s32.totalorder %s61, %s62
      %p73 = scmp.eq.s32.totalorder %s27, 0
      %p74 = por %p72, %p73
      %p75 = scmp.ne.s32.totalorder %s61, %s62
      %p76 = scmp.eq.s32.totalorder %s28, 1
      %p77 = por %p75, %p76
      %p79 = scmp.ne.s32.totalorder %s62, %s78
      %p80 = scmp.eq.s32.totalorder %s28, 0
      %p81 = por %p79, %p80
      %s83 = sadd.s32 %s82, 1
      %p86 = scmp.eq.s32.totalorder %s22, 1
      %p87 = scmp.ne.s32.totalorder %s82, %s84
      %p88 = scmp.eq.s32.totalorder %s22, 0
      %p89 = por %p87, %p88
      %p90 = scmp.ne.s32.totalorder %s82, %s84
      %p91 = scmp.eq.s32.totalorder %s27, 1
      %p92 = por %p90, %p91
      %p93 = scmp.ne.s32.totalorder %s84, %s85
      %p94 = scmp.eq.s32.totalorder %s27, 0
      %p95 = por %p93, %p94
      %p96 = scmp.ne.s32.totalorder %s84, %s85
      %p97 = scmp.eq.s32.totalorder %s28, 1
      %p98 = por %p96, %p97
      %p100 = scmp.ne.s32.totalorder %s85, %s99
      %p101 = scmp.eq.s32.totalorder %s28, 0
      %p102 = por %p100, %p101
      %s104 = sadd.s32 %s103, 1
      %p107 = scmp.eq.s32.totalorder %s22, 1
      %p108 = scmp.ne.s32.totalorder %s103, %s105
      %p109 = scmp.eq.s32.totalorder %s22, 0
      %p110 = por %p108, %p109
      %p111 = scmp.ne.s32.totalorder %s103, %s105
      %p112 = scmp.eq.s32.totalorder %s27, 1
      %p113 = por %p111, %p112
      %p114 = scmp.ne.s32.totalorder %s105, %s106
      %p115 = scmp.eq.s32.totalorder %s27, 0
      %p116 = por %p114, %p115
      %p117 = scmp.ne.s32.totalorder %s105, %s106
      %p118 = scmp.eq.s32.totalorder %s28, 1
      %p119 = por %p117, %p118
      %p121 = scmp.ne.s32.totalorder %s106, %s120
      %p122 = scmp.eq.s32.totalorder %s28, 0
      %p123 = por %p121, %p122
      %s125 = sadd.s32 %s124, 1
      %p128 = scmp.eq.s32.totalorder %s22, 1
      %p129 = scmp.ne.s32.totalorder %s124, %s126
      %p130 = scmp.eq.s32.totalorder %s22, 0
      %p131 = por %p129, %p130
      %p132 = scmp.ne.s32.totalorder %s124, %s126
      %p133 = scmp.eq.s32.totalorder %s27, 1
      %p134 = por %p132, %p133
      %p135 = scmp.ne.s32.totalorder %s126, %s127
      %p136 = scmp.eq.s32.totalorder %s27, 0
      %p137 = por %p135, %p136
      %p138 = scmp.ne.s32.totalorder %s126, %s127
      %p139 = scmp.eq.s32.totalorder %s28, 1
      %p140 = por %p138, %p139
      %p142 = scmp.ne.s32.totalorder %s127, %s141
      %p143 = scmp.eq.s32.totalorder %s28, 0
      %p144 = por %p142, %p143
      %s146 = sadd.s32 %s145, 1
      %p149 = scmp.eq.s32.totalorder %s22, 1
      %p150 = scmp.ne.s32.totalorder %s145, %s147
      %p151 = scmp.eq.s32.totalorder %s22, 0
      %p152 = por %p150, %p151
      %p153 = scmp.ne.s32.totalorder %s145, %s147
      %p154 = scmp.eq.s32.totalorder %s27, 1
      %p155 = por %p153, %p154
      %p156 = scmp.ne.s32.totalorder %s147, %s148
      %p157 = scmp.eq.s32.totalorder %s27, 0
      %p158 = por %p156, %p157
      %p159 = scmp.ne.s32.totalorder %s147, %s148
      %p160 = scmp.eq.s32.totalorder %s28, 1
      %p161 = por %p159, %p160
      %p163 = scmp.ne.s32.totalorder %s148, %s162
      %p164 = scmp.eq.s32.totalorder %s28, 0
      %p165 = por %p163, %p164
      %s167 = sadd.s32 %s166, 1
      %p170 = scmp.eq.s32.totalorder %s22, 1
      %p171 = scmp.ne.s32.totalorder %s166, %s168
      %p172 = scmp.eq.s32.totalorder %s22, 0
      %p173 = por %p171, %p172
      %p174 = scmp.ne.s32.totalorder %s166, %s168
      %p175 = scmp.eq.s32.totalorder %s27, 1
      %p176 = por %p174, %p175
      %p177 = scmp.ne.s32.totalorder %s168, %s169
      %p178 = scmp.eq.s32.totalorder %s27, 0
      %p179 = por %p177, %p178
      %p180 = scmp.ne.s32.totalorder %s168, %s169
      %p181 = scmp.eq.s32.totalorder %s28, 1
      %p182 = por %p180, %p181
      %p184 = scmp.ne.s32.totalorder %s169, %s183
      %p185 = scmp.eq.s32.totalorder %s28, 0
      %p186 = por %p184, %p185
      %s188 = sadd.s32 %s187, 1
      %p191 = scmp.eq.s32.totalorder %s22, 1
      %p192 = scmp.ne.s32.totalorder %s187, %s189
      %p193 = scmp.eq.s32.totalorder %s22, 0
      %p194 = por %p192, %p193
      %p195 = scmp.ne.s32.totalorder %s187, %s189
      %p196 = scmp.eq.s32.totalorder %s27, 1
      %p197 = por %p195, %p196
      %p198 = scmp.ne.s32.totalorder %s189, %s190
      %p199 = scmp.eq.s32.totalorder %s27, 0
      %p200 = por %p198, %p199
      %p201 = scmp.ne.s32.totalorder %s189, %s190
      %p202 = scmp.eq.s32.totalorder %s28, 1
      %p203 = por %p201, %p202
      %p205 = scmp.ne.s32.totalorder %s190, %s204
      %p206 = scmp.eq.s32.totalorder %s28, 0
      %p207 = por %p205, %p206
      %s209 = sadd.s32 %s208, 1
      %p212 = scmp.eq.s32.totalorder %s22, 1
      %p213 = scmp.ne.s32.totalorder %s208, %s210
      %p214 = scmp.eq.s32.totalorder %s22, 0
      %p215 = por %p213, %p214
      %p216 = scmp.ne.s32.totalorder %s208, %s210
      %p217 = scmp.eq.s32.totalorder %s27, 1
      %p218 = por %p216, %p217
      %p219 = scmp.ne.s32.totalorder %s210, %s211
      %p220 = scmp.eq.s32.totalorder %s27, 0
      %p221 = por %p219, %p220
      %p222 = scmp.ne.s32.totalorder %s210, %s211
      %p223 = scmp.eq.s32.totalorder %s28, 1
      %p224 = por %p222, %p223
      %p226 = scmp.ne.s32.totalorder %s211, %s225
      %p227 = scmp.eq.s32.totalorder %s28, 0
      %p228 = por %p226, %p227
      %s230 = sadd.s32 %s229, 1
      %p233 = scmp.eq.s32.totalorder %s22, 1
      %p234 = scmp.ne.s32.totalorder %s229, %s231
      %p235 = scmp.eq.s32.totalorder %s22, 0
      %p236 = por %p234, %p235
      %p237 = scmp.ne.s32.totalorder %s229, %s231
      %p238 = scmp.eq.s32.totalorder %s27, 1
      %p239 = por %p237, %p238
      %p240 = scmp.ne.s32.totalorder %s231, %s232
      %p241 = scmp.eq.s32.totalorder %s27, 0
      %p242 = por %p240, %p241
      %p243 = scmp.ne.s32.totalorder %s231, %s232
      %p244 = scmp.eq.s32.totalorder %s28, 1
      %p245 = por %p243, %p244
      %p247 = scmp.ne.s32.totalorder %s232, %s246
      %p248 = scmp.eq.s32.totalorder %s28, 0
      %p249 = por %p247, %p248
      %s251 = sadd.s32 %s250, 1
      %p254 = scmp.eq.s32.totalorder %s22, 1
      %p255 = scmp.ne.s32.totalorder %s250, %s252
      %p256 = scmp.eq.s32.totalorder %s22, 0
      %p257 = por %p255, %p256
      %p258 = scmp.ne.s32.totalorder %s250, %s252
      %p259 = scmp.eq.s32.totalorder %s27, 1
      %p260 = por %p258, %p259
      %p261 = scmp.ne.s32.totalorder %s252, %s253
      %p262 = scmp.eq.s32.totalorder %s27, 0
      %p263 = por %p261, %p262
      %p264 = scmp.ne.s32.totalorder %s252, %s253
      %p265 = scmp.eq.s32.totalorder %s28, 1
      %p266 = por %p264, %p265
      %p268 = scmp.ne.s32.totalorder %s253, %s267
      %p269 = scmp.eq.s32.totalorder %s28, 0
      %p270 = por %p268, %p269
      %s272 = sadd.s32 %s271, 1
      %p275 = scmp.eq.s32.totalorder %s22, 1
      %p276 = scmp.ne.s32.totalorder %s271, %s273
      %p277 = scmp.eq.s32.totalorder %s22, 0
      %p278 = por %p276, %p277
      %p279 = scmp.ne.s32.totalorder %s271, %s273
      %p280 = scmp.eq.s32.totalorder %s27, 1
      %p281 = por %p279, %p280
      %p282 = scmp.ne.s32.totalorder %s273, %s274
      %p283 = scmp.eq.s32.totalorder %s27, 0
      %p284 = por %p282, %p283
      %p285 = scmp.ne.s32.totalorder %s273, %s274
      %p286 = scmp.eq.s32.totalorder %s28, 1
      %p287 = por %p285, %p286
      %p289 = scmp.ne.s32.totalorder %s274, %s288
      %p290 = scmp.eq.s32.totalorder %s28, 0
      %p291 = por %p289, %p290
      %s293 = sadd.s32 %s292, 1
      %p296 = scmp.eq.s32.totalorder %s22, 1
      %p297 = scmp.ne.s32.totalorder %s292, %s294
      %p298 = scmp.eq.s32.totalorder %s22, 0
      %p299 = por %p297, %p298
      %p300 = scmp.ne.s32.totalorder %s292, %s294
      %p301 = scmp.eq.s32.totalorder %s27, 1
      %p302 = por %p300, %p301
      %p303 = scmp.ne.s32.totalorder %s294, %s295
      %p304 = scmp.eq.s32.totalorder %s27, 0
      %p305 = por %p303, %p304
      %p306 = scmp.ne.s32.totalorder %s294, %s295
      %p307 = scmp.eq.s32.totalorder %s28, 1
      %p308 = por %p306, %p307
      %p310 = scmp.ne.s32.totalorder %s295, %s309
      %p311 = scmp.eq.s32.totalorder %s28, 0
      %p312 = por %p310, %p311
      %s313 = ssub.s32 %s22, %s29
      %p314 = scmp.eq.s32.totalorder %s313, 0
      %s316 = sadd.s32 %s315, 1
      %s317 = scalar_select %p314, %s315, %s316
      %p320 = pneg %p314
      %p321 = scmp.eq.s32.totalorder %s22, 1
      %p322 = por %p320, %p321
      %p323 = scmp.ne.s32.totalorder %s315, %s318
      %p324 = scmp.eq.s32.totalorder %s22, 0
      %p325 = por %p323, %p324
      %p326 = scmp.ne.s32.totalorder %s315, %s318
      %p327 = scmp.eq.s32.totalorder %s27, 1
      %p328 = por %p326, %p327
      %p329 = scmp.ne.s32.totalorder %s318, %s319
      %p330 = scmp.eq.s32.totalorder %s27, 0
      %p331 = por %p329, %p330
      %p332 = scmp.ne.s32.totalorder %s318, %s319
      %p333 = scmp.eq.s32.totalorder %s28, 1
      %p334 = por %p332, %p333
      %p336 = scmp.ne.s32.totalorder %s319, %s335
      %p337 = scmp.eq.s32.totalorder %s28, 0
      %p338 = por %p336, %p337
      %p339 = scmp.le.s32.totalorder 1, %s22
      %p340 = scmp.lt.s32.totalorder %s22, 3
      %p341 = pnand %p339, %p340
      %p342 = pneg %p341
      // Predicated region
      $region9: #{p2p_forward.1} parent=5 // pred_check
        _
      $region10: #{p2p_forward.1} parent=5 // pred_check_branch
        %344 = sbr.rel (%p341) target = $region12
      $region11: #{p2p_forward.1} parent=5 // pred_region
        %s345 = ssub.s32 %s22, 1
        // Predicated region
        $region13: #{p2p_forward.1} parent=11 // pred_check
          %p346 = pneg %p95
        $region14: #{p2p_forward.1} parent=11 // pred_check_branch
          %348 = sbr.rel (%p346) target = $region16
        $region15: #{p2p_forward.1} parent=11 // pred_region
          _
        $region16: #{p2p_forward.1} parent=11 // pred_fallthru
          _
        // Predicated region
        $region17: #{p2p_forward.1} parent=11 // pred_check
          %p349 = pneg %p116
        $region18: #{p2p_forward.1} parent=11 // pred_check_branch
          %351 = sbr.rel (%p349) target = $region20
        $region19: #{p2p_forward.1} parent=11 // pred_region
          _
        $region20: #{p2p_forward.1} parent=11 // pred_fallthru
          _
        // Predicated region
        $region21: #{p2p_forward.1} parent=11 // pred_check
          %p352 = pneg %p137
        $region22: #{p2p_forward.1} parent=11 // pred_check_branch
          %354 = sbr.rel (%p352) target = $region24
        $region23: #{p2p_forward.1} parent=11 // pred_region
          _
        $region24: #{p2p_forward.1} parent=11 // pred_fallthru
          _
        // Predicated region
        $region25: #{p2p_forward.1} parent=11 // pred_check
          %p355 = pneg %p158
        $region26: #{p2p_forward.1} parent=11 // pred_check_branch
          %357 = sbr.rel (%p355) target = $region28
        $region27: #{p2p_forward.1} parent=11 // pred_region
          _
        $region28: #{p2p_forward.1} parent=11 // pred_fallthru
          _
        // Predicated region
        $region29: #{p2p_forward.1} parent=11 // pred_check
          %p358 = pneg %p179
        $region30: #{p2p_forward.1} parent=11 // pred_check_branch
          %360 = sbr.rel (%p358) target = $region32
        $region31: #{p2p_forward.1} parent=11 // pred_region
          _
        $region32: #{p2p_forward.1} parent=11 // pred_fallthru
          _
        // Predicated region
        $region33: #{p2p_forward.1} parent=11 // pred_check
          %p361 = pneg %p200
        $region34: #{p2p_forward.1} parent=11 // pred_check_branch
          %363 = sbr.rel (%p361) target = $region36
        $region35: #{p2p_forward.1} parent=11 // pred_region
          _
        $region36: #{p2p_forward.1} parent=11 // pred_fallthru
          _
        // Predicated region
        $region37: #{p2p_forward.1} parent=11 // pred_check
          %p364 = pneg %p221
        $region38: #{p2p_forward.1} parent=11 // pred_check_branch
          %366 = sbr.rel (%p364) target = $region40
        $region39: #{p2p_forward.1} parent=11 // pred_region
          _
        $region40: #{p2p_forward.1} parent=11 // pred_fallthru
          _
        // Predicated region
        $region41: #{p2p_forward.1} parent=11 // pred_check
          %p367 = pneg %p242
        $region42: #{p2p_forward.1} parent=11 // pred_check_branch
          %369 = sbr.rel (%p367) target = $region44
        $region43: #{p2p_forward.1} parent=11 // pred_region
          _
        $region44: #{p2p_forward.1} parent=11 // pred_fallthru
          _
        // Predicated region
        $region45: #{p2p_forward.1} parent=11 // pred_check
          %p370 = pneg %p263
        $region46: #{p2p_forward.1} parent=11 // pred_check_branch
          %372 = sbr.rel (%p370) target = $region48
        $region47: #{p2p_forward.1} parent=11 // pred_region
          _
        $region48: #{p2p_forward.1} parent=11 // pred_fallthru
          _
        // Predicated region
        $region49: #{p2p_forward.1} parent=11 // pred_check
          %p373 = pneg %p284
        $region50: #{p2p_forward.1} parent=11 // pred_check_branch
          %375 = sbr.rel (%p373) target = $region52
        $region51: #{p2p_forward.1} parent=11 // pred_region
          _
        $region52: #{p2p_forward.1} parent=11 // pred_fallthru
          _
        // Predicated region
        $region53: #{p2p_forward.1} parent=11 // pred_check
          %p376 = pneg %p305
        $region54: #{p2p_forward.1} parent=11 // pred_check_branch
          %378 = sbr.rel (%p376) target = $region56
        $region55: #{p2p_forward.1} parent=11 // pred_region
          _
        $region56: #{p2p_forward.1} parent=11 // pred_fallthru
          _
      $region12: #{p2p_forward.1} parent=5 // pred_fallthru
        _
      %p379 = scmp.lt.s32.totalorder %s22, 2
      // Predicated region
      $region57: #{p2p_forward.1} parent=5 // pred_check
        %p380 = pneg %p379
      $region58: #{p2p_forward.1} parent=5 // pred_check_branch
        %382 = sbr.rel (%p380) target = $region60
      $region59: #{p2p_forward.1} parent=5 // pred_region
        // Predicated region
        $region61: #{p2p_forward.1} parent=59 // pred_check
          %p383 = pneg %p42
        $region62: #{p2p_forward.1} parent=59 // pred_check_branch
          %385 = sbr.rel (%p383) target = $region64
        $region63: #{p2p_forward.1} parent=59 // pred_region
          %s386 = smul.u32 32, %s22
          %p387 = scmp.lt.s32.totalorder %s386, 63
          %s388 = scalar_select %p387, %s386, 63
          %s389 = smul.addr %s388, 8
          %s390 = scalar_lea.vmem %s0, %s389
          %s391 = smul.u32 32, %s22
        $region64: #{p2p_forward.1} parent=59 // pred_fallthru
          _
        // Predicated region
        $region65: #{p2p_forward.1} parent=59 // pred_check
          %p392 = pneg %p68
        $region66: #{p2p_forward.1} parent=59 // pred_check_branch
          %394 = sbr.rel (%p392) target = $region68
        $region67: #{p2p_forward.1} parent=59 // pred_region
          %s395 = smul.u32 32, %s22
          %p396 = scmp.lt.s32.totalorder %s395, 63
          %s397 = scalar_select %p396, %s395, 63
          %s398 = smul.addr %s397, 8
          %s399 = scalar_lea.vmem %s1, %s398
          %s400 = smul.u32 32, %s22
        $region68: #{p2p_forward.1} parent=59 // pred_fallthru
          _
      $region60: #{p2p_forward.1} parent=5 // pred_fallthru
        _
      %p401 = scmp.le.s32.totalorder 1, %s22
      %p402 = scmp.lt.s32.totalorder %s22, 3
      %p403 = pnand %p401, %p402
      %p404 = pneg %p403
      // Predicated region
      $region69: #{p2p_forward.1} parent=5 // pred_check
        _
      $region70: #{p2p_forward.1} parent=5 // pred_check_branch
        %406 = sbr.rel (%p403) target = $region72
      $region71: #{p2p_forward.1} parent=5 // pred_region
        %s407 = ssub.s32 %s22, 1
        %s408 = smul.u32 32, %s27
        %p409 = scmp.lt.s32.totalorder %s408, 63
        %s410 = scalar_select %p409, %s408, 63
        %s411 = smul.addr %s410, 8
        %s412 = scalar_lea.vmem %s0, %s411
        %p413 = pneg %p48
        %p414 = pneg %p45
        %s415 = smul.u32 32, %s27
        %p416 = scmp.lt.s32.totalorder %s415, 63
        %s417 = scalar_select %p416, %s415, 63
        %s418 = smul.addr %s417, 8
        %s419 = scalar_lea.vmem %s1, %s418
        %p420 = pneg %p74
        %p421 = pneg %p71
        %p422 = pneg %p95
        %p423 = pneg %p92
        %p424 = pneg %p116
        %p425 = pneg %p113
        %p426 = pneg %p137
        %p427 = pneg %p134
        %p428 = pneg %p158
        %p429 = pneg %p155
        %p430 = pneg %p179
        %p431 = pneg %p176
        %p432 = pneg %p200
        %p433 = pneg %p197
        %p434 = pneg %p221
        %p435 = pneg %p218
        %p436 = pneg %p242
        %p437 = pneg %p239
        %p438 = pneg %p263
        %p439 = pneg %p260
        %p440 = pneg %p284
        %p441 = pneg %p281
        %p442 = pneg %p305
        %p443 = pneg %p302
        %p444 = pneg %p331
        %p445 = pneg %p328
        %s446 = sand.u32 %s318, 1
        %s447 = scalar_lea.sflag [#allocation3], %s446
        %s448 = sand.u32 %s318, 1
        %s449 = smul.addr %s448, 2
        %s450 = scalar_lea.vmem [#allocation2], %s449
        %s451 = smul.u32 32, %s27
        %p452 = scmp.lt.s32.totalorder %s451, 63
        %s453 = scalar_select %p452, %s451, 63
        %s454 = smul.addr %s453, 8
        %s455 = scalar_lea.vmem %s0, %s454
        %s456 = smul.u32 32, %s27
        %s457 = smul.u32 32, %s27
        %p458 = scmp.lt.s32.totalorder %s457, 63
        %s459 = scalar_select %p458, %s457, 63
        %s460 = smul.addr %s459, 8
        %s461 = scalar_lea.vmem %s1, %s460
        %s462 = smul.u32 32, %s27
        %s463 = smul.u32 2, %s27
        %v464 = vld [vmem:[%s455] sm:$0xff]
        %v465 = vld [vmem:[%s455 + $0x8] sm:$0xff]
        %v466 = vld [vmem:[%s455 + $0x10] sm:$0xff]
        %v467 = vld [vmem:[%s455 + $0x18] sm:$0xff]
        %v468 = vld [vmem:[%s455 + $0x20] sm:$0xff]
        %v469 = vld [vmem:[%s455 + $0x28] sm:$0xff]
        %v470 = vld [vmem:[%s455 + $0x30] sm:$0xff]
        %v471 = vld [vmem:[%s455 + $0x38] sm:$0xff]
        %v472 = vld [vmem:[%s455 + $0x40] sm:$0xff]
        %v473 = vld [vmem:[%s455 + $0x48] sm:$0xff]
        %v474 = vld [vmem:[%s455 + $0x50] sm:$0xff]
        %v475 = vld [vmem:[%s455 + $0x58] sm:$0xff]
        %v476 = vld [vmem:[%s455 + $0x60] sm:$0xff]
        %v477 = vld [vmem:[%s455 + $0x68] sm:$0xff]
        %v478 = vld [vmem:[%s455 + $0x70] sm:$0xff]
        %v479 = vld [vmem:[%s455 + $0x78] sm:$0xff]
        %v480 = vld [vmem:[%s455 + $0x80] sm:$0xff]
        %v481 = vld [vmem:[%s455 + $0x88] sm:$0xff]
        %v482 = vld [vmem:[%s455 + $0x90] sm:$0xff]
        %v483 = vld [vmem:[%s455 + $0x98] sm:$0xff]
        %v484 = vld [vmem:[%s455 + $0xa0] sm:$0xff]
        %v485 = vld [vmem:[%s455 + $0xa8] sm:$0xff]
        %v486 = vld [vmem:[%s455 + $0xb0] sm:$0xff]
        %v487 = vld [vmem:[%s455 + $0xb8] sm:$0xff]
        %v488 = vld [vmem:[%s455 + $0xc0] sm:$0xff]
        %v489 = vld [vmem:[%s455 + $0xc8] sm:$0xff]
        %v490 = vld [vmem:[%s455 + $0xd0] sm:$0xff]
        %v491 = vld [vmem:[%s455 + $0xd8] sm:$0xff]
        %v492 = vld [vmem:[%s455 + $0xe0] sm:$0xff]
        %v493 = vld [vmem:[%s455 + $0xe8] sm:$0xff]
        %v494 = vld [vmem:[%s455 + $0xf0] sm:$0xff]
        %v495 = vld [vmem:[%s455 + $0xf8] sm:$0xff]
        %v496 = vld [vmem:[%s2] sm:$0x7]
        %v497 = vld [vmem:[%s3] sm:$0x1]
        %v499 = vlaneseq
        %v500 = vshrl.u32 %v499, 7
        %v501 = vsub.s32 0, %v500
        %v502 = vrot.slane %v497, %v501
        %vm504 = vcmask 23552
        %v506 = vsel %vm504, %v464, 0
        %v509 = vsel %vm504, %v465, 0
        %v512 = vsel %vm504, %v466, 0
        %v515 = vsel %vm504, %v467, 0
        %v518 = vsel %vm504, %v468, 0
        %v521 = vsel %vm504, %v469, 0
        %v524 = vsel %vm504, %v470, 0
        %v527 = vsel %vm504, %v471, 0
        %v530 = vsel %vm504, %v472, 0
        %v533 = vsel %vm504, %v473, 0
        %v536 = vsel %vm504, %v474, 0
        %v539 = vsel %vm504, %v475, 0
        %v542 = vsel %vm504, %v476, 0
        %v545 = vsel %vm504, %v477, 0
        %v548 = vsel %vm504, %v478, 0
        %v551 = vsel %vm504, %v479, 0
        %v554 = vsel %vm504, %v480, 0
        %v557 = vsel %vm504, %v481, 0
        %v560 = vsel %vm504, %v482, 0
        %v563 = vsel %vm504, %v483, 0
        %v566 = vsel %vm504, %v484, 0
        %v569 = vsel %vm504, %v485, 0
        %v572 = vsel %vm504, %v486, 0
        %v575 = vsel %vm504, %v487, 0
        %v578 = vsel %vm504, %v488, 0
        %v581 = vsel %vm504, %v489, 0
        %v584 = vsel %vm504, %v490, 0
        %v587 = vsel %vm504, %v491, 0
        %v590 = vsel %vm504, %v492, 0
        %v593 = vsel %vm504, %v493, 0
        %v596 = vsel %vm504, %v494, 0
        %v599 = vsel %vm504, %v495, 0
        %vm601 = vcmask 1042432
        %v603 = vsel %vm601, %v496, 0
        %605 = vmatprep.subr.mxu0 0.0
        %606 = vmatpush1.msra.mxu0 %v603
        %607 = vmatprep.subr.mxu0 0.0
        %608 = vmatpush1.msra.mxu0 0.0
        %609 = vmatprep.subr.mxu0 0.0
        %610 = vmatpush1.msra.mxu0 0.0
        %611 = vmatprep.subr.mxu0 0.0
        %612 = vmatpush1.msra.mxu0 0.0
        %613 = vmatprep.subr.mxu0 0.0
        %614 = vmatpush1.msra.mxu0 0.0
        %615 = vmatprep.subr.mxu0 0.0
        %616 = vmatpush1.msra.mxu0 0.0
        %617 = vmatprep.subr.mxu0 0.0
        %618 = vmatpush1.msra.mxu0 0.0
        %619 = vmatprep.subr.mxu0 0.0
        %620 = vmatpush1.msra.mxu0 0.0
        %621 = vmatprep.subr.mxu0 0.0
        %622 = vmatpush1.msra.mxu0 0.0
        %623 = vmatprep.subr.mxu0 0.0
        %624 = vmatpush1.msra.mxu0 0.0
        %625 = vmatprep.subr.mxu0 0.0
        %626 = vmatpush1.msra.mxu0 0.0
        %627 = vmatprep.subr.mxu0 0.0
        %628 = vmatpush1.msra.mxu0 0.0
        %629 = vmatprep.subr.mxu0 0.0
        %630 = vmatpush1.msra.mxu0 0.0
        %631 = vmatprep.subr.mxu0 0.0
        %632 = vmatpush1.msra.mxu0 0.0
        %633 = vmatprep.subr.mxu0 0.0
        %634 = vmatpush1.msra.mxu0 0.0
        %635 = vmatprep.subr.mxu0 0.0
        %636 = vmatpush1.msra.mxu0 0.0
        %637 = vmatprep.subr.mxu0 0.0
        %638 = vmatpush1.msra.mxu0 0.0
        %639 = vmatprep.subr.mxu0 0.0
        %640 = vmatpush1.msra.mxu0 0.0
        %641 = vmatprep.subr.mxu0 0.0
        %642 = vmatpush1.msra.mxu0 0.0
        %643 = vmatprep.subr.mxu0 0.0
        %644 = vmatpush1.msra.mxu0 0.0
        %645 = vmatprep.subr.mxu0 0.0
        %646 = vmatpush1.msra.mxu0 0.0
        %647 = vmatprep.subr.mxu0 0.0
        %648 = vmatpush1.msra.mxu0 0.0
        %649 = vmatprep.subr.mxu0 0.0
        %650 = vmatpush1.msra.mxu0 0.0
        %651 = vmatprep.subr.mxu0 0.0
        %652 = vmatpush1.msra.mxu0 0.0
        %653 = vmatprep.subr.mxu0 0.0
        %654 = vmatpush1.msra.mxu0 0.0
        %655 = vmatprep.subr.mxu0 0.0
        %656 = vmatpush1.msra.mxu0 0.0
        %657 = vmatprep.subr.mxu0 0.0
        %658 = vmatpush1.msra.mxu0 0.0
        %659 = vmatprep.subr.mxu0 0.0
        %660 = vmatpush1.msra.mxu0 0.0
        %661 = vmatprep.subr.mxu0 0.0
        %662 = vmatpush1.msra.mxu0 0.0
        %663 = vmatprep.subr.mxu0 0.0
        %664 = vmatpush1.msra.mxu0 0.0
        %665 = vmatprep.subr.mxu0 0.0
        %666 = vmatpush1.msra.mxu0 0.0
        %667 = vmatprep.subr.mxu0 0.0
        %668 = vmatpush1.msra.mxu0 0.0
        %669 = vmatprep.mubr.f32.mxu0 0.0
        %670 = vmatmul.mubr.f32.gmra.mrb[0].mxu0 %v506
        %v671 = vpop.f32.mrb[0].mxu0
        %v672 = vadd.f32 %v502, %v671
        %v673 = vpop.f32.mrb[0].mxu0
        %674 = vmatprep.mubr.f32.mxu0 0.0
        %675 = vmatmul.mubr.f32.gmra.mrb[0].mxu0 %v509
        %v676 = vpop.f32.mrb[0].mxu0
        %v677 = vadd.f32 %v502, %v676
        %v678 = vpop.f32.mrb[0].mxu0
        %679 = vmatprep.mubr.f32.mxu0 0.0
        %680 = vmatmul.mubr.f32.gmra.mrb[0].mxu0 %v512
        %v681 = vpop.f32.mrb[0].mxu0
        %v682 = vadd.f32 %v502, %v681
        %v683 = vpop.f32.mrb[0].mxu0
        %684 = vmatprep.mubr.f32.mxu0 0.0
        %685 = vmatmul.mubr.f32.gmra.mrb[0].mxu0 %v515
        %v686 = vpop.f32.mrb[0].mxu0
        %v687 = vadd.f32 %v502, %v686
        %v688 = vpop.f32.mrb[0].mxu0
        %689 = vmatprep.mubr.f32.mxu0 0.0
        %690 = vmatmul.mubr.f32.gmra.mrb[0].mxu0 %v518
        %v691 = vpop.f32.mrb[0].mxu0
        %v692 = vadd.f32 %v502, %v691
        %v693 = vpop.f32.mrb[0].mxu0
        %694 = vmatprep.mubr.f32.mxu0 0.0
        %695 = vmatmul.mubr.f32.gmra.mrb[0].mxu0 %v521
        %v696 = vpop.f32.mrb[0].mxu0
        %v697 = vadd.f32 %v502, %v696
        %v698 = vpop.f32.mrb[0].mxu0
        %699 = vmatprep.mubr.f32.mxu0 0.0
        %700 = vmatmul.mubr.f32.gmra.mrb[0].mxu0 %v524
        %v701 = vpop.f32.mrb[0].mxu0
        %v702 = vadd.f32 %v502, %v701
        %v703 = vpop.f32.mrb[0].mxu0
        %704 = vmatprep.mubr.f32.mxu0 0.0
        %705 = vmatmul.mubr.f32.gmra.mrb[0].mxu0 %v527
        %v706 = vpop.f32.mrb[0].mxu0
        %v707 = vadd.f32 %v502, %v706
        %v708 = vpop.f32.mrb[0].mxu0
        %709 = vmatprep.mubr.f32.mxu0 0.0
        %710 = vmatmul.mubr.f32.gmra.mrb[0].mxu0 %v530
        %v711 = vpop.f32.mrb[0].mxu0
        %v712 = vadd.f32 %v502, %v711
        %v713 = vpop.f32.mrb[0].mxu0
        %714 = vmatprep.mubr.f32.mxu0 0.0
        %715 = vmatmul.mubr.f32.gmra.mrb[0].mxu0 %v533
        %v716 = vpop.f32.mrb[0].mxu0
        %v717 = vadd.f32 %v502, %v716
        %v718 = vpop.f32.mrb[0].mxu0
        %719 = vmatprep.mubr.f32.mxu0 0.0
        %720 = vmatmul.mubr.f32.gmra.mrb[0].mxu0 %v536
        %v721 = vpop.f32.mrb[0].mxu0
        %v722 = vadd.f32 %v502, %v721
        %v723 = vpop.f32.mrb[0].mxu0
        %724 = vmatprep.mubr.f32.mxu0 0.0
        %725 = vmatmul.mubr.f32.gmra.mrb[0].mxu0 %v539
        %v726 = vpop.f32.mrb[0].mxu0
        %v727 = vadd.f32 %v502, %v726
        %v728 = vpop.f32.mrb[0].mxu0
        %729 = vmatprep.mubr.f32.mxu0 0.0
        %730 = vmatmul.mubr.f32.gmra.mrb[0].mxu0 %v542
        %v731 = vpop.f32.mrb[0].mxu0
        %v732 = vadd.f32 %v502, %v731
        %v733 = vpop.f32.mrb[0].mxu0
        %734 = vmatprep.mubr.f32.mxu0 0.0
        %735 = vmatmul.mubr.f32.gmra.mrb[0].mxu0 %v545
        %v736 = vpop.f32.mrb[0].mxu0
        %v737 = vadd.f32 %v502, %v736
        %v738 = vpop.f32.mrb[0].mxu0
        %739 = vmatprep.mubr.f32.mxu0 0.0
        %740 = vmatmul.mubr.f32.gmra.mrb[0].mxu0 %v548
        %v741 = vpop.f32.mrb[0].mxu0
        %v742 = vadd.f32 %v502, %v741
        %v743 = vpop.f32.mrb[0].mxu0
        %744 = vmatprep.mubr.f32.mxu0 0.0
        %745 = vmatmul.mubr.f32.gmra.mrb[0].mxu0 %v551
        %v746 = vpop.f32.mrb[0].mxu0
        %v747 = vadd.f32 %v502, %v746
        %v748 = vpop.f32.mrb[0].mxu0
        %749 = vmatprep.mubr.f32.mxu0 0.0
        %750 = vmatmul.mubr.f32.gmra.mrb[0].mxu0 %v554
        %v751 = vpop.f32.mrb[0].mxu0
        %v752 = vadd.f32 %v502, %v751
        %v753 = vpop.f32.mrb[0].mxu0
        %754 = vmatprep.mubr.f32.mxu0 0.0
        %755 = vmatmul.mubr.f32.gmra.mrb[0].mxu0 %v557
        %v756 = vpop.f32.mrb[0].mxu0
        %v757 = vadd.f32 %v502, %v756
        %v758 = vpop.f32.mrb[0].mxu0
        %759 = vmatprep.mubr.f32.mxu0 0.0
        %760 = vmatmul.mubr.f32.gmra.mrb[0].mxu0 %v560
        %v761 = vpop.f32.mrb[0].mxu0
        %v762 = vadd.f32 %v502, %v761
        %v763 = vpop.f32.mrb[0].mxu0
        %764 = vmatprep.mubr.f32.mxu0 0.0
        %765 = vmatmul.mubr.f32.gmra.mrb[0].mxu0 %v563
        %v766 = vpop.f32.mrb[0].mxu0
        %v767 = vadd.f32 %v502, %v766
        %v768 = vpop.f32.mrb[0].mxu0
        %769 = vmatprep.mubr.f32.mxu0 0.0
        %770 = vmatmul.mubr.f32.gmra.mrb[0].mxu0 %v566
        %v771 = vpop.f32.mrb[0].mxu0
        %v772 = vadd.f32 %v502, %v771
        %v773 = vpop.f32.mrb[0].mxu0
        %774 = vmatprep.mubr.f32.mxu0 0.0
        %775 = vmatmul.mubr.f32.gmra.mrb[0].mxu0 %v569
        %v776 = vpop.f32.mrb[0].mxu0
        %v777 = vadd.f32 %v502, %v776
        %v778 = vpop.f32.mrb[0].mxu0
        %779 = vmatprep.mubr.f32.mxu0 0.0
        %780 = vmatmul.mubr.f32.gmra.mrb[0].mxu0 %v572
        %v781 = vpop.f32.mrb[0].mxu0
        %v782 = vadd.f32 %v502, %v781
        %v783 = vpop.f32.mrb[0].mxu0
        %784 = vmatprep.mubr.f32.mxu0 0.0
        %785 = vmatmul.mubr.f32.gmra.mrb[0].mxu0 %v575
        %v786 = vpop.f32.mrb[0].mxu0
        %v787 = vadd.f32 %v502, %v786
        %v788 = vpop.f32.mrb[0].mxu0
        %789 = vmatprep.mubr.f32.mxu0 0.0
        %790 = vmatmul.mubr.f32.gmra.mrb[0].mxu0 %v578
        %v791 = vpop.f32.mrb[0].mxu0
        %v792 = vadd.f32 %v502, %v791
        %v793 = vpop.f32.mrb[0].mxu0
        %794 = vmatprep.mubr.f32.mxu0 0.0
        %795 = vmatmul.mubr.f32.gmra.mrb[0].mxu0 %v581
        %v796 = vpop.f32.mrb[0].mxu0
        %v797 = vadd.f32 %v502, %v796
        %v798 = vpop.f32.mrb[0].mxu0
        %799 = vmatprep.mubr.f32.mxu0 0.0
        %800 = vmatmul.mubr.f32.gmra.mrb[0].mxu0 %v584
        %v801 = vpop.f32.mrb[0].mxu0
        %v802 = vadd.f32 %v502, %v801
        %v803 = vpop.f32.mrb[0].mxu0
        %804 = vmatprep.mubr.f32.mxu0 0.0
        %805 = vmatmul.mubr.f32.gmra.mrb[0].mxu0 %v587
        %v806 = vpop.f32.mrb[0].mxu0
        %v807 = vadd.f32 %v502, %v806
        %v808 = vpop.f32.mrb[0].mxu0
        %809 = vmatprep.mubr.f32.mxu0 0.0
        %810 = vmatmul.mubr.f32.gmra.mrb[0].mxu0 %v590
        %v811 = vpop.f32.mrb[0].mxu0
        %v812 = vadd.f32 %v502, %v811
        %v813 = vpop.f32.mrb[0].mxu0
        %814 = vmatprep.mubr.f32.mxu0 0.0
        %815 = vmatmul.mubr.f32.gmra.mrb[0].mxu0 %v593
        %v816 = vpop.f32.mrb[0].mxu0
        %v817 = vadd.f32 %v502, %v816
        %v818 = vpop.f32.mrb[0].mxu0
        %819 = vmatprep.mubr.f32.mxu0 0.0
        %820 = vmatmul.mubr.f32.gmra.mrb[0].mxu0 %v596
        %v821 = vpop.f32.mrb[0].mxu0
        %v822 = vadd.f32 %v502, %v821
        %v823 = vpop.f32.mrb[0].mxu0
        %824 = vmatprep.mubr.f32.mxu0 0.0
        %825 = vmatmul.mubr.f32.gmra.mrb[0].mxu0 %v599
        %v826 = vpop.f32.mrb[0].mxu0
        %v827 = vadd.f32 %v502, %v826
        %v828 = vpop.f32.mrb[0].mxu0
        %829 = vdwg.mxu0
        %v830 = vmax.f32 %v672, 0.0
        %v831 = vmax.f32 %v677, 0.0
        %v832 = vmax.f32 %v682, 0.0
        %v833 = vmax.f32 %v687, 0.0
        %v834 = vmax.f32 %v692, 0.0
        %v835 = vmax.f32 %v697, 0.0
        %v836 = vmax.f32 %v702, 0.0
        %v837 = vmax.f32 %v707, 0.0
        %v838 = vmax.f32 %v712, 0.0
        %v839 = vmax.f32 %v717, 0.0
        %v840 = vmax.f32 %v722, 0.0
        %v841 = vmax.f32 %v727, 0.0
        %v842 = vmax.f32 %v732, 0.0
        %v843 = vmax.f32 %v737, 0.0
        %v844 = vmax.f32 %v742, 0.0
        %v845 = vmax.f32 %v747, 0.0
        %v846 = vmax.f32 %v752, 0.0
        %v847 = vmax.f32 %v757, 0.0
        %v848 = vmax.f32 %v762, 0.0
        %v849 = vmax.f32 %v767, 0.0
        %v850 = vmax.f32 %v772, 0.0
        %v851 = vmax.f32 %v777, 0.0
        %v852 = vmax.f32 %v782, 0.0
        %v853 = vmax.f32 %v787, 0.0
        %v854 = vmax.f32 %v792, 0.0
        %v855 = vmax.f32 %v797, 0.0
        %v856 = vmax.f32 %v802, 0.0
        %v857 = vmax.f32 %v807, 0.0
        %v858 = vmax.f32 %v812, 0.0
        %v859 = vmax.f32 %v817, 0.0
        %v860 = vmax.f32 %v822, 0.0
        %v861 = vmax.f32 %v827, 0.0
        %v862 = vld [vmem:[%s4] sm:$0xff]
        %v863 = vld [vmem:[%s4 + $0x8] sm:$0xff]
        %v864 = vld [vmem:[%s4 + $0x10] sm:$0xff]
        %v865 = vld [vmem:[%s4 + $0x18] sm:$0xff]
        %v866 = vld [vmem:[%s5] sm:$0x1]
        %v868 = vlaneseq
        %v869 = vshrl.u32 %v868, 7
        %v870 = vsub.s32 0, %v869
        %v871 = vrot.slane %v866, %v870
        %vm873 = vcmask 261120
        %v875 = vsel %vm873, %v830, 0
        %v878 = vsel %vm873, %v831, 0
        %v881 = vsel %vm873, %v832, 0
        %v884 = vsel %vm873, %v833, 0
        %v887 = vsel %vm873, %v834, 0
        %v890 = vsel %vm873, %v835, 0
        %v893 = vsel %vm873, %v836, 0
        %v896 = vsel %vm873, %v837, 0
        %v899 = vsel %vm873, %v838, 0
        %v902 = vsel %vm873, %v839, 0
        %v905 = vsel %vm873, %v840, 0
        %v908 = vsel %vm873, %v841, 0
        %v911 = vsel %vm873, %v842, 0
        %v914 = vsel %vm873, %v843, 0
        %v917 = vsel %vm873, %v844, 0
        %v920 = vsel %vm873, %v845, 0
        %v923 = vsel %vm873, %v846, 0
        %v926 = vsel %vm873, %v847, 0
        %v929 = vsel %vm873, %v848, 0
        %v932 = vsel %vm873, %v849, 0
        %v935 = vsel %vm873, %v850, 0
        %v938 = vsel %vm873, %v851, 0
        %v941 = vsel %vm873, %v852, 0
        %v944 = vsel %vm873, %v853, 0
        %v947 = vsel %vm873, %v854, 0
        %v950 = vsel %vm873, %v855, 0
        %v953 = vsel %vm873, %v856, 0
        %v956 = vsel %vm873, %v857, 0
        %v959 = vsel %vm873, %v858, 0
        %v962 = vsel %vm873, %v859, 0
        %v965 = vsel %vm873, %v860, 0
        %v968 = vsel %vm873, %v861, 0
        %970 = vmatprep.subr.mxu0 0.0
        %971 = vmatpush1.msra.mxu0 %v862
        %972 = vmatprep.subr.mxu0 0.0
        %973 = vmatpush1.msra.mxu0 %v863
        %974 = vmatprep.subr.mxu0 0.0
        %975 = vmatpush1.msra.mxu0 %v864
        %976 = vmatprep.subr.mxu0 0.0
        %977 = vmatpush1.msra.mxu0 %v865
        %978 = vmatprep.subr.mxu0 0.0
        %979 = vmatpush1.msra.mxu0 0.0
        %980 = vmatprep.subr.mxu0 0.0
        %981 = vmatpush1.msra.mxu0 0.0
        %982 = vmatprep.subr.mxu0 0.0
        %983 = vmatpush1.msra.mxu0 0.0
        %984 = vmatprep.subr.mxu0 0.0
        %985 = vmatpush1.msra.mxu0 0.0
        %986 = vmatprep.subr.mxu0 0.0
        %987 = vmatpush1.msra.mxu0 0.0
        %988 = vmatprep.subr.mxu0 0.0
        %989 = vmatpush1.msra.mxu0 0.0
        %990 = vmatprep.subr.mxu0 0.0
        %991 = vmatpush1.msra.mxu0 0.0
        %992 = vmatprep.subr.mxu0 0.0
        %993 = vmatpush1.msra.mxu0 0.0
        %994 = vmatprep.subr.mxu0 0.0
        %995 = vmatpush1.msra.mxu0 0.0
        %996 = vmatprep.subr.mxu0 0.0
        %997 = vmatpush1.msra.mxu0 0.0
        %998 = vmatprep.subr.mxu0 0.0
        %999 = vmatpush1.msra.mxu0 0.0
        %1000 = vmatprep.subr.mxu0 0.0
        %1001 = vmatpush1.msra.mxu0 0.0
        %1002 = vmatprep.subr.mxu0 0.0
        %1003 = vmatpush1.msra.mxu0 0.0
        %1004 = vmatprep.subr.mxu0 0.0
        %1005 = vmatpush1.msra.mxu0 0.0
        %1006 = vmatprep.subr.mxu0 0.0
        %1007 = vmatpush1.msra.mxu0 0.0
        %1008 = vmatprep.subr.mxu0 0.0
        %1009 = vmatpush1.msra.mxu0 0.0
        %1010 = vmatprep.subr.mxu0 0.0
        %1011 = vmatpush1.msra.mxu0 0.0
        %1012 = vmatprep.subr.mxu0 0.0
        %1013 = vmatpush1.msra.mxu0 0.0
        %1014 = vmatprep.subr.mxu0 0.0
        %1015 = vmatpush1.msra.mxu0 0.0
        %1016 = vmatprep.subr.mxu0 0.0
        %1017 = vmatpush1.msra.mxu0 0.0
        %1018 = vmatprep.subr.mxu0 0.0
        %1019 = vmatpush1.msra.mxu0 0.0
        %1020 = vmatprep.subr.mxu0 0.0
        %1021 = vmatpush1.msra.mxu0 0.0
        %1022 = vmatprep.subr.mxu0 0.0
        %1023 = vmatpush1.msra.mxu0 0.0
        %1024 = vmatprep.subr.mxu0 0.0
        %1025 = vmatpush1.msra.mxu0 0.0
        %1026 = vmatprep.subr.mxu0 0.0
        %1027 = vmatpush1.msra.mxu0 0.0
        %1028 = vmatprep.subr.mxu0 0.0
        %1029 = vmatpush1.msra.mxu0 0.0
        %1030 = vmatprep.subr.mxu0 0.0
        %1031 = vmatpush1.msra.mxu0 0.0
        %1032 = vmatprep.subr.mxu0 0.0
        %1033 = vmatpush1.msra.mxu0 0.0
        %1034 = vmatprep.mubr.f32.mxu0 0.0
        %1035 = vmatmul.mubr.f32.gmra.mrb[0].mxu0 %v875
        %v1036 = vpop.f32.mrb[0].mxu0
        %v1037 = vadd.f32 %v871, %v1036
        %v1038 = vpop.f32.mrb[0].mxu0
        %1039 = vmatprep.mubr.f32.mxu0 0.0
        %1040 = vmatmul.mubr.f32.gmra.mrb[0].mxu0 %v878
        %v1041 = vpop.f32.mrb[0].mxu0
        %v1042 = vadd.f32 %v871, %v1041
        %v1043 = vpop.f32.mrb[0].mxu0
        %1044 = vmatprep.mubr.f32.mxu0 0.0
        %1045 = vmatmul.mubr.f32.gmra.mrb[0].mxu0 %v881
        %v1046 = vpop.f32.mrb[0].mxu0
        %v1047 = vadd.f32 %v871, %v1046
        %v1048 = vpop.f32.mrb[0].mxu0
        %1049 = vmatprep.mubr.f32.mxu0 0.0
        %1050 = vmatmul.mubr.f32.gmra.mrb[0].mxu0 %v884
        %v1051 = vpop.f32.mrb[0].mxu0
        %v1052 = vadd.f32 %v871, %v1051
        %v1053 = vpop.f32.mrb[0].mxu0
        %1054 = vmatprep.mubr.f32.mxu0 0.0
        %1055 = vmatmul.mubr.f32.gmra.mrb[0].mxu0 %v887
        %v1056 = vpop.f32.mrb[0].mxu0
        %v1057 = vadd.f32 %v871, %v1056
        %v1058 = vpop.f32.mrb[0].mxu0
        %1059 = vmatprep.mubr.f32.mxu0 0.0
        %1060 = vmatmul.mubr.f32.gmra.mrb[0].mxu0 %v890
        %v1061 = vpop.f32.mrb[0].mxu0
        %v1062 = vadd.f32 %v871, %v1061
        %v1063 = vpop.f32.mrb[0].mxu0
        %1064 = vmatprep.mubr.f32.mxu0 0.0
        %1065 = vmatmul.mubr.f32.gmra.mrb[0].mxu0 %v893
        %v1066 = vpop.f32.mrb[0].mxu0
        %v1067 = vadd.f32 %v871, %v1066
        %v1068 = vpop.f32.mrb[0].mxu0
        %1069 = vmatprep.mubr.f32.mxu0 0.0
        %1070 = vmatmul.mubr.f32.gmra.mrb[0].mxu0 %v896
        %v1071 = vpop.f32.mrb[0].mxu0
        %v1072 = vadd.f32 %v871, %v1071
        %v1073 = vpop.f32.mrb[0].mxu0
        %1074 = vmatprep.mubr.f32.mxu0 0.0
        %1075 = vmatmul.mubr.f32.gmra.mrb[0].mxu0 %v899
        %v1076 = vpop.f32.mrb[0].mxu0
        %v1077 = vadd.f32 %v871, %v1076
        %v1078 = vpop.f32.mrb[0].mxu0
        %1079 = vmatprep.mubr.f32.mxu0 0.0
        %1080 = vmatmul.mubr.f32.gmra.mrb[0].mxu0 %v902
        %v1081 = vpop.f32.mrb[0].mxu0
        %v1082 = vadd.f32 %v871, %v1081
        %v1083 = vpop.f32.mrb[0].mxu0
        %1084 = vmatprep.mubr.f32.mxu0 0.0
        %1085 = vmatmul.mubr.f32.gmra.mrb[0].mxu0 %v905
        %v1086 = vpop.f32.mrb[0].mxu0
        %v1087 = vadd.f32 %v871, %v1086
        %v1088 = vpop.f32.mrb[0].mxu0
        %1089 = vmatprep.mubr.f32.mxu0 0.0
        %1090 = vmatmul.mubr.f32.gmra.mrb[0].mxu0 %v908
        %v1091 = vpop.f32.mrb[0].mxu0
        %v1092 = vadd.f32 %v871, %v1091
        %v1093 = vpop.f32.mrb[0].mxu0
        %1094 = vmatprep.mubr.f32.mxu0 0.0
        %1095 = vmatmul.mubr.f32.gmra.mrb[0].mxu0 %v911
        %v1096 = vpop.f32.mrb[0].mxu0
        %v1097 = vadd.f32 %v871, %v1096
        %v1098 = vpop.f32.mrb[0].mxu0
        %1099 = vmatprep.mubr.f32.mxu0 0.0
        %1100 = vmatmul.mubr.f32.gmra.mrb[0].mxu0 %v914
        %v1101 = vpop.f32.mrb[0].mxu0
        %v1102 = vadd.f32 %v871, %v1101
        %v1103 = vpop.f32.mrb[0].mxu0
        %1104 = vmatprep.mubr.f32.mxu0 0.0
        %1105 = vmatmul.mubr.f32.gmra.mrb[0].mxu0 %v917
        %v1106 = vpop.f32.mrb[0].mxu0
        %v1107 = vadd.f32 %v871, %v1106
        %v1108 = vpop.f32.mrb[0].mxu0
        %1109 = vmatprep.mubr.f32.mxu0 0.0
        %1110 = vmatmul.mubr.f32.gmra.mrb[0].mxu0 %v920
        %v1111 = vpop.f32.mrb[0].mxu0
        %v1112 = vadd.f32 %v871, %v1111
        %v1113 = vpop.f32.mrb[0].mxu0
        %1114 = vmatprep.mubr.f32.mxu0 0.0
        %1115 = vmatmul.mubr.f32.gmra.mrb[0].mxu0 %v923
        %v1116 = vpop.f32.mrb[0].mxu0
        %v1117 = vadd.f32 %v871, %v1116
        %v1118 = vpop.f32.mrb[0].mxu0
        %1119 = vmatprep.mubr.f32.mxu0 0.0
        %1120 = vmatmul.mubr.f32.gmra.mrb[0].mxu0 %v926
        %v1121 = vpop.f32.mrb[0].mxu0
        %v1122 = vadd.f32 %v871, %v1121
        %v1123 = vpop.f32.mrb[0].mxu0
        %1124 = vmatprep.mubr.f32.mxu0 0.0
        %1125 = vmatmul.mubr.f32.gmra.mrb[0].mxu0 %v929
        %v1126 = vpop.f32.mrb[0].mxu0
        %v1127 = vadd.f32 %v871, %v1126
        %v1128 = vpop.f32.mrb[0].mxu0
        %1129 = vmatprep.mubr.f32.mxu0 0.0
        %1130 = vmatmul.mubr.f32.gmra.mrb[0].mxu0 %v932
        %v1131 = vpop.f32.mrb[0].mxu0
        %v1132 = vadd.f32 %v871, %v1131
        %v1133 = vpop.f32.mrb[0].mxu0
        %1134 = vmatprep.mubr.f32.mxu0 0.0
        %1135 = vmatmul.mubr.f32.gmra.mrb[0].mxu0 %v935
        %v1136 = vpop.f32.mrb[0].mxu0
        %v1137 = vadd.f32 %v871, %v1136
        %v1138 = vpop.f32.mrb[0].mxu0
        %1139 = vmatprep.mubr.f32.mxu0 0.0
        %1140 = vmatmul.mubr.f32.gmra.mrb[0].mxu0 %v938
        %v1141 = vpop.f32.mrb[0].mxu0
        %v1142 = vadd.f32 %v871, %v1141
        %v1143 = vpop.f32.mrb[0].mxu0
        %1144 = vmatprep.mubr.f32.mxu0 0.0
        %1145 = vmatmul.mubr.f32.gmra.mrb[0].mxu0 %v941
        %v1146 = vpop.f32.mrb[0].mxu0
        %v1147 = vadd.f32 %v871, %v1146
        %v1148 = vpop.f32.mrb[0].mxu0
        %1149 = vmatprep.mubr.f32.mxu0 0.0
        %1150 = vmatmul.mubr.f32.gmra.mrb[0].mxu0 %v944
        %v1151 = vpop.f32.mrb[0].mxu0
        %v1152 = vadd.f32 %v871, %v1151
        %v1153 = vpop.f32.mrb[0].mxu0
        %1154 = vmatprep.mubr.f32.mxu0 0.0
        %1155 = vmatmul.mubr.f32.gmra.mrb[0].mxu0 %v947
        %v1156 = vpop.f32.mrb[0].mxu0
        %v1157 = vadd.f32 %v871, %v1156
        %v1158 = vpop.f32.mrb[0].mxu0
        %1159 = vmatprep.mubr.f32.mxu0 0.0
        %1160 = vmatmul.mubr.f32.gmra.mrb[0].mxu0 %v950
        %v1161 = vpop.f32.mrb[0].mxu0
        %v1162 = vadd.f32 %v871, %v1161
        %v1163 = vpop.f32.mrb[0].mxu0
        %1164 = vmatprep.mubr.f32.mxu0 0.0
        %1165 = vmatmul.mubr.f32.gmra.mrb[0].mxu0 %v953
        %v1166 = vpop.f32.mrb[0].mxu0
        %v1167 = vadd.f32 %v871, %v1166
        %v1168 = vpop.f32.mrb[0].mxu0
        %1169 = vmatprep.mubr.f32.mxu0 0.0
        %1170 = vmatmul.mubr.f32.gmra.mrb[0].mxu0 %v956
        %v1171 = vpop.f32.mrb[0].mxu0
        %v1172 = vadd.f32 %v871, %v1171
        %v1173 = vpop.f32.mrb[0].mxu0
        %1174 = vmatprep.mubr.f32.mxu0 0.0
        %1175 = vmatmul.mubr.f32.gmra.mrb[0].mxu0 %v959
        %v1176 = vpop.f32.mrb[0].mxu0
        %v1177 = vadd.f32 %v871, %v1176
        %v1178 = vpop.f32.mrb[0].mxu0
        %1179 = vmatprep.mubr.f32.mxu0 0.0
        %1180 = vmatmul.mubr.f32.gmra.mrb[0].mxu0 %v962
        %v1181 = vpop.f32.mrb[0].mxu0
        %v1182 = vadd.f32 %v871, %v1181
        %v1183 = vpop.f32.mrb[0].mxu0
        %1184 = vmatprep.mubr.f32.mxu0 0.0
        %1185 = vmatmul.mubr.f32.gmra.mrb[0].mxu0 %v965
        %v1186 = vpop.f32.mrb[0].mxu0
        %v1187 = vadd.f32 %v871, %v1186
        %v1188 = vpop.f32.mrb[0].mxu0
        %1189 = vmatprep.mubr.f32.mxu0 0.0
        %1190 = vmatmul.mubr.f32.gmra.mrb[0].mxu0 %v968
        %v1191 = vpop.f32.mrb[0].mxu0
        %v1192 = vadd.f32 %v871, %v1191
        %v1193 = vpop.f32.mrb[0].mxu0
        %1194 = vdwg.mxu0
        %v1195 = vmax.f32 %v1037, 0.0
        %v1196 = vmax.f32 %v1042, 0.0
        %v1197 = vmax.f32 %v1047, 0.0
        %v1198 = vmax.f32 %v1052, 0.0
        %v1199 = vmax.f32 %v1057, 0.0
        %v1200 = vmax.f32 %v1062, 0.0
        %v1201 = vmax.f32 %v1067, 0.0
        %v1202 = vmax.f32 %v1072, 0.0
        %v1203 = vmax.f32 %v1077, 0.0
        %v1204 = vmax.f32 %v1082, 0.0
        %v1205 = vmax.f32 %v1087, 0.0
        %v1206 = vmax.f32 %v1092, 0.0
        %v1207 = vmax.f32 %v1097, 0.0
        %v1208 = vmax.f32 %v1102, 0.0
        %v1209 = vmax.f32 %v1107, 0.0
        %v1210 = vmax.f32 %v1112, 0.0
        %v1211 = vmax.f32 %v1117, 0.0
        %v1212 = vmax.f32 %v1122, 0.0
        %v1213 = vmax.f32 %v1127, 0.0
        %v1214 = vmax.f32 %v1132, 0.0
        %v1215 = vmax.f32 %v1137, 0.0
        %v1216 = vmax.f32 %v1142, 0.0
        %v1217 = vmax.f32 %v1147, 0.0
        %v1218 = vmax.f32 %v1152, 0.0
        %v1219 = vmax.f32 %v1157, 0.0
        %v1220 = vmax.f32 %v1162, 0.0
        %v1221 = vmax.f32 %v1167, 0.0
        %v1222 = vmax.f32 %v1172, 0.0
        %v1223 = vmax.f32 %v1177, 0.0
        %v1224 = vmax.f32 %v1182, 0.0
        %v1225 = vmax.f32 %v1187, 0.0
        %v1226 = vmax.f32 %v1192, 0.0
        %v1227 = vld [vmem:[%s461] sm:$0xff]
        %v1228 = vld [vmem:[%s461 + $0x8] sm:$0xff]
        %v1229 = vld [vmem:[%s461 + $0x10] sm:$0xff]
        %v1230 = vld [vmem:[%s461 + $0x18] sm:$0xff]
        %v1231 = vld [vmem:[%s461 + $0x20] sm:$0xff]
        %v1232 = vld [vmem:[%s461 + $0x28] sm:$0xff]
        %v1233 = vld [vmem:[%s461 + $0x30] sm:$0xff]
        %v1234 = vld [vmem:[%s461 + $0x38] sm:$0xff]
        %v1235 = vld [vmem:[%s461 + $0x40] sm:$0xff]
        %v1236 = vld [vmem:[%s461 + $0x48] sm:$0xff]
        %v1237 = vld [vmem:[%s461 + $0x50] sm:$0xff]
        %v1238 = vld [vmem:[%s461 + $0x58] sm:$0xff]
        %v1239 = vld [vmem:[%s461 + $0x60] sm:$0xff]
        %v1240 = vld [vmem:[%s461 + $0x68] sm:$0xff]
        %v1241 = vld [vmem:[%s461 + $0x70] sm:$0xff]
        %v1242 = vld [vmem:[%s461 + $0x78] sm:$0xff]
        %v1243 = vadd.f32 %v1227, 1.0
        %v1244 = vadd.f32 %v1228, 1.0
        %v1245 = vadd.f32 %v1229, 1.0
        %v1246 = vadd.f32 %v1230, 1.0
        %v1247 = vadd.f32 %v1231, 1.0
        %v1248 = vadd.f32 %v1232, 1.0
        %v1249 = vadd.f32 %v1233, 1.0
        %v1250 = vadd.f32 %v1234, 1.0
        %v1251 = vadd.f32 %v1235, 1.0
        %v1252 = vadd.f32 %v1236, 1.0
        %v1253 = vadd.f32 %v1237, 1.0
        %v1254 = vadd.f32 %v1238, 1.0
        %v1255 = vadd.f32 %v1239, 1.0
        %v1256 = vadd.f32 %v1240, 1.0
        %v1257 = vadd.f32 %v1241, 1.0
        %v1258 = vadd.f32 %v1242, 1.0
        %v1259 = vmul.f32 %v1243, 0.5
        %v1260 = vmul.f32 %v1244, 0.5
        %v1261 = vmul.f32 %v1245, 0.5
        %v1262 = vmul.f32 %v1246, 0.5
        %v1263 = vmul.f32 %v1247, 0.5
        %v1264 = vmul.f32 %v1248, 0.5
        %v1265 = vmul.f32 %v1249, 0.5
        %v1266 = vmul.f32 %v1250, 0.5
        %v1267 = vmul.f32 %v1251, 0.5
        %v1268 = vmul.f32 %v1252, 0.5
        %v1269 = vmul.f32 %v1253, 0.5
        %v1270 = vmul.f32 %v1254, 0.5
        %v1271 = vmul.f32 %v1255, 0.5
        %v1272 = vmul.f32 %v1256, 0.5
        %v1273 = vmul.f32 %v1257, 0.5
        %v1274 = vmul.f32 %v1258, 0.5
        %v1275 = vmax.f32 %v1259, 0.0
        %v1276 = vmax.f32 %v1260, 0.0
        %v1277 = vmax.f32 %v1261, 0.0
        %v1278 = vmax.f32 %v1262, 0.0
        %v1279 = vmax.f32 %v1263, 0.0
        %v1280 = vmax.f32 %v1264, 0.0
        %v1281 = vmax.f32 %v1265, 0.0
        %v1282 = vmax.f32 %v1266, 0.0
        %v1283 = vmax.f32 %v1267, 0.0
        %v1284 = vmax.f32 %v1268, 0.0
        %v1285 = vmax.f32 %v1269, 0.0
        %v1286 = vmax.f32 %v1270, 0.0
        %v1287 = vmax.f32 %v1271, 0.0
        %v1288 = vmax.f32 %v1272, 0.0
        %v1289 = vmax.f32 %v1273, 0.0
        %v1290 = vmax.f32 %v1274, 0.0
        %v1291 = vmin.f32 %v1275, 0.999999
        %v1292 = vmin.f32 %v1276, 0.999999
        %v1293 = vmin.f32 %v1277, 0.999999
        %v1294 = vmin.f32 %v1278, 0.999999
        %v1295 = vmin.f32 %v1279, 0.999999
        %v1296 = vmin.f32 %v1280, 0.999999
        %v1297 = vmin.f32 %v1281, 0.999999
        %v1298 = vmin.f32 %v1282, 0.999999
        %v1299 = vmin.f32 %v1283, 0.999999
        %v1300 = vmin.f32 %v1284, 0.999999
        %v1301 = vmin.f32 %v1285, 0.999999
        %v1302 = vmin.f32 %v1286, 0.999999
        %v1303 = vmin.f32 %v1287, 0.999999
        %v1304 = vmin.f32 %v1288, 0.999999
        %v1305 = vmin.f32 %v1289, 0.999999
        %v1306 = vmin.f32 %v1290, 0.999999
        %v1307 = vmul.f32 %v1291, 16.0
        %v1308 = vmul.f32 %v1292, 16.0
        %v1309 = vmul.f32 %v1293, 16.0
        %v1310 = vmul.f32 %v1294, 16.0
        %v1311 = vmul.f32 %v1295, 16.0
        %v1312 = vmul.f32 %v1296, 16.0
        %v1313 = vmul.f32 %v1297, 16.0
        %v1314 = vmul.f32 %v1298, 16.0
        %v1315 = vmul.f32 %v1299, 16.0
        %v1316 = vmul.f32 %v1300, 16.0
        %v1317 = vmul.f32 %v1301, 16.0
        %v1318 = vmul.f32 %v1302, 16.0
        %v1319 = vmul.f32 %v1303, 16.0
        %v1320 = vmul.f32 %v1304, 16.0
        %v1321 = vmul.f32 %v1305, 16.0
        %v1322 = vmul.f32 %v1306, 16.0
        %v1323 = vcvt.f32.s32.to.zero.pseudo %v1307
        %v1324 = vcvt.f32.s32.to.zero.pseudo %v1308
        %v1325 = vcvt.f32.s32.to.zero.pseudo %v1309
        %v1326 = vcvt.f32.s32.to.zero.pseudo %v1310
        %v1327 = vcvt.f32.s32.to.zero.pseudo %v1311
        %v1328 = vcvt.f32.s32.to.zero.pseudo %v1312
        %v1329 = vcvt.f32.s32.to.zero.pseudo %v1313
        %v1330 = vcvt.f32.s32.to.zero.pseudo %v1314
        %v1331 = vcvt.f32.s32.to.zero.pseudo %v1315
        %v1332 = vcvt.f32.s32.to.zero.pseudo %v1316
        %v1333 = vcvt.f32.s32.to.zero.pseudo %v1317
        %v1334 = vcvt.f32.s32.to.zero.pseudo %v1318
        %v1335 = vcvt.f32.s32.to.zero.pseudo %v1319
        %v1336 = vcvt.f32.s32.to.zero.pseudo %v1320
        %v1337 = vcvt.f32.s32.to.zero.pseudo %v1321
        %v1338 = vcvt.f32.s32.to.zero.pseudo %v1322
        %v1339 = vmul.u32 %v1323, 16
        %v1340 = vmul.u32 %v1324, 16
        %v1341 = vmul.u32 %v1325, 16
        %v1342 = vmul.u32 %v1326, 16
        %v1343 = vmul.u32 %v1327, 16
        %v1344 = vmul.u32 %v1328, 16
        %v1345 = vmul.u32 %v1329, 16
        %v1346 = vmul.u32 %v1330, 16
        %v1347 = vmul.u32 %v1331, 16
        %v1348 = vmul.u32 %v1332, 16
        %v1349 = vmul.u32 %v1333, 16
        %v1350 = vmul.u32 %v1334, 16
        %v1351 = vmul.u32 %v1335, 16
        %v1352 = vmul.u32 %v1336, 16
        %v1353 = vmul.u32 %v1337, 16
        %v1354 = vmul.u32 %v1338, 16
        %1355 = vrot.lane.b32.xlu0 %v1323, 1
        %v1356 = vpop.permute.xlu0 %1355
        %1357 = vrot.lane.b32.xlu0 %v1324, 1
        %v1358 = vpop.permute.xlu0 %1357
        %1359 = vrot.lane.b32.xlu0 %v1325, 1
        %v1360 = vpop.permute.xlu0 %1359
        %1361 = vrot.lane.b32.xlu0 %v1326, 1
        %v1362 = vpop.permute.xlu0 %1361
        %1363 = vrot.lane.b32.xlu0 %v1327, 1
        %v1364 = vpop.permute.xlu0 %1363
        %1365 = vrot.lane.b32.xlu0 %v1328, 1
        %v1366 = vpop.permute.xlu0 %1365
        %1367 = vrot.lane.b32.xlu0 %v1329, 1
        %v1368 = vpop.permute.xlu0 %1367
        %1369 = vrot.lane.b32.xlu0 %v1330, 1
        %v1370 = vpop.permute.xlu0 %1369
        %1371 = vrot.lane.b32.xlu0 %v1331, 1
        %v1372 = vpop.permute.xlu0 %1371
        %1373 = vrot.lane.b32.xlu0 %v1332, 1
        %v1374 = vpop.permute.xlu0 %1373
        %1375 = vrot.lane.b32.xlu0 %v1333, 1
        %v1376 = vpop.permute.xlu0 %1375
        %1377 = vrot.lane.b32.xlu0 %v1334, 1
        %v1378 = vpop.permute.xlu0 %1377
        %1379 = vrot.lane.b32.xlu0 %v1335, 1
        %v1380 = vpop.permute.xlu0 %1379
        %1381 = vrot.lane.b32.xlu0 %v1336, 1
        %v1382 = vpop.permute.xlu0 %1381
        %1383 = vrot.lane.b32.xlu0 %v1337, 1
        %v1384 = vpop.permute.xlu0 %1383
        %1385 = vrot.lane.b32.xlu0 %v1338, 1
        %v1386 = vpop.permute.xlu0 %1385
        %v1387 = vadd.s32 %v1339, %v1356
        %v1388 = vadd.s32 %v1340, %v1358
        %v1389 = vadd.s32 %v1341, %v1360
        %v1390 = vadd.s32 %v1342, %v1362
        %v1391 = vadd.s32 %v1343, %v1364
        %v1392 = vadd.s32 %v1344, %v1366
        %v1393 = vadd.s32 %v1345, %v1368
        %v1394 = vadd.s32 %v1346, %v1370
        %v1395 = vadd.s32 %v1347, %v1372
        %v1396 = vadd.s32 %v1348, %v1374
        %v1397 = vadd.s32 %v1349, %v1376
        %v1398 = vadd.s32 %v1350, %v1378
        %v1399 = vadd.s32 %v1351, %v1380
        %v1400 = vadd.s32 %v1352, %v1382
        %v1401 = vadd.s32 %v1353, %v1384
        %v1402 = vadd.s32 %v1354, %v1386
        %v1403 = vlaneseq
        %v1404 = vand.u32 %v1403, 127
        %v1405 = vadd.s32 %v1404, 128
        %1406 = vset.pattern.permute.xlu0 1
        %1407 = vperm.xlu0 %1406, %v1387
        %v1408 = vpop.permute.xlu0 %1407
        %1409 = vset.pattern.permute.xlu0 1
        %1410 = vperm.xlu0 %1409, %v1388
        %v1411 = vpop.permute.xlu0 %1410
        %1412 = vset.pattern.permute.xlu0 1
        %1413 = vperm.xlu0 %1412, %v1389
        %v1414 = vpop.permute.xlu0 %1413
        %1415 = vset.pattern.permute.xlu0 1
        %1416 = vperm.xlu0 %1415, %v1390
        %v1417 = vpop.permute.xlu0 %1416
        %1418 = vset.pattern.permute.xlu0 1
        %1419 = vperm.xlu0 %1418, %v1391
        %v1420 = vpop.permute.xlu0 %1419
        %1421 = vset.pattern.permute.xlu0 1
        %1422 = vperm.xlu0 %1421, %v1392
        %v1423 = vpop.permute.xlu0 %1422
        %1424 = vset.pattern.permute.xlu0 1
        %1425 = vperm.xlu0 %1424, %v1393
        %v1426 = vpop.permute.xlu0 %1425
        %1427 = vset.pattern.permute.xlu0 1
        %1428 = vperm.xlu0 %1427, %v1394
        %v1429 = vpop.permute.xlu0 %1428
        %1430 = vset.pattern.permute.xlu0 1
        %1431 = vperm.xlu0 %1430, %v1395
        %v1432 = vpop.permute.xlu0 %1431
        %1433 = vset.pattern.permute.xlu0 1
        %1434 = vperm.xlu0 %1433, %v1396
        %v1435 = vpop.permute.xlu0 %1434
        %1436 = vset.pattern.permute.xlu0 1
        %1437 = vperm.xlu0 %1436, %v1397
        %v1438 = vpop.permute.xlu0 %1437
        %1439 = vset.pattern.permute.xlu0 1
        %1440 = vperm.xlu0 %1439, %v1398
        %v1441 = vpop.permute.xlu0 %1440
        %1442 = vset.pattern.permute.xlu0 1
        %1443 = vperm.xlu0 %1442, %v1399
        %v1444 = vpop.permute.xlu0 %1443
        %1445 = vset.pattern.permute.xlu0 1
        %1446 = vperm.xlu0 %1445, %v1400
        %v1447 = vpop.permute.xlu0 %1446
        %1448 = vset.pattern.permute.xlu0 1
        %1449 = vperm.xlu0 %1448, %v1401
        %v1450 = vpop.permute.xlu0 %1449
        %1451 = vset.pattern.permute.xlu0 1
        %1452 = vperm.xlu0 %1451, %v1402
        %v1453 = vpop.permute.xlu0 %1452
        %vm1454 = vcmp.eq.s32.totalorder %v1404, %v1408
        %vm1455 = vcmp.eq.s32.totalorder %v1405, %v1408
        %vm1456 = vcmp.eq.s32.totalorder %v1404, %v1411
        %vm1457 = vcmp.eq.s32.totalorder %v1405, %v1411
        %vm1458 = vcmp.eq.s32.totalorder %v1404, %v1414
        %vm1459 = vcmp.eq.s32.totalorder %v1405, %v1414
        %vm1460 = vcmp.eq.s32.totalorder %v1404, %v1417
        %vm1461 = vcmp.eq.s32.totalorder %v1405, %v1417
        %vm1462 = vcmp.eq.s32.totalorder %v1404, %v1420
        %vm1463 = vcmp.eq.s32.totalorder %v1405, %v1420
        %vm1464 = vcmp.eq.s32.totalorder %v1404, %v1423
        %vm1465 = vcmp.eq.s32.totalorder %v1405, %v1423
        %vm1466 = vcmp.eq.s32.totalorder %v1404, %v1426
        %vm1467 = vcmp.eq.s32.totalorder %v1405, %v1426
        %vm1468 = vcmp.eq.s32.totalorder %v1404, %v1429
        %vm1469 = vcmp.eq.s32.totalorder %v1405, %v1429
        %vm1470 = vcmp.eq.s32.totalorder %v1404, %v1432
        %vm1471 = vcmp.eq.s32.totalorder %v1405, %v1432
        %vm1472 = vcmp.eq.s32.totalorder %v1404, %v1435
        %vm1473 = vcmp.eq.s32.totalorder %v1405, %v1435
        %vm1474 = vcmp.eq.s32.totalorder %v1404, %v1438
        %vm1475 = vcmp.eq.s32.totalorder %v1405, %v1438
        %vm1476 = vcmp.eq.s32.totalorder %v1404, %v1441
        %vm1477 = vcmp.eq.s32.totalorder %v1405, %v1441
        %vm1478 = vcmp.eq.s32.totalorder %v1404, %v1444
        %vm1479 = vcmp.eq.s32.totalorder %v1405, %v1444
        %vm1480 = vcmp.eq.s32.totalorder %v1404, %v1447
        %vm1481 = vcmp.eq.s32.totalorder %v1405, %v1447
        %vm1482 = vcmp.eq.s32.totalorder %v1404, %v1450
        %vm1483 = vcmp.eq.s32.totalorder %v1405, %v1450
        %vm1484 = vcmp.eq.s32.totalorder %v1404, %v1453
        %vm1485 = vcmp.eq.s32.totalorder %v1405, %v1453
        %v1486 = vsel %vm1454, 1, 0
        %v1487 = vsel %vm1455, 1, 0
        %v1488 = vsel %vm1456, 1, 0
        %v1489 = vsel %vm1457, 1, 0
        %v1490 = vsel %vm1458, 1, 0
        %v1491 = vsel %vm1459, 1, 0
        %v1492 = vsel %vm1460, 1, 0
        %v1493 = vsel %vm1461, 1, 0
        %v1494 = vsel %vm1462, 1, 0
        %v1495 = vsel %vm1463, 1, 0
        %v1496 = vsel %vm1464, 1, 0
        %v1497 = vsel %vm1465, 1, 0
        %v1498 = vsel %vm1466, 1, 0
        %v1499 = vsel %vm1467, 1, 0
        %v1500 = vsel %vm1468, 1, 0
        %v1501 = vsel %vm1469, 1, 0
        %v1502 = vsel %vm1470, 1, 0
        %v1503 = vsel %vm1471, 1, 0
        %v1504 = vsel %vm1472, 1, 0
        %v1505 = vsel %vm1473, 1, 0
        %v1506 = vsel %vm1474, 1, 0
        %v1507 = vsel %vm1475, 1, 0
        %v1508 = vsel %vm1476, 1, 0
        %v1509 = vsel %vm1477, 1, 0
        %v1510 = vsel %vm1478, 1, 0
        %v1511 = vsel %vm1479, 1, 0
        %v1512 = vsel %vm1480, 1, 0
        %v1513 = vsel %vm1481, 1, 0
        %v1514 = vsel %vm1482, 1, 0
        %v1515 = vsel %vm1483, 1, 0
        %v1516 = vsel %vm1484, 1, 0
        %v1517 = vsel %vm1485, 1, 0
        %v1518 = vcvt.s32.f32 %v1486
        %v1519 = vcvt.s32.f32 %v1487
        %v1520 = vcvt.s32.f32 %v1488
        %v1521 = vcvt.s32.f32 %v1489
        %v1522 = vcvt.s32.f32 %v1490
        %v1523 = vcvt.s32.f32 %v1491
        %v1524 = vcvt.s32.f32 %v1492
        %v1525 = vcvt.s32.f32 %v1493
        %v1526 = vcvt.s32.f32 %v1494
        %v1527 = vcvt.s32.f32 %v1495
        %v1528 = vcvt.s32.f32 %v1496
        %v1529 = vcvt.s32.f32 %v1497
        %v1530 = vcvt.s32.f32 %v1498
        %v1531 = vcvt.s32.f32 %v1499
        %v1532 = vcvt.s32.f32 %v1500
        %v1533 = vcvt.s32.f32 %v1501
        %v1534 = vcvt.s32.f32 %v1502
        %v1535 = vcvt.s32.f32 %v1503
        %v1536 = vcvt.s32.f32 %v1504
        %v1537 = vcvt.s32.f32 %v1505
        %v1538 = vcvt.s32.f32 %v1506
        %v1539 = vcvt.s32.f32 %v1507
        %v1540 = vcvt.s32.f32 %v1508
        %v1541 = vcvt.s32.f32 %v1509
        %v1542 = vcvt.s32.f32 %v1510
        %v1543 = vcvt.s32.f32 %v1511
        %v1544 = vcvt.s32.f32 %v1512
        %v1545 = vcvt.s32.f32 %v1513
        %v1546 = vcvt.s32.f32 %v1514
        %v1547 = vcvt.s32.f32 %v1515
        %v1548 = vcvt.s32.f32 %v1516
        %v1549 = vcvt.s32.f32 %v1517
        %1551 = vset.pattern.permute.xlu0 0
        %1552 = vperm.xlu0 %1551, %v1195
        %v1553 = vpop.permute.xlu0 %1552
        %1556 = vset.pattern.permute.xlu0 0
        %1557 = vperm.xlu0 %1556, %v1196
        %v1558 = vpop.permute.xlu0 %1557
        %1561 = vset.pattern.permute.xlu0 0
        %1562 = vperm.xlu0 %1561, %v1197
        %v1563 = vpop.permute.xlu0 %1562
        %1566 = vset.pattern.permute.xlu0 0
        %1567 = vperm.xlu0 %1566, %v1198
        %v1568 = vpop.permute.xlu0 %1567
        %1571 = vset.pattern.permute.xlu0 0
        %1572 = vperm.xlu0 %1571, %v1199
        %v1573 = vpop.permute.xlu0 %1572
        %1576 = vset.pattern.permute.xlu0 0
        %1577 = vperm.xlu0 %1576, %v1200
        %v1578 = vpop.permute.xlu0 %1577
        %1581 = vset.pattern.permute.xlu0 0
        %1582 = vperm.xlu0 %1581, %v1201
        %v1583 = vpop.permute.xlu0 %1582
        %1586 = vset.pattern.permute.xlu0 0
        %1587 = vperm.xlu0 %1586, %v1202
        %v1588 = vpop.permute.xlu0 %1587
        %1591 = vset.pattern.permute.xlu0 0
        %1592 = vperm.xlu0 %1591, %v1203
        %v1593 = vpop.permute.xlu0 %1592
        %1596 = vset.pattern.permute.xlu0 0
        %1597 = vperm.xlu0 %1596, %v1204
        %v1598 = vpop.permute.xlu0 %1597
        %1601 = vset.pattern.permute.xlu0 0
        %1602 = vperm.xlu0 %1601, %v1205
        %v1603 = vpop.permute.xlu0 %1602
        %1606 = vset.pattern.permute.xlu0 0
        %1607 = vperm.xlu0 %1606, %v1206
        %v1608 = vpop.permute.xlu0 %1607
        %1611 = vset.pattern.permute.xlu0 0
        %1612 = vperm.xlu0 %1611, %v1207
        %v1613 = vpop.permute.xlu0 %1612
        %1616 = vset.pattern.permute.xlu0 0
        %1617 = vperm.xlu0 %1616, %v1208
        %v1618 = vpop.permute.xlu0 %1617
        %1621 = vset.pattern.permute.xlu0 0
        %1622 = vperm.xlu0 %1621, %v1209
        %v1623 = vpop.permute.xlu0 %1622
        %1626 = vset.pattern.permute.xlu0 0
        %1627 = vperm.xlu0 %1626, %v1210
        %v1628 = vpop.permute.xlu0 %1627
        %v1630 = vmul.f32 %v1518, %v1553
        %v1631 = vmul.f32 %v1519, %v1553
        %v1632 = vmul.f32 %v1520, %v1558
        %v1633 = vmul.f32 %v1521, %v1558
        %v1634 = vmul.f32 %v1522, %v1563
        %v1635 = vmul.f32 %v1523, %v1563
        %v1636 = vmul.f32 %v1524, %v1568
        %v1637 = vmul.f32 %v1525, %v1568
        %v1638 = vmul.f32 %v1526, %v1573
        %v1639 = vmul.f32 %v1527, %v1573
        %v1640 = vmul.f32 %v1528, %v1578
        %v1641 = vmul.f32 %v1529, %v1578
        %v1642 = vmul.f32 %v1530, %v1583
        %v1643 = vmul.f32 %v1531, %v1583
        %v1644 = vmul.f32 %v1532, %v1588
        %v1645 = vmul.f32 %v1533, %v1588
        %v1646 = vmul.f32 %v1534, %v1593
        %v1647 = vmul.f32 %v1535, %v1593
        %v1648 = vmul.f32 %v1536, %v1598
        %v1649 = vmul.f32 %v1537, %v1598
        %v1650 = vmul.f32 %v1538, %v1603
        %v1651 = vmul.f32 %v1539, %v1603
        %v1652 = vmul.f32 %v1540, %v1608
        %v1653 = vmul.f32 %v1541, %v1608
        %v1654 = vmul.f32 %v1542, %v1613
        %v1655 = vmul.f32 %v1543, %v1613
        %v1656 = vmul.f32 %v1544, %v1618
        %v1657 = vmul.f32 %v1545, %v1618
        %v1658 = vmul.f32 %v1546, %v1623
        %v1659 = vmul.f32 %v1547, %v1623
        %v1660 = vmul.f32 %v1548, %v1628
        %v1661 = vmul.f32 %v1549, %v1628
        %v1662 = vmax.f32 %v1630, %v1634
        %v1663 = vmax.f32 %v1632, %v1636
        %v1664 = vmax.f32 %v1662, %v1638
        %v1665 = vmax.f32 %v1663, %v1640
        %v1666 = vmax.f32 %v1664, %v1642
        %v1667 = vmax.f32 %v1665, %v1644
        %v1668 = vmax.f32 %v1666, %v1646
        %v1669 = vmax.f32 %v1667, %v1648
        %v1670 = vmax.f32 %v1668, %v1650
        %v1671 = vmax.f32 %v1669, %v1652
        %v1672 = vmax.f32 %v1670, %v1654
        %v1673 = vmax.f32 %v1671, %v1656
        %v1674 = vmax.f32 %v1672, %v1658
        %v1675 = vmax.f32 %v1673, %v1660
        %v1676 = vmax.f32 %v1674, %v1675
        %v1677 = vrot.slane %v1676, 4
        %v1678 = vmax.f32 %v1676, %v1677
        %v1679 = vrot.slane %v1678, 2
        %v1680 = vmax.f32 %v1678, %v1679
        %v1681 = vrot.slane %v1680, 1
        %v1682 = vmax.f32 %v1680, %v1681
        %v1683 = vmax.f32 %v1631, %v1635
        %v1684 = vmax.f32 %v1633, %v1637
        %v1685 = vmax.f32 %v1683, %v1639
        %v1686 = vmax.f32 %v1684, %v1641
        %v1687 = vmax.f32 %v1685, %v1643
        %v1688 = vmax.f32 %v1686, %v1645
        %v1689 = vmax.f32 %v1687, %v1647
        %v1690 = vmax.f32 %v1688, %v1649
        %v1691 = vmax.f32 %v1689, %v1651
        %v1692 = vmax.f32 %v1690, %v1653
        %v1693 = vmax.f32 %v1691, %v1655
        %v1694 = vmax.f32 %v1692, %v1657
        %v1695 = vmax.f32 %v1693, %v1659
        %v1696 = vmax.f32 %v1694, %v1661
        %v1697 = vmax.f32 %v1695, %v1696
        %v1698 = vrot.slane %v1697, 4
        %v1699 = vmax.f32 %v1697, %v1698
        %v1700 = vrot.slane %v1699, 2
        %v1701 = vmax.f32 %v1699, %v1700
        %v1702 = vrot.slane %v1701, 1
        %v1703 = vmax.f32 %v1701, %v1702
        %1704 = vset.pattern.permute.xlu0 1
        %1705 = vperm.xlu0 %1704, %v1195
        %v1706 = vpop.permute.xlu0 %1705
        %1708 = vset.pattern.permute.xlu0 1
        %1709 = vperm.xlu0 %1708, %v1196
        %v1710 = vpop.permute.xlu0 %1709
        %1712 = vset.pattern.permute.xlu0 1
        %1713 = vperm.xlu0 %1712, %v1197
        %v1714 = vpop.permute.xlu0 %1713
        %1716 = vset.pattern.permute.xlu0 1
        %1717 = vperm.xlu0 %1716, %v1198
        %v1718 = vpop.permute.xlu0 %1717
        %1720 = vset.pattern.permute.xlu0 1
        %1721 = vperm.xlu0 %1720, %v1199
        %v1722 = vpop.permute.xlu0 %1721
        %1724 = vset.pattern.permute.xlu0 1
        %1725 = vperm.xlu0 %1724, %v1200
        %v1726 = vpop.permute.xlu0 %1725
        %1728 = vset.pattern.permute.xlu0 1
        %1729 = vperm.xlu0 %1728, %v1201
        %v1730 = vpop.permute.xlu0 %1729
        %1732 = vset.pattern.permute.xlu0 1
        %1733 = vperm.xlu0 %1732, %v1202
        %v1734 = vpop.permute.xlu0 %1733
        %1736 = vset.pattern.permute.xlu0 1
        %1737 = vperm.xlu0 %1736, %v1203
        %v1738 = vpop.permute.xlu0 %1737
        %1740 = vset.pattern.permute.xlu0 1
        %1741 = vperm.xlu0 %1740, %v1204
        %v1742 = vpop.permute.xlu0 %1741
        %1744 = vset.pattern.permute.xlu0 1
        %1745 = vperm.xlu0 %1744, %v1205
        %v1746 = vpop.permute.xlu0 %1745
        %1748 = vset.pattern.permute.xlu0 1
        %1749 = vperm.xlu0 %1748, %v1206
        %v1750 = vpop.permute.xlu0 %1749
        %1752 = vset.pattern.permute.xlu0 1
        %1753 = vperm.xlu0 %1752, %v1207
        %v1754 = vpop.permute.xlu0 %1753
        %1756 = vset.pattern.permute.xlu0 1
        %1757 = vperm.xlu0 %1756, %v1208
        %v1758 = vpop.permute.xlu0 %1757
        %1760 = vset.pattern.permute.xlu0 1
        %1761 = vperm.xlu0 %1760, %v1209
        %v1762 = vpop.permute.xlu0 %1761
        %1764 = vset.pattern.permute.xlu0 1
        %1765 = vperm.xlu0 %1764, %v1210
        %v1766 = vpop.permute.xlu0 %1765
        %v1768 = vmul.f32 %v1518, %v1706
        %v1769 = vmul.f32 %v1519, %v1706
        %v1770 = vmul.f32 %v1520, %v1710
        %v1771 = vmul.f32 %v1521, %v1710
        %v1772 = vmul.f32 %v1522, %v1714
        %v1773 = vmul.f32 %v1523, %v1714
        %v1774 = vmul.f32 %v1524, %v1718
        %v1775 = vmul.f32 %v1525, %v1718
        %v1776 = vmul.f32 %v1526, %v1722
        %v1777 = vmul.f32 %v1527, %v1722
        %v1778 = vmul.f32 %v1528, %v1726
        %v1779 = vmul.f32 %v1529, %v1726
        %v1780 = vmul.f32 %v1530, %v1730
        %v1781 = vmul.f32 %v1531, %v1730
        %v1782 = vmul.f32 %v1532, %v1734
        %v1783 = vmul.f32 %v1533, %v1734
        %v1784 = vmul.f32 %v1534, %v1738
        %v1785 = vmul.f32 %v1535, %v1738
        %v1786 = vmul.f32 %v1536, %v1742
        %v1787 = vmul.f32 %v1537, %v1742
        %v1788 = vmul.f32 %v1538, %v1746
        %v1789 = vmul.f32 %v1539, %v1746
        %v1790 = vmul.f32 %v1540, %v1750
        %v1791 = vmul.f32 %v1541, %v1750
        %v1792 = vmul.f32 %v1542, %v1754
        %v1793 = vmul.f32 %v1543, %v1754
        %v1794 = vmul.f32 %v1544, %v1758
        %v1795 = vmul.f32 %v1545, %v1758
        %v1796 = vmul.f32 %v1546, %v1762
        %v1797 = vmul.f32 %v1547, %v1762
        %v1798 = vmul.f32 %v1548, %v1766
        %v1799 = vmul.f32 %v1549, %v1766
        %v1800 = vmax.f32 %v1768, %v1772
        %v1801 = vmax.f32 %v1770, %v1774
        %v1802 = vmax.f32 %v1800, %v1776
        %v1803 = vmax.f32 %v1801, %v1778
        %v1804 = vmax.f32 %v1802, %v1780
        %v1805 = vmax.f32 %v1803, %v1782
        %v1806 = vmax.f32 %v1804, %v1784
        %v1807 = vmax.f32 %v1805, %v1786
        %v1808 = vmax.f32 %v1806, %v1788
        %v1809 = vmax.f32 %v1807, %v1790
        %v1810 = vmax.f32 %v1808, %v1792
        %v1811 = vmax.f32 %v1809, %v1794
        %v1812 = vmax.f32 %v1810, %v1796
        %v1813 = vmax.f32 %v1811, %v1798
        %v1814 = vmax.f32 %v1812, %v1813
        %v1815 = vrot.slane %v1814, 4
        %v1816 = vmax.f32 %v1814, %v1815
        %v1817 = vrot.slane %v1816, 2
        %v1818 = vmax.f32 %v1816, %v1817
        %v1819 = vrot.slane %v1818, 1
        %v1820 = vmax.f32 %v1818, %v1819
        %v1821 = vmax.f32 %v1769, %v1773
        %v1822 = vmax.f32 %v1771, %v1775
        %v1823 = vmax.f32 %v1821, %v1777
        %v1824 = vmax.f32 %v1822, %v1779
        %v1825 = vmax.f32 %v1823, %v1781
        %v1826 = vmax.f32 %v1824, %v1783
        %v1827 = vmax.f32 %v1825, %v1785
        %v1828 = vmax.f32 %v1826, %v1787
        %v1829 = vmax.f32 %v1827, %v1789
        %v1830 = vmax.f32 %v1828, %v1791
        %v1831 = vmax.f32 %v1829, %v1793
        %v1832 = vmax.f32 %v1830, %v1795
        %v1833 = vmax.f32 %v1831, %v1797
        %v1834 = vmax.f32 %v1832, %v1799
        %v1835 = vmax.f32 %v1833, %v1834
        %v1836 = vrot.slane %v1835, 4
        %v1837 = vmax.f32 %v1835, %v1836
        %v1838 = vrot.slane %v1837, 2
        %v1839 = vmax.f32 %v1837, %v1838
        %v1840 = vrot.slane %v1839, 1
        %v1841 = vmax.f32 %v1839, %v1840
        %1842 = vset.pattern.permute.xlu0 2
        %1843 = vperm.xlu0 %1842, %v1195
        %v1844 = vpop.permute.xlu0 %1843
        %1846 = vset.pattern.permute.xlu0 2
        %1847 = vperm.xlu0 %1846, %v1196
        %v1848 = vpop.permute.xlu0 %1847
        %1850 = vset.pattern.permute.xlu0 2
        %1851 = vperm.xlu0 %1850, %v1197
        %v1852 = vpop.permute.xlu0 %1851
        %1854 = vset.pattern.permute.xlu0 2
        %1855 = vperm.xlu0 %1854, %v1198
        %v1856 = vpop.permute.xlu0 %1855
        %1858 = vset.pattern.permute.xlu0 2
        %1859 = vperm.xlu0 %1858, %v1199
        %v1860 = vpop.permute.xlu0 %1859
        %1862 = vset.pattern.permute.xlu0 2
        %1863 = vperm.xlu0 %1862, %v1200
        %v1864 = vpop.permute.xlu0 %1863
        %1866 = vset.pattern.permute.xlu0 2
        %1867 = vperm.xlu0 %1866, %v1201
        %v1868 = vpop.permute.xlu0 %1867
        %1870 = vset.pattern.permute.xlu0 2
        %1871 = vperm.xlu0 %1870, %v1202
        %v1872 = vpop.permute.xlu0 %1871
        %1874 = vset.pattern.permute.xlu0 2
        %1875 = vperm.xlu0 %1874, %v1203
        %v1876 = vpop.permute.xlu0 %1875
        %1878 = vset.pattern.permute.xlu0 2
        %1879 = vperm.xlu0 %1878, %v1204
        %v1880 = vpop.permute.xlu0 %1879
        %1882 = vset.pattern.permute.xlu0 2
        %1883 = vperm.xlu0 %1882, %v1205
        %v1884 = vpop.permute.xlu0 %1883
        %1886 = vset.pattern.permute.xlu0 2
        %1887 = vperm.xlu0 %1886, %v1206
        %v1888 = vpop.permute.xlu0 %1887
        %1890 = vset.pattern.permute.xlu0 2
        %1891 = vperm.xlu0 %1890, %v1207
        %v1892 = vpop.permute.xlu0 %1891
        %1894 = vset.pattern.permute.xlu0 2
        %1895 = vperm.xlu0 %1894, %v1208
        %v1896 = vpop.permute.xlu0 %1895
        %1898 = vset.pattern.permute.xlu0 2
        %1899 = vperm.xlu0 %1898, %v1209
        %v1900 = vpop.permute.xlu0 %1899
        %1902 = vset.pattern.permute.xlu0 2
        %1903 = vperm.xlu0 %1902, %v1210
        %v1904 = vpop.permute.xlu0 %1903
        %v1906 = vmul.f32 %v1518, %v1844
        %v1907 = vmul.f32 %v1519, %v1844
        %v1908 = vmul.f32 %v1520, %v1848
        %v1909 = vmul.f32 %v1521, %v1848
        %v1910 = vmul.f32 %v1522, %v1852
        %v1911 = vmul.f32 %v1523, %v1852
        %v1912 = vmul.f32 %v1524, %v1856
        %v1913 = vmul.f32 %v1525, %v1856
        %v1914 = vmul.f32 %v1526, %v1860
        %v1915 = vmul.f32 %v1527, %v1860
        %v1916 = vmul.f32 %v1528, %v1864
        %v1917 = vmul.f32 %v1529, %v1864
        %v1918 = vmul.f32 %v1530, %v1868
        %v1919 = vmul.f32 %v1531, %v1868
        %v1920 = vmul.f32 %v1532, %v1872
        %v1921 = vmul.f32 %v1533, %v1872
        %v1922 = vmul.f32 %v1534, %v1876
        %v1923 = vmul.f32 %v1535, %v1876
        %v1924 = vmul.f32 %v1536, %v1880
        %v1925 = vmul.f32 %v1537, %v1880
        %v1926 = vmul.f32 %v1538, %v1884
        %v1927 = vmul.f32 %v1539, %v1884
        %v1928 = vmul.f32 %v1540, %v1888
        %v1929 = vmul.f32 %v1541, %v1888
        %v1930 = vmul.f32 %v1542, %v1892
        %v1931 = vmul.f32 %v1543, %v1892
        %v1932 = vmul.f32 %v1544, %v1896
        %v1933 = vmul.f32 %v1545, %v1896
        %v1934 = vmul.f32 %v1546, %v1900
        %v1935 = vmul.f32 %v1547, %v1900
        %v1936 = vmul.f32 %v1548, %v1904
        %v1937 = vmul.f32 %v1549, %v1904
        %v1938 = vmax.f32 %v1906, %v1910
        %v1939 = vmax.f32 %v1908, %v1912
        %v1940 = vmax.f32 %v1938, %v1914
        %v1941 = vmax.f32 %v1939, %v1916
        %v1942 = vmax.f32 %v1940, %v1918
        %v1943 = vmax.f32 %v1941, %v1920
        %v1944 = vmax.f32 %v1942, %v1922
        %v1945 = vmax.f32 %v1943, %v1924
        %v1946 = vmax.f32 %v1944, %v1926
        %v1947 = vmax.f32 %v1945, %v1928
        %v1948 = vmax.f32 %v1946, %v1930
        %v1949 = vmax.f32 %v1947, %v1932
        %v1950 = vmax.f32 %v1948, %v1934
        %v1951 = vmax.f32 %v1949, %v1936
        %v1952 = vmax.f32 %v1950, %v1951
        %v1953 = vrot.slane %v1952, 4
        %v1954 = vmax.f32 %v1952, %v1953
        %v1955 = vrot.slane %v1954, 2
        %v1956 = vmax.f32 %v1954, %v1955
        %v1957 = vrot.slane %v1956, 1
        %v1958 = vmax.f32 %v1956, %v1957
        %v1959 = vmax.f32 %v1907, %v1911
        %v1960 = vmax.f32 %v1909, %v1913
        %v1961 = vmax.f32 %v1959, %v1915
        %v1962 = vmax.f32 %v1960, %v1917
        %v1963 = vmax.f32 %v1961, %v1919
        %v1964 = vmax.f32 %v1962, %v1921
        %v1965 = vmax.f32 %v1963, %v1923
        %v1966 = vmax.f32 %v1964, %v1925
        %v1967 = vmax.f32 %v1965, %v1927
        %v1968 = vmax.f32 %v1966, %v1929
        %v1969 = vmax.f32 %v1967, %v1931
        %v1970 = vmax.f32 %v1968, %v1933
        %v1971 = vmax.f32 %v1969, %v1935
        %v1972 = vmax.f32 %v1970, %v1937
        %v1973 = vmax.f32 %v1971, %v1972
        %v1974 = vrot.slane %v1973, 4
        %v1975 = vmax.f32 %v1973, %v1974
        %v1976 = vrot.slane %v1975, 2
        %v1977 = vmax.f32 %v1975, %v1976
        %v1978 = vrot.slane %v1977, 1
        %v1979 = vmax.f32 %v1977, %v1978
        %vm1980 = vcmask 1040384
        %v1981 = vsel %vm1980, %v1682, %v1820
        %v1982 = vsel %vm1980, %v1703, %v1841
        %vm1983 = vcmask 1041408
        %v1984 = vsel %vm1983, %v1981, %v1958
        %v1985 = vsel %vm1983, %v1982, %v1979
        %v1986 = vld [vmem:[%s461 + $0x80] sm:$0xff]
        %v1987 = vld [vmem:[%s461 + $0x88] sm:$0xff]
        %v1988 = vld [vmem:[%s461 + $0x90] sm:$0xff]
        %v1989 = vld [vmem:[%s461 + $0x98] sm:$0xff]
        %v1990 = vld [vmem:[%s461 + $0xa0] sm:$0xff]
        %v1991 = vld [vmem:[%s461 + $0xa8] sm:$0xff]
        %v1992 = vld [vmem:[%s461 + $0xb0] sm:$0xff]
        %v1993 = vld [vmem:[%s461 + $0xb8] sm:$0xff]
        %v1994 = vld [vmem:[%s461 + $0xc0] sm:$0xff]
        %v1995 = vld [vmem:[%s461 + $0xc8] sm:$0xff]
        %v1996 = vld [vmem:[%s461 + $0xd0] sm:$0xff]
        %v1997 = vld [vmem:[%s461 + $0xd8] sm:$0xff]
        %v1998 = vld [vmem:[%s461 + $0xe0] sm:$0xff]
        %v1999 = vld [vmem:[%s461 + $0xe8] sm:$0xff]
        %v2000 = vld [vmem:[%s461 + $0xf0] sm:$0xff]
        %v2001 = vld [vmem:[%s461 + $0xf8] sm:$0xff]
        %v2002 = vadd.f32 %v1986, 1.0
        %v2003 = vadd.f32 %v1987, 1.0
        %v2004 = vadd.f32 %v1988, 1.0
        %v2005 = vadd.f32 %v1989, 1.0
        %v2006 = vadd.f32 %v1990, 1.0
        %v2007 = vadd.f32 %v1991, 1.0
        %v2008 = vadd.f32 %v1992, 1.0
        %v2009 = vadd.f32 %v1993, 1.0
        %v2010 = vadd.f32 %v1994, 1.0
        %v2011 = vadd.f32 %v1995, 1.0
        %v2012 = vadd.f32 %v1996, 1.0
        %v2013 = vadd.f32 %v1997, 1.0
        %v2014 = vadd.f32 %v1998, 1.0
        %v2015 = vadd.f32 %v1999, 1.0
        %v2016 = vadd.f32 %v2000, 1.0
        %v2017 = vadd.f32 %v2001, 1.0
        %v2018 = vmul.f32 %v2002, 0.5
        %v2019 = vmul.f32 %v2003, 0.5
        %v2020 = vmul.f32 %v2004, 0.5
        %v2021 = vmul.f32 %v2005, 0.5
        %v2022 = vmul.f32 %v2006, 0.5
        %v2023 = vmul.f32 %v2007, 0.5
        %v2024 = vmul.f32 %v2008, 0.5
        %v2025 = vmul.f32 %v2009, 0.5
        %v2026 = vmul.f32 %v2010, 0.5
        %v2027 = vmul.f32 %v2011, 0.5
        %v2028 = vmul.f32 %v2012, 0.5
        %v2029 = vmul.f32 %v2013, 0.5
        %v2030 = vmul.f32 %v2014, 0.5
        %v2031 = vmul.f32 %v2015, 0.5
        %v2032 = vmul.f32 %v2016, 0.5
        %v2033 = vmul.f32 %v2017, 0.5
        %v2034 = vmax.f32 %v2018, 0.0
        %v2035 = vmax.f32 %v2019, 0.0
        %v2036 = vmax.f32 %v2020, 0.0
        %v2037 = vmax.f32 %v2021, 0.0
        %v2038 = vmax.f32 %v2022, 0.0
        %v2039 = vmax.f32 %v2023, 0.0
        %v2040 = vmax.f32 %v2024, 0.0
        %v2041 = vmax.f32 %v2025, 0.0
        %v2042 = vmax.f32 %v2026, 0.0
        %v2043 = vmax.f32 %v2027, 0.0
        %v2044 = vmax.f32 %v2028, 0.0
        %v2045 = vmax.f32 %v2029, 0.0
        %v2046 = vmax.f32 %v2030, 0.0
        %v2047 = vmax.f32 %v2031, 0.0
        %v2048 = vmax.f32 %v2032, 0.0
        %v2049 = vmax.f32 %v2033, 0.0
        %v2050 = vmin.f32 %v2034, 0.999999
        %v2051 = vmin.f32 %v2035, 0.999999
        %v2052 = vmin.f32 %v2036, 0.999999
        %v2053 = vmin.f32 %v2037, 0.999999
        %v2054 = vmin.f32 %v2038, 0.999999
        %v2055 = vmin.f32 %v2039, 0.999999
        %v2056 = vmin.f32 %v2040, 0.999999
        %v2057 = vmin.f32 %v2041, 0.999999
        %v2058 = vmin.f32 %v2042, 0.999999
        %v2059 = vmin.f32 %v2043, 0.999999
        %v2060 = vmin.f32 %v2044, 0.999999
        %v2061 = vmin.f32 %v2045, 0.999999
        %v2062 = vmin.f32 %v2046, 0.999999
        %v2063 = vmin.f32 %v2047, 0.999999
        %v2064 = vmin.f32 %v2048, 0.999999
        %v2065 = vmin.f32 %v2049, 0.999999
        %v2066 = vmul.f32 %v2050, 16.0
        %v2067 = vmul.f32 %v2051, 16.0
        %v2068 = vmul.f32 %v2052, 16.0
        %v2069 = vmul.f32 %v2053, 16.0
        %v2070 = vmul.f32 %v2054, 16.0
        %v2071 = vmul.f32 %v2055, 16.0
        %v2072 = vmul.f32 %v2056, 16.0
        %v2073 = vmul.f32 %v2057, 16.0
        %v2074 = vmul.f32 %v2058, 16.0
        %v2075 = vmul.f32 %v2059, 16.0
        %v2076 = vmul.f32 %v2060, 16.0
        %v2077 = vmul.f32 %v2061, 16.0
        %v2078 = vmul.f32 %v2062, 16.0
        %v2079 = vmul.f32 %v2063, 16.0
        %v2080 = vmul.f32 %v2064, 16.0
        %v2081 = vmul.f32 %v2065, 16.0
        %v2082 = vcvt.f32.s32.to.zero.pseudo %v2066
        %v2083 = vcvt.f32.s32.to.zero.pseudo %v2067
        %v2084 = vcvt.f32.s32.to.zero.pseudo %v2068
        %v2085 = vcvt.f32.s32.to.zero.pseudo %v2069
        %v2086 = vcvt.f32.s32.to.zero.pseudo %v2070
        %v2087 = vcvt.f32.s32.to.zero.pseudo %v2071
        %v2088 = vcvt.f32.s32.to.zero.pseudo %v2072
        %v2089 = vcvt.f32.s32.to.zero.pseudo %v2073
        %v2090 = vcvt.f32.s32.to.zero.pseudo %v2074
        %v2091 = vcvt.f32.s32.to.zero.pseudo %v2075
        %v2092 = vcvt.f32.s32.to.zero.pseudo %v2076
        %v2093 = vcvt.f32.s32.to.zero.pseudo %v2077
        %v2094 = vcvt.f32.s32.to.zero.pseudo %v2078
        %v2095 = vcvt.f32.s32.to.zero.pseudo %v2079
        %v2096 = vcvt.f32.s32.to.zero.pseudo %v2080
        %v2097 = vcvt.f32.s32.to.zero.pseudo %v2081
        %v2098 = vmul.u32 %v2082, 16
        %v2099 = vmul.u32 %v2083, 16
        %v2100 = vmul.u32 %v2084, 16
        %v2101 = vmul.u32 %v2085, 16
        %v2102 = vmul.u32 %v2086, 16
        %v2103 = vmul.u32 %v2087, 16
        %v2104 = vmul.u32 %v2088, 16
        %v2105 = vmul.u32 %v2089, 16
        %v2106 = vmul.u32 %v2090, 16
        %v2107 = vmul.u32 %v2091, 16
        %v2108 = vmul.u32 %v2092, 16
        %v2109 = vmul.u32 %v2093, 16
        %v2110 = vmul.u32 %v2094, 16
        %v2111 = vmul.u32 %v2095, 16
        %v2112 = vmul.u32 %v2096, 16
        %v2113 = vmul.u32 %v2097, 16
        %2114 = vrot.lane.b32.xlu0 %v2082, 1
        %v2115 = vpop.permute.xlu0 %2114
        %2116 = vrot.lane.b32.xlu0 %v2083, 1
        %v2117 = vpop.permute.xlu0 %2116
        %2118 = vrot.lane.b32.xlu0 %v2084, 1
        %v2119 = vpop.permute.xlu0 %2118
        %2120 = vrot.lane.b32.xlu0 %v2085, 1
        %v2121 = vpop.permute.xlu0 %2120
        %2122 = vrot.lane.b32.xlu0 %v2086, 1
        %v2123 = vpop.permute.xlu0 %2122
        %2124 = vrot.lane.b32.xlu0 %v2087, 1
        %v2125 = vpop.permute.xlu0 %2124
        %2126 = vrot.lane.b32.xlu0 %v2088, 1
        %v2127 = vpop.permute.xlu0 %2126
        %2128 = vrot.lane.b32.xlu0 %v2089, 1
        %v2129 = vpop.permute.xlu0 %2128
        %2130 = vrot.lane.b32.xlu0 %v2090, 1
        %v2131 = vpop.permute.xlu0 %2130
        %2132 = vrot.lane.b32.xlu0 %v2091, 1
        %v2133 = vpop.permute.xlu0 %2132
        %2134 = vrot.lane.b32.xlu0 %v2092, 1
        %v2135 = vpop.permute.xlu0 %2134
        %2136 = vrot.lane.b32.xlu0 %v2093, 1
        %v2137 = vpop.permute.xlu0 %2136
        %2138 = vrot.lane.b32.xlu0 %v2094, 1
        %v2139 = vpop.permute.xlu0 %2138
        %2140 = vrot.lane.b32.xlu0 %v2095, 1
        %v2141 = vpop.permute.xlu0 %2140
        %2142 = vrot.lane.b32.xlu0 %v2096, 1
        %v2143 = vpop.permute.xlu0 %2142
        %2144 = vrot.lane.b32.xlu0 %v2097, 1
        %v2145 = vpop.permute.xlu0 %2144
        %v2146 = vadd.s32 %v2098, %v2115
        %v2147 = vadd.s32 %v2099, %v2117
        %v2148 = vadd.s32 %v2100, %v2119
        %v2149 = vadd.s32 %v2101, %v2121
        %v2150 = vadd.s32 %v2102, %v2123
        %v2151 = vadd.s32 %v2103, %v2125
        %v2152 = vadd.s32 %v2104, %v2127
        %v2153 = vadd.s32 %v2105, %v2129
        %v2154 = vadd.s32 %v2106, %v2131
        %v2155 = vadd.s32 %v2107, %v2133
        %v2156 = vadd.s32 %v2108, %v2135
        %v2157 = vadd.s32 %v2109, %v2137
        %v2158 = vadd.s32 %v2110, %v2139
        %v2159 = vadd.s32 %v2111, %v2141
        %v2160 = vadd.s32 %v2112, %v2143
        %v2161 = vadd.s32 %v2113, %v2145
        %2162 = vset.pattern.permute.xlu0 1
        %2163 = vperm.xlu0 %2162, %v2146
        %v2164 = vpop.permute.xlu0 %2163
        %2165 = vset.pattern.permute.xlu0 1
        %2166 = vperm.xlu0 %2165, %v2147
        %v2167 = vpop.permute.xlu0 %2166
        %2168 = vset.pattern.permute.xlu0 1
        %2169 = vperm.xlu0 %2168, %v2148
        %v2170 = vpop.permute.xlu0 %2169
        %2171 = vset.pattern.permute.xlu0 1
        %2172 = vperm.xlu0 %2171, %v2149
        %v2173 = vpop.permute.xlu0 %2172
        %2174 = vset.pattern.permute.xlu0 1
        %2175 = vperm.xlu0 %2174, %v2150
        %v2176 = vpop.permute.xlu0 %2175
        %2177 = vset.pattern.permute.xlu0 1
        %2178 = vperm.xlu0 %2177, %v2151
        %v2179 = vpop.permute.xlu0 %2178
        %2180 = vset.pattern.permute.xlu0 1
        %2181 = vperm.xlu0 %2180, %v2152
        %v2182 = vpop.permute.xlu0 %2181
        %2183 = vset.pattern.permute.xlu0 1
        %2184 = vperm.xlu0 %2183, %v2153
        %v2185 = vpop.permute.xlu0 %2184
        %2186 = vset.pattern.permute.xlu0 1
        %2187 = vperm.xlu0 %2186, %v2154
        %v2188 = vpop.permute.xlu0 %2187
        %2189 = vset.pattern.permute.xlu0 1
        %2190 = vperm.xlu0 %2189, %v2155
        %v2191 = vpop.permute.xlu0 %2190
        %2192 = vset.pattern.permute.xlu0 1
        %2193 = vperm.xlu0 %2192, %v2156
        %v2194 = vpop.permute.xlu0 %2193
        %2195 = vset.pattern.permute.xlu0 1
        %2196 = vperm.xlu0 %2195, %v2157
        %v2197 = vpop.permute.xlu0 %2196
        %2198 = vset.pattern.permute.xlu0 1
        %2199 = vperm.xlu0 %2198, %v2158
        %v2200 = vpop.permute.xlu0 %2199
        %2201 = vset.pattern.permute.xlu0 1
        %2202 = vperm.xlu0 %2201, %v2159
        %v2203 = vpop.permute.xlu0 %2202
        %2204 = vset.pattern.permute.xlu0 1
        %2205 = vperm.xlu0 %2204, %v2160
        %v2206 = vpop.permute.xlu0 %2205
        %2207 = vset.pattern.permute.xlu0 1
        %2208 = vperm.xlu0 %2207, %v2161
        %v2209 = vpop.permute.xlu0 %2208
        %vm2210 = vcmp.eq.s32.totalorder %v1404, %v2164
        %vm2211 = vcmp.eq.s32.totalorder %v1405, %v2164
        %vm2212 = vcmp.eq.s32.totalorder %v1404, %v2167
        %vm2213 = vcmp.eq.s32.totalorder %v1405, %v2167
        %vm2214 = vcmp.eq.s32.totalorder %v1404, %v2170
        %vm2215 = vcmp.eq.s32.totalorder %v1405, %v2170
        %vm2216 = vcmp.eq.s32.totalorder %v1404, %v2173
        %vm2217 = vcmp.eq.s32.totalorder %v1405, %v2173
        %vm2218 = vcmp.eq.s32.totalorder %v1404, %v2176
        %vm2219 = vcmp.eq.s32.totalorder %v1405, %v2176
        %vm2220 = vcmp.eq.s32.totalorder %v1404, %v2179
        %vm2221 = vcmp.eq.s32.totalorder %v1405, %v2179
        %vm2222 = vcmp.eq.s32.totalorder %v1404, %v2182
        %vm2223 = vcmp.eq.s32.totalorder %v1405, %v2182
        %vm2224 = vcmp.eq.s32.totalorder %v1404, %v2185
        %vm2225 = vcmp.eq.s32.totalorder %v1405, %v2185
        %vm2226 = vcmp.eq.s32.totalorder %v1404, %v2188
        %vm2227 = vcmp.eq.s32.totalorder %v1405, %v2188
        %vm2228 = vcmp.eq.s32.totalorder %v1404, %v2191
        %vm2229 = vcmp.eq.s32.totalorder %v1405, %v2191
        %vm2230 = vcmp.eq.s32.totalorder %v1404, %v2194
        %vm2231 = vcmp.eq.s32.totalorder %v1405, %v2194
        %vm2232 = vcmp.eq.s32.totalorder %v1404, %v2197
        %vm2233 = vcmp.eq.s32.totalorder %v1405, %v2197
        %vm2234 = vcmp.eq.s32.totalorder %v1404, %v2200
        %vm2235 = vcmp.eq.s32.totalorder %v1405, %v2200
        %vm2236 = vcmp.eq.s32.totalorder %v1404, %v2203
        %vm2237 = vcmp.eq.s32.totalorder %v1405, %v2203
        %vm2238 = vcmp.eq.s32.totalorder %v1404, %v2206
        %vm2239 = vcmp.eq.s32.totalorder %v1405, %v2206
        %vm2240 = vcmp.eq.s32.totalorder %v1404, %v2209
        %vm2241 = vcmp.eq.s32.totalorder %v1405, %v2209
        %v2242 = vsel %vm2210, 1, 0
        %v2243 = vsel %vm2211, 1, 0
        %v2244 = vsel %vm2212, 1, 0
        %v2245 = vsel %vm2213, 1, 0
        %v2246 = vsel %vm2214, 1, 0
        %v2247 = vsel %vm2215, 1, 0
        %v2248 = vsel %vm2216, 1, 0
        %v2249 = vsel %vm2217, 1, 0
        %v2250 = vsel %vm2218, 1, 0
        %v2251 = vsel %vm2219, 1, 0
        %v2252 = vsel %vm2220, 1, 0
        %v2253 = vsel %vm2221, 1, 0
        %v2254 = vsel %vm2222, 1, 0
        %v2255 = vsel %vm2223, 1, 0
        %v2256 = vsel %vm2224, 1, 0
        %v2257 = vsel %vm2225, 1, 0
        %v2258 = vsel %vm2226, 1, 0
        %v2259 = vsel %vm2227, 1, 0
        %v2260 = vsel %vm2228, 1, 0
        %v2261 = vsel %vm2229, 1, 0
        %v2262 = vsel %vm2230, 1, 0
        %v2263 = vsel %vm2231, 1, 0
        %v2264 = vsel %vm2232, 1, 0
        %v2265 = vsel %vm2233, 1, 0
        %v2266 = vsel %vm2234, 1, 0
        %v2267 = vsel %vm2235, 1, 0
        %v2268 = vsel %vm2236, 1, 0
        %v2269 = vsel %vm2237, 1, 0
        %v2270 = vsel %vm2238, 1, 0
        %v2271 = vsel %vm2239, 1, 0
        %v2272 = vsel %vm2240, 1, 0
        %v2273 = vsel %vm2241, 1, 0
        %v2274 = vcvt.s32.f32 %v2242
        %v2275 = vcvt.s32.f32 %v2243
        %v2276 = vcvt.s32.f32 %v2244
        %v2277 = vcvt.s32.f32 %v2245
        %v2278 = vcvt.s32.f32 %v2246
        %v2279 = vcvt.s32.f32 %v2247
        %v2280 = vcvt.s32.f32 %v2248
        %v2281 = vcvt.s32.f32 %v2249
        %v2282 = vcvt.s32.f32 %v2250
        %v2283 = vcvt.s32.f32 %v2251
        %v2284 = vcvt.s32.f32 %v2252
        %v2285 = vcvt.s32.f32 %v2253
        %v2286 = vcvt.s32.f32 %v2254
        %v2287 = vcvt.s32.f32 %v2255
        %v2288 = vcvt.s32.f32 %v2256
        %v2289 = vcvt.s32.f32 %v2257
        %v2290 = vcvt.s32.f32 %v2258
        %v2291 = vcvt.s32.f32 %v2259
        %v2292 = vcvt.s32.f32 %v2260
        %v2293 = vcvt.s32.f32 %v2261
        %v2294 = vcvt.s32.f32 %v2262
        %v2295 = vcvt.s32.f32 %v2263
        %v2296 = vcvt.s32.f32 %v2264
        %v2297 = vcvt.s32.f32 %v2265
        %v2298 = vcvt.s32.f32 %v2266
        %v2299 = vcvt.s32.f32 %v2267
        %v2300 = vcvt.s32.f32 %v2268
        %v2301 = vcvt.s32.f32 %v2269
        %v2302 = vcvt.s32.f32 %v2270
        %v2303 = vcvt.s32.f32 %v2271
        %v2304 = vcvt.s32.f32 %v2272
        %v2305 = vcvt.s32.f32 %v2273
        %2307 = vset.pattern.permute.xlu0 0
        %2308 = vperm.xlu0 %2307, %v1211
        %v2309 = vpop.permute.xlu0 %2308
        %2312 = vset.pattern.permute.xlu0 0
        %2313 = vperm.xlu0 %2312, %v1212
        %v2314 = vpop.permute.xlu0 %2313
        %2317 = vset.pattern.permute.xlu0 0
        %2318 = vperm.xlu0 %2317, %v1213
        %v2319 = vpop.permute.xlu0 %2318
        %2322 = vset.pattern.permute.xlu0 0
        %2323 = vperm.xlu0 %2322, %v1214
        %v2324 = vpop.permute.xlu0 %2323
        %2327 = vset.pattern.permute.xlu0 0
        %2328 = vperm.xlu0 %2327, %v1215
        %v2329 = vpop.permute.xlu0 %2328
        %2332 = vset.pattern.permute.xlu0 0
        %2333 = vperm.xlu0 %2332, %v1216
        %v2334 = vpop.permute.xlu0 %2333
        %2337 = vset.pattern.permute.xlu0 0
        %2338 = vperm.xlu0 %2337, %v1217
        %v2339 = vpop.permute.xlu0 %2338
        %2342 = vset.pattern.permute.xlu0 0
        %2343 = vperm.xlu0 %2342, %v1218
        %v2344 = vpop.permute.xlu0 %2343
        %2347 = vset.pattern.permute.xlu0 0
        %2348 = vperm.xlu0 %2347, %v1219
        %v2349 = vpop.permute.xlu0 %2348
        %2352 = vset.pattern.permute.xlu0 0
        %2353 = vperm.xlu0 %2352, %v1220
        %v2354 = vpop.permute.xlu0 %2353
        %2357 = vset.pattern.permute.xlu0 0
        %2358 = vperm.xlu0 %2357, %v1221
        %v2359 = vpop.permute.xlu0 %2358
        %2362 = vset.pattern.permute.xlu0 0
        %2363 = vperm.xlu0 %2362, %v1222
        %v2364 = vpop.permute.xlu0 %2363
        %2367 = vset.pattern.permute.xlu0 0
        %2368 = vperm.xlu0 %2367, %v1223
        %v2369 = vpop.permute.xlu0 %2368
        %2372 = vset.pattern.permute.xlu0 0
        %2373 = vperm.xlu0 %2372, %v1224
        %v2374 = vpop.permute.xlu0 %2373
        %2377 = vset.pattern.permute.xlu0 0
        %2378 = vperm.xlu0 %2377, %v1225
        %v2379 = vpop.permute.xlu0 %2378
        %2382 = vset.pattern.permute.xlu0 0
        %2383 = vperm.xlu0 %2382, %v1226
        %v2384 = vpop.permute.xlu0 %2383
        %v2386 = vmul.f32 %v2274, %v2309
        %v2387 = vmul.f32 %v2275, %v2309
        %v2388 = vmul.f32 %v2276, %v2314
        %v2389 = vmul.f32 %v2277, %v2314
        %v2390 = vmul.f32 %v2278, %v2319
        %v2391 = vmul.f32 %v2279, %v2319
        %v2392 = vmul.f32 %v2280, %v2324
        %v2393 = vmul.f32 %v2281, %v2324
        %v2394 = vmul.f32 %v2282, %v2329
        %v2395 = vmul.f32 %v2283, %v2329
        %v2396 = vmul.f32 %v2284, %v2334
        %v2397 = vmul.f32 %v2285, %v2334
        %v2398 = vmul.f32 %v2286, %v2339
        %v2399 = vmul.f32 %v2287, %v2339
        %v2400 = vmul.f32 %v2288, %v2344
        %v2401 = vmul.f32 %v2289, %v2344
        %v2402 = vmul.f32 %v2290, %v2349
        %v2403 = vmul.f32 %v2291, %v2349
        %v2404 = vmul.f32 %v2292, %v2354
        %v2405 = vmul.f32 %v2293, %v2354
        %v2406 = vmul.f32 %v2294, %v2359
        %v2407 = vmul.f32 %v2295, %v2359
        %v2408 = vmul.f32 %v2296, %v2364
        %v2409 = vmul.f32 %v2297, %v2364
        %v2410 = vmul.f32 %v2298, %v2369
        %v2411 = vmul.f32 %v2299, %v2369
        %v2412 = vmul.f32 %v2300, %v2374
        %v2413 = vmul.f32 %v2301, %v2374
        %v2414 = vmul.f32 %v2302, %v2379
        %v2415 = vmul.f32 %v2303, %v2379
        %v2416 = vmul.f32 %v2304, %v2384
        %v2417 = vmul.f32 %v2305, %v2384
        %v2418 = vmax.f32 %v2386, %v2390
        %v2419 = vmax.f32 %v2388, %v2392
        %v2420 = vmax.f32 %v2418, %v2394
        %v2421 = vmax.f32 %v2419, %v2396
        %v2422 = vmax.f32 %v2420, %v2398
        %v2423 = vmax.f32 %v2421, %v2400
        %v2424 = vmax.f32 %v2422, %v2402
        %v2425 = vmax.f32 %v2423, %v2404
        %v2426 = vmax.f32 %v2424, %v2406
        %v2427 = vmax.f32 %v2425, %v2408
        %v2428 = vmax.f32 %v2426, %v2410
        %v2429 = vmax.f32 %v2427, %v2412
        %v2430 = vmax.f32 %v2428, %v2414
        %v2431 = vmax.f32 %v2429, %v2416
        %v2432 = vmax.f32 %v2430, %v2431
        %v2433 = vrot.slane %v2432, 4
        %v2434 = vmax.f32 %v2432, %v2433
        %v2435 = vrot.slane %v2434, 2
        %v2436 = vmax.f32 %v2434, %v2435
        %v2437 = vrot.slane %v2436, 1
        %v2438 = vmax.f32 %v2436, %v2437
        %v2439 = vmax.f32 %v2387, %v2391
        %v2440 = vmax.f32 %v2389, %v2393
        %v2441 = vmax.f32 %v2439, %v2395
        %v2442 = vmax.f32 %v2440, %v2397
        %v2443 = vmax.f32 %v2441, %v2399
        %v2444 = vmax.f32 %v2442, %v2401
        %v2445 = vmax.f32 %v2443, %v2403
        %v2446 = vmax.f32 %v2444, %v2405
        %v2447 = vmax.f32 %v2445, %v2407
        %v2448 = vmax.f32 %v2446, %v2409
        %v2449 = vmax.f32 %v2447, %v2411
        %v2450 = vmax.f32 %v2448, %v2413
        %v2451 = vmax.f32 %v2449, %v2415
        %v2452 = vmax.f32 %v2450, %v2417
        %v2453 = vmax.f32 %v2451, %v2452
        %v2454 = vrot.slane %v2453, 4
        %v2455 = vmax.f32 %v2453, %v2454
        %v2456 = vrot.slane %v2455, 2
        %v2457 = vmax.f32 %v2455, %v2456
        %v2458 = vrot.slane %v2457, 1
        %v2459 = vmax.f32 %v2457, %v2458
        %2460 = vset.pattern.permute.xlu0 1
        %2461 = vperm.xlu0 %2460, %v1211
        %v2462 = vpop.permute.xlu0 %2461
        %2464 = vset.pattern.permute.xlu0 1
        %2465 = vperm.xlu0 %2464, %v1212
        %v2466 = vpop.permute.xlu0 %2465
        %2468 = vset.pattern.permute.xlu0 1
        %2469 = vperm.xlu0 %2468, %v1213
        %v2470 = vpop.permute.xlu0 %2469
        %2472 = vset.pattern.permute.xlu0 1
        %2473 = vperm.xlu0 %2472, %v1214
        %v2474 = vpop.permute.xlu0 %2473
        %2476 = vset.pattern.permute.xlu0 1
        %2477 = vperm.xlu0 %2476, %v1215
        %v2478 = vpop.permute.xlu0 %2477
        %2480 = vset.pattern.permute.xlu0 1
        %2481 = vperm.xlu0 %2480, %v1216
        %v2482 = vpop.permute.xlu0 %2481
        %2484 = vset.pattern.permute.xlu0 1
        %2485 = vperm.xlu0 %2484, %v1217
        %v2486 = vpop.permute.xlu0 %2485
        %2488 = vset.pattern.permute.xlu0 1
        %2489 = vperm.xlu0 %2488, %v1218
        %v2490 = vpop.permute.xlu0 %2489
        %2492 = vset.pattern.permute.xlu0 1
        %2493 = vperm.xlu0 %2492, %v1219
        %v2494 = vpop.permute.xlu0 %2493
        %2496 = vset.pattern.permute.xlu0 1
        %2497 = vperm.xlu0 %2496, %v1220
        %v2498 = vpop.permute.xlu0 %2497
        %2500 = vset.pattern.permute.xlu0 1
        %2501 = vperm.xlu0 %2500, %v1221
        %v2502 = vpop.permute.xlu0 %2501
        %2504 = vset.pattern.permute.xlu0 1
        %2505 = vperm.xlu0 %2504, %v1222
        %v2506 = vpop.permute.xlu0 %2505
        %2508 = vset.pattern.permute.xlu0 1
        %2509 = vperm.xlu0 %2508, %v1223
        %v2510 = vpop.permute.xlu0 %2509
        %2512 = vset.pattern.permute.xlu0 1
        %2513 = vperm.xlu0 %2512, %v1224
        %v2514 = vpop.permute.xlu0 %2513
        %2516 = vset.pattern.permute.xlu0 1
        %2517 = vperm.xlu0 %2516, %v1225
        %v2518 = vpop.permute.xlu0 %2517
        %2520 = vset.pattern.permute.xlu0 1
        %2521 = vperm.xlu0 %2520, %v1226
        %v2522 = vpop.permute.xlu0 %2521
        %v2524 = vmul.f32 %v2274, %v2462
        %v2525 = vmul.f32 %v2275, %v2462
        %v2526 = vmul.f32 %v2276, %v2466
        %v2527 = vmul.f32 %v2277, %v2466
        %v2528 = vmul.f32 %v2278, %v2470
        %v2529 = vmul.f32 %v2279, %v2470
        %v2530 = vmul.f32 %v2280, %v2474
        %v2531 = vmul.f32 %v2281, %v2474
        %v2532 = vmul.f32 %v2282, %v2478
        %v2533 = vmul.f32 %v2283, %v2478
        %v2534 = vmul.f32 %v2284, %v2482
        %v2535 = vmul.f32 %v2285, %v2482
        %v2536 = vmul.f32 %v2286, %v2486
        %v2537 = vmul.f32 %v2287, %v2486
        %v2538 = vmul.f32 %v2288, %v2490
        %v2539 = vmul.f32 %v2289, %v2490
        %v2540 = vmul.f32 %v2290, %v2494
        %v2541 = vmul.f32 %v2291, %v2494
        %v2542 = vmul.f32 %v2292, %v2498
        %v2543 = vmul.f32 %v2293, %v2498
        %v2544 = vmul.f32 %v2294, %v2502
        %v2545 = vmul.f32 %v2295, %v2502
        %v2546 = vmul.f32 %v2296, %v2506
        %v2547 = vmul.f32 %v2297, %v2506
        %v2548 = vmul.f32 %v2298, %v2510
        %v2549 = vmul.f32 %v2299, %v2510
        %v2550 = vmul.f32 %v2300, %v2514
        %v2551 = vmul.f32 %v2301, %v2514
        %v2552 = vmul.f32 %v2302, %v2518
        %v2553 = vmul.f32 %v2303, %v2518
        %v2554 = vmul.f32 %v2304, %v2522
        %v2555 = vmul.f32 %v2305, %v2522
        %v2556 = vmax.f32 %v2524, %v2528
        %v2557 = vmax.f32 %v2526, %v2530
        %v2558 = vmax.f32 %v2556, %v2532
        %v2559 = vmax.f32 %v2557, %v2534
        %v2560 = vmax.f32 %v2558, %v2536
        %v2561 = vmax.f32 %v2559, %v2538
        %v2562 = vmax.f32 %v2560, %v2540
        %v2563 = vmax.f32 %v2561, %v2542
        %v2564 = vmax.f32 %v2562, %v2544
        %v2565 = vmax.f32 %v2563, %v2546
        %v2566 = vmax.f32 %v2564, %v2548
        %v2567 = vmax.f32 %v2565, %v2550
        %v2568 = vmax.f32 %v2566, %v2552
        %v2569 = vmax.f32 %v2567, %v2554
        %v2570 = vmax.f32 %v2568, %v2569
        %v2571 = vrot.slane %v2570, 4
        %v2572 = vmax.f32 %v2570, %v2571
        %v2573 = vrot.slane %v2572, 2
        %v2574 = vmax.f32 %v2572, %v2573
        %v2575 = vrot.slane %v2574, 1
        %v2576 = vmax.f32 %v2574, %v2575
        %v2577 = vmax.f32 %v2525, %v2529
        %v2578 = vmax.f32 %v2527, %v2531
        %v2579 = vmax.f32 %v2577, %v2533
        %v2580 = vmax.f32 %v2578, %v2535
        %v2581 = vmax.f32 %v2579, %v2537
        %v2582 = vmax.f32 %v2580, %v2539
        %v2583 = vmax.f32 %v2581, %v2541
        %v2584 = vmax.f32 %v2582, %v2543
        %v2585 = vmax.f32 %v2583, %v2545
        %v2586 = vmax.f32 %v2584, %v2547
        %v2587 = vmax.f32 %v2585, %v2549
        %v2588 = vmax.f32 %v2586, %v2551
        %v2589 = vmax.f32 %v2587, %v2553
        %v2590 = vmax.f32 %v2588, %v2555
        %v2591 = vmax.f32 %v2589, %v2590
        %v2592 = vrot.slane %v2591, 4
        %v2593 = vmax.f32 %v2591, %v2592
        %v2594 = vrot.slane %v2593, 2
        %v2595 = vmax.f32 %v2593, %v2594
        %v2596 = vrot.slane %v2595, 1
        %v2597 = vmax.f32 %v2595, %v2596
        %2598 = vset.pattern.permute.xlu0 2
        %2599 = vperm.xlu0 %2598, %v1211
        %v2600 = vpop.permute.xlu0 %2599
        %2602 = vset.pattern.permute.xlu0 2
        %2603 = vperm.xlu0 %2602, %v1212
        %v2604 = vpop.permute.xlu0 %2603
        %2606 = vset.pattern.permute.xlu0 2
        %2607 = vperm.xlu0 %2606, %v1213
        %v2608 = vpop.permute.xlu0 %2607
        %2610 = vset.pattern.permute.xlu0 2
        %2611 = vperm.xlu0 %2610, %v1214
        %v2612 = vpop.permute.xlu0 %2611
        %2614 = vset.pattern.permute.xlu0 2
        %2615 = vperm.xlu0 %2614, %v1215
        %v2616 = vpop.permute.xlu0 %2615
        %2618 = vset.pattern.permute.xlu0 2
        %2619 = vperm.xlu0 %2618, %v1216
        %v2620 = vpop.permute.xlu0 %2619
        %2622 = vset.pattern.permute.xlu0 2
        %2623 = vperm.xlu0 %2622, %v1217
        %v2624 = vpop.permute.xlu0 %2623
        %2626 = vset.pattern.permute.xlu0 2
        %2627 = vperm.xlu0 %2626, %v1218
        %v2628 = vpop.permute.xlu0 %2627
        %2630 = vset.pattern.permute.xlu0 2
        %2631 = vperm.xlu0 %2630, %v1219
        %v2632 = vpop.permute.xlu0 %2631
        %2634 = vset.pattern.permute.xlu0 2
        %2635 = vperm.xlu0 %2634, %v1220
        %v2636 = vpop.permute.xlu0 %2635
        %2638 = vset.pattern.permute.xlu0 2
        %2639 = vperm.xlu0 %2638, %v1221
        %v2640 = vpop.permute.xlu0 %2639
        %2642 = vset.pattern.permute.xlu0 2
        %2643 = vperm.xlu0 %2642, %v1222
        %v2644 = vpop.permute.xlu0 %2643
        %2646 = vset.pattern.permute.xlu0 2
        %2647 = vperm.xlu0 %2646, %v1223
        %v2648 = vpop.permute.xlu0 %2647
        %2650 = vset.pattern.permute.xlu0 2
        %2651 = vperm.xlu0 %2650, %v1224
        %v2652 = vpop.permute.xlu0 %2651
        %2654 = vset.pattern.permute.xlu0 2
        %2655 = vperm.xlu0 %2654, %v1225
        %v2656 = vpop.permute.xlu0 %2655
        %2658 = vset.pattern.permute.xlu0 2
        %2659 = vperm.xlu0 %2658, %v1226
        %v2660 = vpop.permute.xlu0 %2659
        %v2662 = vmul.f32 %v2274, %v2600
        %v2663 = vmul.f32 %v2275, %v2600
        %v2664 = vmul.f32 %v2276, %v2604
        %v2665 = vmul.f32 %v2277, %v2604
        %v2666 = vmul.f32 %v2278, %v2608
        %v2667 = vmul.f32 %v2279, %v2608
        %v2668 = vmul.f32 %v2280, %v2612
        %v2669 = vmul.f32 %v2281, %v2612
        %v2670 = vmul.f32 %v2282, %v2616
        %v2671 = vmul.f32 %v2283, %v2616
        %v2672 = vmul.f32 %v2284, %v2620
        %v2673 = vmul.f32 %v2285, %v2620
        %v2674 = vmul.f32 %v2286, %v2624
        %v2675 = vmul.f32 %v2287, %v2624
        %v2676 = vmul.f32 %v2288, %v2628
        %v2677 = vmul.f32 %v2289, %v2628
        %v2678 = vmul.f32 %v2290, %v2632
        %v2679 = vmul.f32 %v2291, %v2632
        %v2680 = vmul.f32 %v2292, %v2636
        %v2681 = vmul.f32 %v2293, %v2636
        %v2682 = vmul.f32 %v2294, %v2640
        %v2683 = vmul.f32 %v2295, %v2640
        %v2684 = vmul.f32 %v2296, %v2644
        %v2685 = vmul.f32 %v2297, %v2644
        %v2686 = vmul.f32 %v2298, %v2648
        %v2687 = vmul.f32 %v2299, %v2648
        %v2688 = vmul.f32 %v2300, %v2652
        %v2689 = vmul.f32 %v2301, %v2652
        %v2690 = vmul.f32 %v2302, %v2656
        %v2691 = vmul.f32 %v2303, %v2656
        %v2692 = vmul.f32 %v2304, %v2660
        %v2693 = vmul.f32 %v2305, %v2660
        %v2694 = vmax.f32 %v2662, %v2666
        %v2695 = vmax.f32 %v2664, %v2668
        %v2696 = vmax.f32 %v2694, %v2670
        %v2697 = vmax.f32 %v2695, %v2672
        %v2698 = vmax.f32 %v2696, %v2674
        %v2699 = vmax.f32 %v2697, %v2676
        %v2700 = vmax.f32 %v2698, %v2678
        %v2701 = vmax.f32 %v2699, %v2680
        %v2702 = vmax.f32 %v2700, %v2682
        %v2703 = vmax.f32 %v2701, %v2684
        %v2704 = vmax.f32 %v2702, %v2686
        %v2705 = vmax.f32 %v2703, %v2688
        %v2706 = vmax.f32 %v2704, %v2690
        %v2707 = vmax.f32 %v2705, %v2692
        %v2708 = vmax.f32 %v2706, %v2707
        %v2709 = vrot.slane %v2708, 4
        %v2710 = vmax.f32 %v2708, %v2709
        %v2711 = vrot.slane %v2710, 2
        %v2712 = vmax.f32 %v2710, %v2711
        %v2713 = vrot.slane %v2712, 1
        %v2714 = vmax.f32 %v2712, %v2713
        %v2715 = vmax.f32 %v2663, %v2667
        %v2716 = vmax.f32 %v2665, %v2669
        %v2717 = vmax.f32 %v2715, %v2671
        %v2718 = vmax.f32 %v2716, %v2673
        %v2719 = vmax.f32 %v2717, %v2675
        %v2720 = vmax.f32 %v2718, %v2677
        %v2721 = vmax.f32 %v2719, %v2679
        %v2722 = vmax.f32 %v2720, %v2681
        %v2723 = vmax.f32 %v2721, %v2683
        %v2724 = vmax.f32 %v2722, %v2685
        %v2725 = vmax.f32 %v2723, %v2687
        %v2726 = vmax.f32 %v2724, %v2689
        %v2727 = vmax.f32 %v2725, %v2691
        %v2728 = vmax.f32 %v2726, %v2693
        %v2729 = vmax.f32 %v2727, %v2728
        %v2730 = vrot.slane %v2729, 4
        %v2731 = vmax.f32 %v2729, %v2730
        %v2732 = vrot.slane %v2731, 2
        %v2733 = vmax.f32 %v2731, %v2732
        %v2734 = vrot.slane %v2733, 1
        %v2735 = vmax.f32 %v2733, %v2734
        %v2736 = vsel %vm1980, %v2438, %v2576
        %v2737 = vsel %vm1980, %v2459, %v2597
        %v2738 = vsel %vm1983, %v2736, %v2714
        %v2739 = vsel %vm1983, %v2737, %v2735
        %2744 = vrot.lane.b32.xlu0 %v1984, 17
        %v2745 = vpop.permute.xlu0 %2744
        %2746 = vrot.lane.b32.xlu0 %v1985, 17
        %v2747 = vpop.permute.xlu0 %2746
        %2748 = vrot.lane.b32.xlu0 %v2738, 17
        %v2749 = vpop.permute.xlu0 %2748
        %2750 = vrot.lane.b32.xlu0 %v2739, 17
        %v2751 = vpop.permute.xlu0 %2750
        %vm2752 = vcmask 138240
        %v2753 = vsel %vm2752, %v2745, %v2747
        %v2754 = vsel %vm2752, %v2747, %v2749
        %v2755 = vsel %vm2752, %v2749, %v2751
        %v2761 = vsel %vm2752, 0.0, %v2745
        %v2762 = vsel %vm2752, %v2751, 0.0
        %v2763 = vld [vmem:[%s6] ss:$8 sm:$0xf]
        %v2765 = vlaneseq
        %v2766 = vshrl.u32 %v2765, 7
        %v2767 = vsub.s32 0, %v2766
        %v2768 = vrot.slane %v2763, %v2767
        %v2769 = vlaneseq
        %v2770 = vshrl.u32 %v2769, 7
        %v2771 = vsub.s32 1, %v2770
        %v2772 = vrot.slane %v2763, %v2771
        %v2773 = vlaneseq
        %v2774 = vshrl.u32 %v2773, 7
        %v2775 = vsub.s32 2, %v2774
        %v2776 = vrot.slane %v2763, %v2775
        %v2777 = vlaneseq
        %v2778 = vshrl.u32 %v2777, 7
        %v2779 = vsub.s32 3, %v2778
        %v2780 = vrot.slane %v2763, %v2779
        %v2785 = vmul.f32 %v2761, %v2768
        %v2786 = vmul.f32 %v2753, %v2772
        %v2787 = vmul.f32 %v2754, %v2776
        %v2788 = vmul.f32 %v2755, %v2780
        %s2789 = scalar_lea.vmem %s6, 1
        %v2790 = vld [vmem:[%s2789] ss:$8 sm:$0xf]
        %v2792 = vlaneseq
        %v2793 = vshrl.u32 %v2792, 7
        %v2794 = vsub.s32 0, %v2793
        %v2795 = vrot.slane %v2790, %v2794
        %v2796 = vlaneseq
        %v2797 = vshrl.u32 %v2796, 7
        %v2798 = vsub.s32 1, %v2797
        %v2799 = vrot.slane %v2790, %v2798
        %v2800 = vlaneseq
        %v2801 = vshrl.u32 %v2800, 7
        %v2802 = vsub.s32 2, %v2801
        %v2803 = vrot.slane %v2790, %v2802
        %v2804 = vlaneseq
        %v2805 = vshrl.u32 %v2804, 7
        %v2806 = vsub.s32 3, %v2805
        %v2807 = vrot.slane %v2790, %v2806
        %2808 = vrot.lane.b32.xlu0 %v2795, 1
        %v2809 = vpop.permute.xlu0 %2808
        %2810 = vrot.lane.b32.xlu0 %v2799, 1
        %v2811 = vpop.permute.xlu0 %2810
        %2812 = vrot.lane.b32.xlu0 %v2803, 1
        %v2813 = vpop.permute.xlu0 %2812
        %2814 = vrot.lane.b32.xlu0 %v2807, 1
        %v2815 = vpop.permute.xlu0 %2814
        %vm2816 = vcmask 7168
        %v2817 = vsel %vm2816, %v2809, %v2811
        %v2818 = vsel %vm2816, %v2811, %v2813
        %v2819 = vsel %vm2816, %v2813, %v2815
        %v2825 = vmul.f32 %v2761, %v2809
        %v2826 = vmul.f32 %v2753, %v2817
        %v2827 = vmul.f32 %v2754, %v2818
        %v2828 = vmul.f32 %v2755, %v2819
        %v2829 = vmul.f32 %v2762, %v2815
        %s2830 = scalar_lea.vmem %s6, 2
        %v2831 = vld [vmem:[%s2830] ss:$8 sm:$0xf]
        %v2833 = vlaneseq
        %v2834 = vshrl.u32 %v2833, 7
        %v2835 = vsub.s32 0, %v2834
        %v2836 = vrot.slane %v2831, %v2835
        %v2837 = vlaneseq
        %v2838 = vshrl.u32 %v2837, 7
        %v2839 = vsub.s32 1, %v2838
        %v2840 = vrot.slane %v2831, %v2839
        %v2841 = vlaneseq
        %v2842 = vshrl.u32 %v2841, 7
        %v2843 = vsub.s32 2, %v2842
        %v2844 = vrot.slane %v2831, %v2843
        %v2845 = vlaneseq
        %v2846 = vshrl.u32 %v2845, 7
        %v2847 = vsub.s32 3, %v2846
        %v2848 = vrot.slane %v2831, %v2847
        %2849 = vrot.lane.b32.xlu0 %v2836, 2
        %v2850 = vpop.permute.xlu0 %2849
        %2851 = vrot.lane.b32.xlu0 %v2840, 2
        %v2852 = vpop.permute.xlu0 %2851
        %2853 = vrot.lane.b32.xlu0 %v2844, 2
        %v2854 = vpop.permute.xlu0 %2853
        %2855 = vrot.lane.b32.xlu0 %v2848, 2
        %v2856 = vpop.permute.xlu0 %2855
        %vm2857 = vcmask 15360
        %v2858 = vsel %vm2857, %v2850, %v2852
        %v2859 = vsel %vm2857, %v2852, %v2854
        %v2860 = vsel %vm2857, %v2854, %v2856
        %v2866 = vmul.f32 %v2761, %v2850
        %v2867 = vmul.f32 %v2753, %v2858
        %v2868 = vmul.f32 %v2754, %v2859
        %v2869 = vmul.f32 %v2755, %v2860
        %v2870 = vmul.f32 %v2762, %v2856
        %s2871 = scalar_lea.vmem %s6, 3
        %v2872 = vld [vmem:[%s2871] ss:$8 sm:$0xf]
        %v2874 = vlaneseq
        %v2875 = vshrl.u32 %v2874, 7
        %v2876 = vsub.s32 0, %v2875
        %v2877 = vrot.slane %v2872, %v2876
        %v2878 = vlaneseq
        %v2879 = vshrl.u32 %v2878, 7
        %v2880 = vsub.s32 1, %v2879
        %v2881 = vrot.slane %v2872, %v2880
        %v2882 = vlaneseq
        %v2883 = vshrl.u32 %v2882, 7
        %v2884 = vsub.s32 2, %v2883
        %v2885 = vrot.slane %v2872, %v2884
        %v2886 = vlaneseq
        %v2887 = vshrl.u32 %v2886, 7
        %v2888 = vsub.s32 3, %v2887
        %v2889 = vrot.slane %v2872, %v2888
        %2890 = vrot.lane.b32.xlu0 %v2877, 16
        %v2891 = vpop.permute.xlu0 %2890
        %2892 = vrot.lane.b32.xlu0 %v2881, 16
        %v2893 = vpop.permute.xlu0 %2892
        %2894 = vrot.lane.b32.xlu0 %v2885, 16
        %v2895 = vpop.permute.xlu0 %2894
        %2896 = vrot.lane.b32.xlu0 %v2889, 16
        %v2897 = vpop.permute.xlu0 %2896
        %vm2898 = vcmask 130048
        %v2899 = vsel %vm2898, %v2891, %v2893
        %v2900 = vsel %vm2898, %v2893, %v2895
        %v2901 = vsel %vm2898, %v2895, %v2897
        %v2907 = vmul.f32 %v2761, %v2891
        %v2908 = vmul.f32 %v2753, %v2899
        %v2909 = vmul.f32 %v2754, %v2900
        %v2910 = vmul.f32 %v2755, %v2901
        %v2911 = vmul.f32 %v2762, %v2897
        %s2912 = scalar_lea.vmem %s6, 4
        %v2913 = vld [vmem:[%s2912] ss:$8 sm:$0xf]
        %v2915 = vlaneseq
        %v2916 = vshrl.u32 %v2915, 7
        %v2917 = vsub.s32 0, %v2916
        %v2918 = vrot.slane %v2913, %v2917
        %v2919 = vlaneseq
        %v2920 = vshrl.u32 %v2919, 7
        %v2921 = vsub.s32 1, %v2920
        %v2922 = vrot.slane %v2913, %v2921
        %v2923 = vlaneseq
        %v2924 = vshrl.u32 %v2923, 7
        %v2925 = vsub.s32 2, %v2924
        %v2926 = vrot.slane %v2913, %v2925
        %v2927 = vlaneseq
        %v2928 = vshrl.u32 %v2927, 7
        %v2929 = vsub.s32 3, %v2928
        %v2930 = vrot.slane %v2913, %v2929
        %2931 = vrot.lane.b32.xlu0 %v2918, 17
        %v2932 = vpop.permute.xlu0 %2931
        %2933 = vrot.lane.b32.xlu0 %v2922, 17
        %v2934 = vpop.permute.xlu0 %2933
        %2935 = vrot.lane.b32.xlu0 %v2926, 17
        %v2936 = vpop.permute.xlu0 %2935
        %2937 = vrot.lane.b32.xlu0 %v2930, 17
        %v2938 = vpop.permute.xlu0 %2937
        %v2939 = vsel %vm2752, %v2932, %v2934
        %v2940 = vsel %vm2752, %v2934, %v2936
        %v2941 = vsel %vm2752, %v2936, %v2938
        %v2947 = vmul.f32 %v2761, %v2932
        %v2948 = vmul.f32 %v2753, %v2939
        %v2949 = vmul.f32 %v2754, %v2940
        %v2950 = vmul.f32 %v2755, %v2941
        %v2951 = vmul.f32 %v2762, %v2938
        %s2952 = scalar_lea.vmem %s6, 5
        %v2953 = vld [vmem:[%s2952] ss:$8 sm:$0xf]
        %v2955 = vlaneseq
        %v2956 = vshrl.u32 %v2955, 7
        %v2957 = vsub.s32 0, %v2956
        %v2958 = vrot.slane %v2953, %v2957
        %v2959 = vlaneseq
        %v2960 = vshrl.u32 %v2959, 7
        %v2961 = vsub.s32 1, %v2960
        %v2962 = vrot.slane %v2953, %v2961
        %v2963 = vlaneseq
        %v2964 = vshrl.u32 %v2963, 7
        %v2965 = vsub.s32 2, %v2964
        %v2966 = vrot.slane %v2953, %v2965
        %v2967 = vlaneseq
        %v2968 = vshrl.u32 %v2967, 7
        %v2969 = vsub.s32 3, %v2968
        %v2970 = vrot.slane %v2953, %v2969
        %2971 = vrot.lane.b32.xlu0 %v2958, 18
        %v2972 = vpop.permute.xlu0 %2971
        %2973 = vrot.lane.b32.xlu0 %v2962, 18
        %v2974 = vpop.permute.xlu0 %2973
        %2975 = vrot.lane.b32.xlu0 %v2966, 18
        %v2976 = vpop.permute.xlu0 %2975
        %2977 = vrot.lane.b32.xlu0 %v2970, 18
        %v2978 = vpop.permute.xlu0 %2977
        %vm2979 = vcmask 146432
        %v2980 = vsel %vm2979, %v2972, %v2974
        %v2981 = vsel %vm2979, %v2974, %v2976
        %v2982 = vsel %vm2979, %v2976, %v2978
        %v2988 = vmul.f32 %v2761, %v2972
        %v2989 = vmul.f32 %v2753, %v2980
        %v2990 = vmul.f32 %v2754, %v2981
        %v2991 = vmul.f32 %v2755, %v2982
        %v2992 = vmul.f32 %v2762, %v2978
        %s2993 = scalar_lea.vmem %s6, 6
        %v2994 = vld [vmem:[%s2993] ss:$8 sm:$0xf]
        %v2996 = vlaneseq
        %v2997 = vshrl.u32 %v2996, 7
        %v2998 = vsub.s32 0, %v2997
        %v2999 = vrot.slane %v2994, %v2998
        %v3000 = vlaneseq
        %v3001 = vshrl.u32 %v3000, 7
        %v3002 = vsub.s32 1, %v3001
        %v3003 = vrot.slane %v2994, %v3002
        %v3004 = vlaneseq
        %v3005 = vshrl.u32 %v3004, 7
        %v3006 = vsub.s32 2, %v3005
        %v3007 = vrot.slane %v2994, %v3006
        %v3008 = vlaneseq
        %v3009 = vshrl.u32 %v3008, 7
        %v3010 = vsub.s32 3, %v3009
        %v3011 = vrot.slane %v2994, %v3010
        %3012 = vrot.lane.b32.xlu0 %v2999, 32
        %v3013 = vpop.permute.xlu0 %3012
        %3014 = vrot.lane.b32.xlu0 %v3003, 32
        %v3015 = vpop.permute.xlu0 %3014
        %3016 = vrot.lane.b32.xlu0 %v3007, 32
        %v3017 = vpop.permute.xlu0 %3016
        %3018 = vrot.lane.b32.xlu0 %v3011, 32
        %v3019 = vpop.permute.xlu0 %3018
        %v3020 = vsel %vm873, %v3013, %v3015
        %v3021 = vsel %vm873, %v3015, %v3017
        %v3022 = vsel %vm873, %v3017, %v3019
        %v3028 = vmul.f32 %v2761, %v3013
        %v3029 = vmul.f32 %v2753, %v3020
        %v3030 = vmul.f32 %v2754, %v3021
        %v3031 = vmul.f32 %v2755, %v3022
        %v3032 = vmul.f32 %v2762, %v3019
        %s3033 = scalar_lea.vmem %s6, 7
        %v3034 = vld [vmem:[%s3033] ss:$8 sm:$0xf]
        %v3036 = vlaneseq
        %v3037 = vshrl.u32 %v3036, 7
        %v3038 = vsub.s32 0, %v3037
        %v3039 = vrot.slane %v3034, %v3038
        %v3040 = vlaneseq
        %v3041 = vshrl.u32 %v3040, 7
        %v3042 = vsub.s32 1, %v3041
        %v3043 = vrot.slane %v3034, %v3042
        %v3044 = vlaneseq
        %v3045 = vshrl.u32 %v3044, 7
        %v3046 = vsub.s32 2, %v3045
        %v3047 = vrot.slane %v3034, %v3046
        %v3048 = vlaneseq
        %v3049 = vshrl.u32 %v3048, 7
        %v3050 = vsub.s32 3, %v3049
        %v3051 = vrot.slane %v3034, %v3050
        %3052 = vrot.lane.b32.xlu0 %v3039, 33
        %v3053 = vpop.permute.xlu0 %3052
        %3054 = vrot.lane.b32.xlu0 %v3043, 33
        %v3055 = vpop.permute.xlu0 %3054
        %3056 = vrot.lane.b32.xlu0 %v3047, 33
        %v3057 = vpop.permute.xlu0 %3056
        %3058 = vrot.lane.b32.xlu0 %v3051, 33
        %v3059 = vpop.permute.xlu0 %3058
        %vm3060 = vcmask 269312
        %v3061 = vsel %vm3060, %v3053, %v3055
        %v3062 = vsel %vm3060, %v3055, %v3057
        %v3063 = vsel %vm3060, %v3057, %v3059
        %v3069 = vmul.f32 %v2761, %v3053
        %v3070 = vmul.f32 %v2753, %v3061
        %v3071 = vmul.f32 %v2754, %v3062
        %v3072 = vmul.f32 %v2755, %v3063
        %v3073 = vmul.f32 %v2762, %v3059
        %s3074 = scalar_lea.vmem %s6, 32
        %v3075 = vld [vmem:[%s3074] ss:$8 sm:$0xf]
        %v3077 = vlaneseq
        %v3078 = vshrl.u32 %v3077, 7
        %v3079 = vsub.s32 0, %v3078
        %v3080 = vrot.slane %v3075, %v3079
        %v3081 = vlaneseq
        %v3082 = vshrl.u32 %v3081, 7
        %v3083 = vsub.s32 1, %v3082
        %v3084 = vrot.slane %v3075, %v3083
        %v3085 = vlaneseq
        %v3086 = vshrl.u32 %v3085, 7
        %v3087 = vsub.s32 2, %v3086
        %v3088 = vrot.slane %v3075, %v3087
        %v3089 = vlaneseq
        %v3090 = vshrl.u32 %v3089, 7
        %v3091 = vsub.s32 3, %v3090
        %v3092 = vrot.slane %v3075, %v3091
        %3093 = vrot.lane.b32.xlu0 %v3080, 34
        %v3094 = vpop.permute.xlu0 %3093
        %3095 = vrot.lane.b32.xlu0 %v3084, 34
        %v3096 = vpop.permute.xlu0 %3095
        %3097 = vrot.lane.b32.xlu0 %v3088, 34
        %v3098 = vpop.permute.xlu0 %3097
        %3099 = vrot.lane.b32.xlu0 %v3092, 34
        %v3100 = vpop.permute.xlu0 %3099
        %vm3101 = vcmask 277504
        %v3102 = vsel %vm3101, %v3094, %v3096
        %v3103 = vsel %vm3101, %v3096, %v3098
        %v3104 = vsel %vm3101, %v3098, %v3100
        %v3110 = vmul.f32 %v2761, %v3094
        %v3111 = vmul.f32 %v2753, %v3102
        %v3112 = vmul.f32 %v2754, %v3103
        %v3113 = vmul.f32 %v2755, %v3104
        %v3114 = vmul.f32 %v2762, %v3100
        %v3120 = vrot.slane %v2825, 5
        %v3121 = vrot.slane %v2826, 5
        %v3122 = vrot.slane %v2827, 5
        %v3123 = vrot.slane %v2828, 5
        %v3124 = vrot.slane %v2829, 5
        %3125 = vrot.lane.b32.xlu0 %v3120, 127
        %v3126 = vpop.permute.xlu0 %3125
        %3127 = vrot.lane.b32.xlu0 %v3121, 127
        %v3128 = vpop.permute.xlu0 %3127
        %3129 = vrot.lane.b32.xlu0 %v3122, 127
        %v3130 = vpop.permute.xlu0 %3129
        %3131 = vrot.lane.b32.xlu0 %v3123, 127
        %v3132 = vpop.permute.xlu0 %3131
        %3133 = vrot.lane.b32.xlu0 %v3124, 127
        %v3134 = vpop.permute.xlu0 %3133
        %vm3135 = vcmask 1039360
        %v3136 = vsel %vm3135, %v3126, %v3128
        %v3137 = vsel %vm3135, %v3128, %v3130
        %v3138 = vsel %vm3135, %v3130, %v3132
        %v3139 = vsel %vm3135, %v3132, %v3134
        %v3149 = vrot.slane %v2866, 2
        %v3150 = vrot.slane %v2867, 2
        %v3151 = vrot.slane %v2868, 2
        %v3152 = vrot.slane %v2869, 2
        %v3153 = vrot.slane %v2870, 2
        %3154 = vrot.lane.b32.xlu0 %v3149, 126
        %v3155 = vpop.permute.xlu0 %3154
        %3156 = vrot.lane.b32.xlu0 %v3150, 126
        %v3157 = vpop.permute.xlu0 %3156
        %3158 = vrot.lane.b32.xlu0 %v3151, 126
        %v3159 = vpop.permute.xlu0 %3158
        %3160 = vrot.lane.b32.xlu0 %v3152, 126
        %v3161 = vpop.permute.xlu0 %3160
        %3162 = vrot.lane.b32.xlu0 %v3153, 126
        %v3163 = vpop.permute.xlu0 %3162
        %vm3164 = vcmask 1031168
        %v3165 = vsel %vm3164, %v3155, %v3157
        %v3166 = vsel %vm3164, %v3157, %v3159
        %v3167 = vsel %vm3164, %v3159, %v3161
        %v3168 = vsel %vm3164, %v3161, %v3163
        %v3178 = vrot.slane %v2907, 7
        %v3179 = vrot.slane %v2908, 7
        %v3180 = vrot.slane %v2909, 7
        %v3181 = vrot.slane %v2910, 7
        %v3182 = vrot.slane %v2911, 7
        %3183 = vrot.lane.b32.xlu0 %v3178, 112
        %v3184 = vpop.permute.xlu0 %3183
        %3185 = vrot.lane.b32.xlu0 %v3179, 112
        %v3186 = vpop.permute.xlu0 %3185
        %3187 = vrot.lane.b32.xlu0 %v3180, 112
        %v3188 = vpop.permute.xlu0 %3187
        %3189 = vrot.lane.b32.xlu0 %v3181, 112
        %v3190 = vpop.permute.xlu0 %3189
        %3191 = vrot.lane.b32.xlu0 %v3182, 112
        %v3192 = vpop.permute.xlu0 %3191
        %vm3193 = vcmask 916480
        %v3194 = vsel %vm3193, %v3184, %v3186
        %v3195 = vsel %vm3193, %v3186, %v3188
        %v3196 = vsel %vm3193, %v3188, %v3190
        %v3197 = vsel %vm3193, %v3190, %v3192
        %v3207 = vrot.slane %v2947, 4
        %v3208 = vrot.slane %v2948, 4
        %v3209 = vrot.slane %v2949, 4
        %v3210 = vrot.slane %v2950, 4
        %v3211 = vrot.slane %v2951, 4
        %3212 = vrot.lane.b32.xlu0 %v3207, 111
        %v3213 = vpop.permute.xlu0 %3212
        %3214 = vrot.lane.b32.xlu0 %v3208, 111
        %v3215 = vpop.permute.xlu0 %3214
        %3216 = vrot.lane.b32.xlu0 %v3209, 111
        %v3217 = vpop.permute.xlu0 %3216
        %3218 = vrot.lane.b32.xlu0 %v3210, 111
        %v3219 = vpop.permute.xlu0 %3218
        %3220 = vrot.lane.b32.xlu0 %v3211, 111
        %v3221 = vpop.permute.xlu0 %3220
        %vm3222 = vcmask 908288
        %v3223 = vsel %vm3222, %v3213, %v3215
        %v3224 = vsel %vm3222, %v3215, %v3217
        %v3225 = vsel %vm3222, %v3217, %v3219
        %v3226 = vsel %vm3222, %v3219, %v3221
        %v3236 = vrot.slane %v2988, 1
        %v3237 = vrot.slane %v2989, 1
        %v3238 = vrot.slane %v2990, 1
        %v3239 = vrot.slane %v2991, 1
        %v3240 = vrot.slane %v2992, 1
        %3241 = vrot.lane.b32.xlu0 %v3236, 110
        %v3242 = vpop.permute.xlu0 %3241
        %3243 = vrot.lane.b32.xlu0 %v3237, 110
        %v3244 = vpop.permute.xlu0 %3243
        %3245 = vrot.lane.b32.xlu0 %v3238, 110
        %v3246 = vpop.permute.xlu0 %3245
        %3247 = vrot.lane.b32.xlu0 %v3239, 110
        %v3248 = vpop.permute.xlu0 %3247
        %3249 = vrot.lane.b32.xlu0 %v3240, 110
        %v3250 = vpop.permute.xlu0 %3249
        %vm3251 = vcmask 900096
        %v3252 = vsel %vm3251, %v3242, %v3244
        %v3253 = vsel %vm3251, %v3244, %v3246
        %v3254 = vsel %vm3251, %v3246, %v3248
        %v3255 = vsel %vm3251, %v3248, %v3250
        %v3265 = vrot.slane %v3028, 6
        %v3266 = vrot.slane %v3029, 6
        %v3267 = vrot.slane %v3030, 6
        %v3268 = vrot.slane %v3031, 6
        %v3269 = vrot.slane %v3032, 6
        %3270 = vrot.lane.b32.xlu0 %v3265, 96
        %v3271 = vpop.permute.xlu0 %3270
        %3272 = vrot.lane.b32.xlu0 %v3266, 96
        %v3273 = vpop.permute.xlu0 %3272
        %3274 = vrot.lane.b32.xlu0 %v3267, 96
        %v3275 = vpop.permute.xlu0 %3274
        %3276 = vrot.lane.b32.xlu0 %v3268, 96
        %v3277 = vpop.permute.xlu0 %3276
        %3278 = vrot.lane.b32.xlu0 %v3269, 96
        %v3279 = vpop.permute.xlu0 %3278
        %vm3280 = vcmask 785408
        %v3281 = vsel %vm3280, %v3271, %v3273
        %v3282 = vsel %vm3280, %v3273, %v3275
        %v3283 = vsel %vm3280, %v3275, %v3277
        %v3284 = vsel %vm3280, %v3277, %v3279
        %v3294 = vrot.slane %v3069, 3
        %v3295 = vrot.slane %v3070, 3
        %v3296 = vrot.slane %v3071, 3
        %v3297 = vrot.slane %v3072, 3
        %v3298 = vrot.slane %v3073, 3
        %3299 = vrot.lane.b32.xlu0 %v3294, 95
        %v3300 = vpop.permute.xlu0 %3299
        %3301 = vrot.lane.b32.xlu0 %v3295, 95
        %v3302 = vpop.permute.xlu0 %3301
        %3303 = vrot.lane.b32.xlu0 %v3296, 95
        %v3304 = vpop.permute.xlu0 %3303
        %3305 = vrot.lane.b32.xlu0 %v3297, 95
        %v3306 = vpop.permute.xlu0 %3305
        %3307 = vrot.lane.b32.xlu0 %v3298, 95
        %v3308 = vpop.permute.xlu0 %3307
        %vm3309 = vcmask 777216
        %v3310 = vsel %vm3309, %v3300, %v3302
        %v3311 = vsel %vm3309, %v3302, %v3304
        %v3312 = vsel %vm3309, %v3304, %v3306
        %v3313 = vsel %vm3309, %v3306, %v3308
        %3323 = vrot.lane.b32.xlu0 %v3110, 94
        %v3324 = vpop.permute.xlu0 %3323
        %3325 = vrot.lane.b32.xlu0 %v3111, 94
        %v3326 = vpop.permute.xlu0 %3325
        %3327 = vrot.lane.b32.xlu0 %v3112, 94
        %v3328 = vpop.permute.xlu0 %3327
        %3329 = vrot.lane.b32.xlu0 %v3113, 94
        %v3330 = vpop.permute.xlu0 %3329
        %3331 = vrot.lane.b32.xlu0 %v3114, 94
        %v3332 = vpop.permute.xlu0 %3331
        %vm3333 = vcmask 769024
        %v3334 = vsel %vm3333, %v3324, %v3326
        %v3335 = vsel %vm3333, %v3326, %v3328
        %v3336 = vsel %vm3333, %v3328, %v3330
        %v3337 = vsel %vm3333, %v3330, %v3332
        %v3338 = vsel %vm601, %v2785, %v3136
        %v3339 = vsel %vm601, %v2786, %v3137
        %v3340 = vsel %vm601, %v2787, %v3138
        %v3341 = vsel %vm601, %v2788, %v3139
        %vm3342 = vcmask 1045504
        %v3343 = vsel %vm3342, %v3338, %v3165
        %v3344 = vsel %vm3342, %v3339, %v3166
        %v3345 = vsel %vm3342, %v3340, %v3167
        %v3346 = vsel %vm3342, %v3341, %v3168
        %v3347 = vsel %vm1980, %v3165, %v3194
        %v3348 = vsel %vm1980, %v3166, %v3195
        %v3349 = vsel %vm1980, %v3167, %v3196
        %v3350 = vsel %vm1980, %v3168, %v3197
        %vm3351 = vcmask 1043456
        %v3352 = vsel %vm3351, %v3347, %v3223
        %v3353 = vsel %vm3351, %v3348, %v3224
        %v3354 = vsel %vm3351, %v3349, %v3225
        %v3355 = vsel %vm3351, %v3350, %v3226
        %vm3356 = vcmask 1046528
        %v3357 = vsel %vm3356, %v3352, %v3252
        %v3358 = vsel %vm3356, %v3353, %v3253
        %v3359 = vsel %vm3356, %v3354, %v3254
        %v3360 = vsel %vm3356, %v3355, %v3255
        %v3361 = vsel %vm1983, %v3252, %v3281
        %v3362 = vsel %vm1983, %v3253, %v3282
        %v3363 = vsel %vm1983, %v3254, %v3283
        %v3364 = vsel %vm1983, %v3255, %v3284
        %vm3365 = vcmask 1044480
        %v3366 = vsel %vm3365, %v3361, %v3310
        %v3367 = vsel %vm3365, %v3362, %v3311
        %v3368 = vsel %vm3365, %v3363, %v3312
        %v3369 = vsel %vm3365, %v3364, %v3313
        %v3370 = vld [vmem:[%s7] sm:$0x7]
        %v3371 = vld [vmem:[%s8] sm:$0x7]
        %3373 = vset.pattern.permute.xlu0 0
        %3374 = vperm.xlu0 %3373, %v3371
        %v3375 = vpop.permute.xlu0 %3374
        %vm3377 = vcmask 220160
        %v3379 = vsel %vm3377, %v3370, 0
        %v3381 = vsel %vm601, %v3334, 0
        %v3383 = vsel %vm601, %v3335, 0
        %v3385 = vsel %vm601, %v3336, 0
        %v3387 = vsel %vm601, %v3337, 0
        %3389 = vmatprep.subr.mxu0 %v3344
        %3390 = vmatpush1.msra.mxu0 %v3343
        %3391 = vmatprep.subr.mxu0 %v3358
        %3392 = vmatpush1.msra.mxu0 %v3357
        %3393 = vmatprep.subr.mxu0 %v3367
        %3394 = vmatpush1.msra.mxu0 %v3366
        %3395 = vmatprep.subr.mxu0 %v3383
        %3396 = vmatpush1.msra.mxu0 %v3381
        %3397 = vmatprep.subr.mxu0 0.0
        %3398 = vmatpush1.msra.mxu0 0.0
        %3399 = vmatprep.subr.mxu0 0.0
        %3400 = vmatpush1.msra.mxu0 0.0
        %3401 = vmatprep.subr.mxu0 0.0
        %3402 = vmatpush1.msra.mxu0 0.0
        %3403 = vmatprep.subr.mxu0 0.0
        %3404 = vmatpush1.msra.mxu0 0.0
        %3405 = vmatprep.subr.mxu0 0.0
        %3406 = vmatpush1.msra.mxu0 0.0
        %3407 = vmatprep.subr.mxu0 0.0
        %3408 = vmatpush1.msra.mxu0 0.0
        %3409 = vmatprep.subr.mxu0 0.0
        %3410 = vmatpush1.msra.mxu0 0.0
        %3411 = vmatprep.subr.mxu0 0.0
        %3412 = vmatpush1.msra.mxu0 0.0
        %3413 = vmatprep.subr.mxu0 0.0
        %3414 = vmatpush1.msra.mxu0 0.0
        %3415 = vmatprep.subr.mxu0 0.0
        %3416 = vmatpush1.msra.mxu0 0.0
        %3417 = vmatprep.subr.mxu0 0.0
        %3418 = vmatpush1.msra.mxu0 0.0
        %3419 = vmatprep.subr.mxu0 0.0
        %3420 = vmatpush1.msra.mxu0 0.0
        %3421 = vmatprep.subr.mxu0 0.0
        %3422 = vmatpush1.msra.mxu0 0.0
        %3423 = vmatprep.subr.mxu0 0.0
        %3424 = vmatpush1.msra.mxu0 0.0
        %3425 = vmatprep.subr.mxu0 0.0
        %3426 = vmatpush1.msra.mxu0 0.0
        %3427 = vmatprep.subr.mxu0 0.0
        %3428 = vmatpush1.msra.mxu0 0.0
        %3429 = vmatprep.subr.mxu0 0.0
        %3430 = vmatpush1.msra.mxu0 0.0
        %3431 = vmatprep.subr.mxu0 0.0
        %3432 = vmatpush1.msra.mxu0 0.0
        %3433 = vmatprep.subr.mxu0 0.0
        %3434 = vmatpush1.msra.mxu0 0.0
        %3435 = vmatprep.subr.mxu0 0.0
        %3436 = vmatpush1.msra.mxu0 0.0
        %3437 = vmatprep.subr.mxu0 0.0
        %3438 = vmatpush1.msra.mxu0 0.0
        %3439 = vmatprep.subr.mxu0 0.0
        %3440 = vmatpush1.msra.mxu0 0.0
        %3441 = vmatprep.subr.mxu0 0.0
        %3442 = vmatpush1.msra.mxu0 0.0
        %3443 = vmatprep.subr.mxu0 0.0
        %3444 = vmatpush1.msra.mxu0 0.0
        %3445 = vmatprep.subr.mxu0 0.0
        %3446 = vmatpush1.msra.mxu0 0.0
        %3447 = vmatprep.subr.mxu0 0.0
        %3448 = vmatpush1.msra.mxu0 0.0
        %3449 = vmatprep.subr.mxu0 0.0
        %3450 = vmatpush1.msra.mxu0 0.0
        %3451 = vmatprep.subr.mxu0 0.0
        %3452 = vmatpush1.msra.mxu0 0.0
        %3453 = vmatprep.mubr.f32.mxu0 0.0
        %3454 = vmatmul.mubr.f32.gmra.mrb[0].mxu0 %v3379
        %v3455 = vpop.f32.mrb[0].mxu0
        %v3456 = vadd.f32 %v3375, %v3455
        %v3457 = vpop.f32.mrb[0].mxu0
        %v3458 = vadd.f32 %v3375, %v3457
        %3459 = vdwg.mxu0
        %3460 = vmatprep.subr.mxu0 %v3346
        %3461 = vmatpush1.msra.mxu0 %v3345
        %3462 = vmatprep.subr.mxu0 %v3360
        %3463 = vmatpush1.msra.mxu0 %v3359
        %3464 = vmatprep.subr.mxu0 %v3369
        %3465 = vmatpush1.msra.mxu0 %v3368
        %3466 = vmatprep.subr.mxu0 %v3387
        %3467 = vmatpush1.msra.mxu0 %v3385
        %3468 = vmatprep.subr.mxu0 0.0
        %3469 = vmatpush1.msra.mxu0 0.0
        %3470 = vmatprep.subr.mxu0 0.0
        %3471 = vmatpush1.msra.mxu0 0.0
        %3472 = vmatprep.subr.mxu0 0.0
        %3473 = vmatpush1.msra.mxu0 0.0
        %3474 = vmatprep.subr.mxu0 0.0
        %3475 = vmatpush1.msra.mxu0 0.0
        %3476 = vmatprep.subr.mxu0 0.0
        %3477 = vmatpush1.msra.mxu0 0.0
        %3478 = vmatprep.subr.mxu0 0.0
        %3479 = vmatpush1.msra.mxu0 0.0
        %3480 = vmatprep.subr.mxu0 0.0
        %3481 = vmatpush1.msra.mxu0 0.0
        %3482 = vmatprep.subr.mxu0 0.0
        %3483 = vmatpush1.msra.mxu0 0.0
        %3484 = vmatprep.subr.mxu0 0.0
        %3485 = vmatpush1.msra.mxu0 0.0
        %3486 = vmatprep.subr.mxu0 0.0
        %3487 = vmatpush1.msra.mxu0 0.0
        %3488 = vmatprep.subr.mxu0 0.0
        %3489 = vmatpush1.msra.mxu0 0.0
        %3490 = vmatprep.subr.mxu0 0.0
        %3491 = vmatpush1.msra.mxu0 0.0
        %3492 = vmatprep.subr.mxu0 0.0
        %3493 = vmatpush1.msra.mxu0 0.0
        %3494 = vmatprep.subr.mxu0 0.0
        %3495 = vmatpush1.msra.mxu0 0.0
        %3496 = vmatprep.subr.mxu0 0.0
        %3497 = vmatpush1.msra.mxu0 0.0
        %3498 = vmatprep.subr.mxu0 0.0
        %3499 = vmatpush1.msra.mxu0 0.0
        %3500 = vmatprep.subr.mxu0 0.0
        %3501 = vmatpush1.msra.mxu0 0.0
        %3502 = vmatprep.subr.mxu0 0.0
        %3503 = vmatpush1.msra.mxu0 0.0
        %3504 = vmatprep.subr.mxu0 0.0
        %3505 = vmatpush1.msra.mxu0 0.0
        %3506 = vmatprep.subr.mxu0 0.0
        %3507 = vmatpush1.msra.mxu0 0.0
        %3508 = vmatprep.subr.mxu0 0.0
        %3509 = vmatpush1.msra.mxu0 0.0
        %3510 = vmatprep.subr.mxu0 0.0
        %3511 = vmatpush1.msra.mxu0 0.0
        %3512 = vmatprep.subr.mxu0 0.0
        %3513 = vmatpush1.msra.mxu0 0.0
        %3514 = vmatprep.subr.mxu0 0.0
        %3515 = vmatpush1.msra.mxu0 0.0
        %3516 = vmatprep.subr.mxu0 0.0
        %3517 = vmatpush1.msra.mxu0 0.0
        %3518 = vmatprep.subr.mxu0 0.0
        %3519 = vmatpush1.msra.mxu0 0.0
        %3520 = vmatprep.subr.mxu0 0.0
        %3521 = vmatpush1.msra.mxu0 0.0
        %3522 = vmatprep.subr.mxu0 0.0
        %3523 = vmatpush1.msra.mxu0 0.0
        %3524 = vmatprep.mubr.f32.mxu0 0.0
        %3525 = vmatmul.mubr.f32.gmra.mrb[0].mxu0 %v3379
        %v3526 = vpop.f32.mrb[0].mxu0
        %v3527 = vadd.f32 %v3375, %v3526
        %v3528 = vpop.f32.mrb[0].mxu0
        %v3529 = vadd.f32 %v3375, %v3528
        %3530 = vdwg.mxu0
        %v3531 = vmax.f32 %v3456, 0.0
        %v3532 = vmax.f32 %v3458, 0.0
        %v3533 = vmax.f32 %v3527, 0.0
        %v3534 = vmax.f32 %v3529, 0.0
        %3539 = vrot.lane.b32.xlu0 %v3531, 17
        %v3540 = vpop.permute.xlu0 %3539
        %3541 = vrot.lane.b32.xlu0 %v3532, 17
        %v3542 = vpop.permute.xlu0 %3541
        %3543 = vrot.lane.b32.xlu0 %v3533, 17
        %v3544 = vpop.permute.xlu0 %3543
        %3545 = vrot.lane.b32.xlu0 %v3534, 17
        %v3546 = vpop.permute.xlu0 %3545
        %v3547 = vsel %vm2752, %v3540, %v3542
        %v3548 = vsel %vm2752, %v3542, %v3544
        %v3549 = vsel %vm2752, %v3544, %v3546
        %v3555 = vsel %vm2752, 0.0, %v3540
        %v3556 = vsel %vm2752, %v3546, 0.0
        %v3557 = vmul.f32 %v3555, %v2768
        %v3558 = vmul.f32 %v3547, %v2772
        %v3559 = vmul.f32 %v3548, %v2776
        %v3560 = vmul.f32 %v3549, %v2780
        %v3561 = vmul.f32 %v3555, %v2809
        %v3562 = vmul.f32 %v3547, %v2817
        %v3563 = vmul.f32 %v3548, %v2818
        %v3564 = vmul.f32 %v3549, %v2819
        %v3565 = vmul.f32 %v3556, %v2815
        %v3566 = vmul.f32 %v3555, %v2850
        %v3567 = vmul.f32 %v3547, %v2858
        %v3568 = vmul.f32 %v3548, %v2859
        %v3569 = vmul.f32 %v3549, %v2860
        %v3570 = vmul.f32 %v3556, %v2856
        %v3571 = vmul.f32 %v3555, %v2891
        %v3572 = vmul.f32 %v3547, %v2899
        %v3573 = vmul.f32 %v3548, %v2900
        %v3574 = vmul.f32 %v3549, %v2901
        %v3575 = vmul.f32 %v3556, %v2897
        %v3576 = vmul.f32 %v3555, %v2932
        %v3577 = vmul.f32 %v3547, %v2939
        %v3578 = vmul.f32 %v3548, %v2940
        %v3579 = vmul.f32 %v3549, %v2941
        %v3580 = vmul.f32 %v3556, %v2938
        %v3581 = vmul.f32 %v3555, %v2972
        %v3582 = vmul.f32 %v3547, %v2980
        %v3583 = vmul.f32 %v3548, %v2981
        %v3584 = vmul.f32 %v3549, %v2982
        %v3585 = vmul.f32 %v3556, %v2978
        %v3586 = vmul.f32 %v3555, %v3013
        %v3587 = vmul.f32 %v3547, %v3020
        %v3588 = vmul.f32 %v3548, %v3021
        %v3589 = vmul.f32 %v3549, %v3022
        %v3590 = vmul.f32 %v3556, %v3019
        %v3591 = vmul.f32 %v3555, %v3053
        %v3592 = vmul.f32 %v3547, %v3061
        %v3593 = vmul.f32 %v3548, %v3062
        %v3594 = vmul.f32 %v3549, %v3063
        %v3595 = vmul.f32 %v3556, %v3059
        %v3596 = vmul.f32 %v3555, %v3094
        %v3597 = vmul.f32 %v3547, %v3102
        %v3598 = vmul.f32 %v3548, %v3103
        %v3599 = vmul.f32 %v3549, %v3104
        %v3600 = vmul.f32 %v3556, %v3100
        %v3606 = vrot.slane %v3561, 5
        %v3607 = vrot.slane %v3562, 5
        %v3608 = vrot.slane %v3563, 5
        %v3609 = vrot.slane %v3564, 5
        %v3610 = vrot.slane %v3565, 5
        %3611 = vrot.lane.b32.xlu0 %v3606, 127
        %v3612 = vpop.permute.xlu0 %3611
        %3613 = vrot.lane.b32.xlu0 %v3607, 127
        %v3614 = vpop.permute.xlu0 %3613
        %3615 = vrot.lane.b32.xlu0 %v3608, 127
        %v3616 = vpop.permute.xlu0 %3615
        %3617 = vrot.lane.b32.xlu0 %v3609, 127
        %v3618 = vpop.permute.xlu0 %3617
        %3619 = vrot.lane.b32.xlu0 %v3610, 127
        %v3620 = vpop.permute.xlu0 %3619
        %v3621 = vsel %vm3135, %v3612, %v3614
        %v3622 = vsel %vm3135, %v3614, %v3616
        %v3623 = vsel %vm3135, %v3616, %v3618
        %v3624 = vsel %vm3135, %v3618, %v3620
        %v3634 = vrot.slane %v3566, 2
        %v3635 = vrot.slane %v3567, 2
        %v3636 = vrot.slane %v3568, 2
        %v3637 = vrot.slane %v3569, 2
        %v3638 = vrot.slane %v3570, 2
        %3639 = vrot.lane.b32.xlu0 %v3634, 126
        %v3640 = vpop.permute.xlu0 %3639
        %3641 = vrot.lane.b32.xlu0 %v3635, 126
        %v3642 = vpop.permute.xlu0 %3641
        %3643 = vrot.lane.b32.xlu0 %v3636, 126
        %v3644 = vpop.permute.xlu0 %3643
        %3645 = vrot.lane.b32.xlu0 %v3637, 126
        %v3646 = vpop.permute.xlu0 %3645
        %3647 = vrot.lane.b32.xlu0 %v3638, 126
        %v3648 = vpop.permute.xlu0 %3647
        %v3649 = vsel %vm3164, %v3640, %v3642
        %v3650 = vsel %vm3164, %v3642, %v3644
        %v3651 = vsel %vm3164, %v3644, %v3646
        %v3652 = vsel %vm3164, %v3646, %v3648
        %v3662 = vrot.slane %v3571, 7
        %v3663 = vrot.slane %v3572, 7
        %v3664 = vrot.slane %v3573, 7
        %v3665 = vrot.slane %v3574, 7
        %v3666 = vrot.slane %v3575, 7
        %3667 = vrot.lane.b32.xlu0 %v3662, 112
        %v3668 = vpop.permute.xlu0 %3667
        %3669 = vrot.lane.b32.xlu0 %v3663, 112
        %v3670 = vpop.permute.xlu0 %3669
        %3671 = vrot.lane.b32.xlu0 %v3664, 112
        %v3672 = vpop.permute.xlu0 %3671
        %3673 = vrot.lane.b32.xlu0 %v3665, 112
        %v3674 = vpop.permute.xlu0 %3673
        %3675 = vrot.lane.b32.xlu0 %v3666, 112
        %v3676 = vpop.permute.xlu0 %3675
        %v3677 = vsel %vm3193, %v3668, %v3670
        %v3678 = vsel %vm3193, %v3670, %v3672
        %v3679 = vsel %vm3193, %v3672, %v3674
        %v3680 = vsel %vm3193, %v3674, %v3676
        %v3690 = vrot.slane %v3576, 4
        %v3691 = vrot.slane %v3577, 4
        %v3692 = vrot.slane %v3578, 4
        %v3693 = vrot.slane %v3579, 4
        %v3694 = vrot.slane %v3580, 4
        %3695 = vrot.lane.b32.xlu0 %v3690, 111
        %v3696 = vpop.permute.xlu0 %3695
        %3697 = vrot.lane.b32.xlu0 %v3691, 111
        %v3698 = vpop.permute.xlu0 %3697
        %3699 = vrot.lane.b32.xlu0 %v3692, 111
        %v3700 = vpop.permute.xlu0 %3699
        %3701 = vrot.lane.b32.xlu0 %v3693, 111
        %v3702 = vpop.permute.xlu0 %3701
        %3703 = vrot.lane.b32.xlu0 %v3694, 111
        %v3704 = vpop.permute.xlu0 %3703
        %v3705 = vsel %vm3222, %v3696, %v3698
        %v3706 = vsel %vm3222, %v3698, %v3700
        %v3707 = vsel %vm3222, %v3700, %v3702
        %v3708 = vsel %vm3222, %v3702, %v3704
        %v3718 = vrot.slane %v3581, 1
        %v3719 = vrot.slane %v3582, 1
        %v3720 = vrot.slane %v3583, 1
        %v3721 = vrot.slane %v3584, 1
        %v3722 = vrot.slane %v3585, 1
        %3723 = vrot.lane.b32.xlu0 %v3718, 110
        %v3724 = vpop.permute.xlu0 %3723
        %3725 = vrot.lane.b32.xlu0 %v3719, 110
        %v3726 = vpop.permute.xlu0 %3725
        %3727 = vrot.lane.b32.xlu0 %v3720, 110
        %v3728 = vpop.permute.xlu0 %3727
        %3729 = vrot.lane.b32.xlu0 %v3721, 110
        %v3730 = vpop.permute.xlu0 %3729
        %3731 = vrot.lane.b32.xlu0 %v3722, 110
        %v3732 = vpop.permute.xlu0 %3731
        %v3733 = vsel %vm3251, %v3724, %v3726
        %v3734 = vsel %vm3251, %v3726, %v3728
        %v3735 = vsel %vm3251, %v3728, %v3730
        %v3736 = vsel %vm3251, %v3730, %v3732
        %v3746 = vrot.slane %v3586, 6
        %v3747 = vrot.slane %v3587, 6
        %v3748 = vrot.slane %v3588, 6
        %v3749 = vrot.slane %v3589, 6
        %v3750 = vrot.slane %v3590, 6
        %3751 = vrot.lane.b32.xlu0 %v3746, 96
        %v3752 = vpop.permute.xlu0 %3751
        %3753 = vrot.lane.b32.xlu0 %v3747, 96
        %v3754 = vpop.permute.xlu0 %3753
        %3755 = vrot.lane.b32.xlu0 %v3748, 96
        %v3756 = vpop.permute.xlu0 %3755
        %3757 = vrot.lane.b32.xlu0 %v3749, 96
        %v3758 = vpop.permute.xlu0 %3757
        %3759 = vrot.lane.b32.xlu0 %v3750, 96
        %v3760 = vpop.permute.xlu0 %3759
        %v3761 = vsel %vm3280, %v3752, %v3754
        %v3762 = vsel %vm3280, %v3754, %v3756
        %v3763 = vsel %vm3280, %v3756, %v3758
        %v3764 = vsel %vm3280, %v3758, %v3760
        %v3774 = vrot.slane %v3591, 3
        %v3775 = vrot.slane %v3592, 3
        %v3776 = vrot.slane %v3593, 3
        %v3777 = vrot.slane %v3594, 3
        %v3778 = vrot.slane %v3595, 3
        %3779 = vrot.lane.b32.xlu0 %v3774, 95
        %v3780 = vpop.permute.xlu0 %3779
        %3781 = vrot.lane.b32.xlu0 %v3775, 95
        %v3782 = vpop.permute.xlu0 %3781
        %3783 = vrot.lane.b32.xlu0 %v3776, 95
        %v3784 = vpop.permute.xlu0 %3783
        %3785 = vrot.lane.b32.xlu0 %v3777, 95
        %v3786 = vpop.permute.xlu0 %3785
        %3787 = vrot.lane.b32.xlu0 %v3778, 95
        %v3788 = vpop.permute.xlu0 %3787
        %v3789 = vsel %vm3309, %v3780, %v3782
        %v3790 = vsel %vm3309, %v3782, %v3784
        %v3791 = vsel %vm3309, %v3784, %v3786
        %v3792 = vsel %vm3309, %v3786, %v3788
        %3802 = vrot.lane.b32.xlu0 %v3596, 94
        %v3803 = vpop.permute.xlu0 %3802
        %3804 = vrot.lane.b32.xlu0 %v3597, 94
        %v3805 = vpop.permute.xlu0 %3804
        %3806 = vrot.lane.b32.xlu0 %v3598, 94
        %v3807 = vpop.permute.xlu0 %3806
        %3808 = vrot.lane.b32.xlu0 %v3599, 94
        %v3809 = vpop.permute.xlu0 %3808
        %3810 = vrot.lane.b32.xlu0 %v3600, 94
        %v3811 = vpop.permute.xlu0 %3810
        %v3812 = vsel %vm3333, %v3803, %v3805
        %v3813 = vsel %vm3333, %v3805, %v3807
        %v3814 = vsel %vm3333, %v3807, %v3809
        %v3815 = vsel %vm3333, %v3809, %v3811
        %v3816 = vsel %vm601, %v3557, %v3621
        %v3817 = vsel %vm601, %v3558, %v3622
        %v3818 = vsel %vm601, %v3559, %v3623
        %v3819 = vsel %vm601, %v3560, %v3624
        %v3820 = vsel %vm3342, %v3816, %v3649
        %v3821 = vsel %vm3342, %v3817, %v3650
        %v3822 = vsel %vm3342, %v3818, %v3651
        %v3823 = vsel %vm3342, %v3819, %v3652
        %v3824 = vsel %vm1980, %v3649, %v3677
        %v3825 = vsel %vm1980, %v3650, %v3678
        %v3826 = vsel %vm1980, %v3651, %v3679
        %v3827 = vsel %vm1980, %v3652, %v3680
        %v3828 = vsel %vm3351, %v3824, %v3705
        %v3829 = vsel %vm3351, %v3825, %v3706
        %v3830 = vsel %vm3351, %v3826, %v3707
        %v3831 = vsel %vm3351, %v3827, %v3708
        %v3832 = vsel %vm3356, %v3828, %v3733
        %v3833 = vsel %vm3356, %v3829, %v3734
        %v3834 = vsel %vm3356, %v3830, %v3735
        %v3835 = vsel %vm3356, %v3831, %v3736
        %v3836 = vsel %vm1983, %v3733, %v3761
        %v3837 = vsel %vm1983, %v3734, %v3762
        %v3838 = vsel %vm1983, %v3735, %v3763
        %v3839 = vsel %vm1983, %v3736, %v3764
        %v3840 = vsel %vm3365, %v3836, %v3789
        %v3841 = vsel %vm3365, %v3837, %v3790
        %v3842 = vsel %vm3365, %v3838, %v3791
        %v3843 = vsel %vm3365, %v3839, %v3792
        %v3844 = vld [vmem:[%s9] sm:$0xff]
        %v3845 = vld [vmem:[%s9 + $0x8] sm:$0xff]
        %v3846 = vld [vmem:[%s9 + $0x10] sm:$0xff]
        %v3847 = vld [vmem:[%s9 + $0x18] sm:$0xff]
        %v3848 = vld [vmem:[%s10] sm:$0xff]
        %v3849 = vld [vmem:[%s10 + $0x8] sm:$0xff]
        %v3850 = vld [vmem:[%s10 + $0x10] sm:$0xff]
        %v3851 = vld [vmem:[%s10 + $0x18] sm:$0xff]
        %3853 = vset.pattern.permute.xlu0 0
        %3854 = vperm.xlu0 %3853, %v3848
        %v3855 = vpop.permute.xlu0 %3854
        %3858 = vset.pattern.permute.xlu0 0
        %3859 = vperm.xlu0 %3858, %v3849
        %v3860 = vpop.permute.xlu0 %3859
        %3863 = vset.pattern.permute.xlu0 0
        %3864 = vperm.xlu0 %3863, %v3850
        %v3865 = vpop.permute.xlu0 %3864
        %3868 = vset.pattern.permute.xlu0 0
        %3869 = vperm.xlu0 %3868, %v3851
        %v3870 = vpop.permute.xlu0 %3869
        %v3873 = vsel %vm3377, %v3844, 0
        %v3876 = vsel %vm3377, %v3845, 0
        %v3879 = vsel %vm3377, %v3846, 0
        %v3882 = vsel %vm3377, %v3847, 0
        %v3884 = vsel %vm601, %v3812, 0
        %v3886 = vsel %vm601, %v3813, 0
        %v3888 = vsel %vm601, %v3814, 0
        %v3890 = vsel %vm601, %v3815, 0
        %3892 = vmatprep.subr.mxu0 %v3821
        %3893 = vmatpush1.msra.mxu0 %v3820
        %3894 = vmatprep.subr.mxu0 %v3833
        %3895 = vmatpush1.msra.mxu0 %v3832
        %3896 = vmatprep.subr.mxu0 %v3841
        %3897 = vmatpush1.msra.mxu0 %v3840
        %3898 = vmatprep.subr.mxu0 %v3886
        %3899 = vmatpush1.msra.mxu0 %v3884
        %3900 = vmatprep.subr.mxu0 0.0
        %3901 = vmatpush1.msra.mxu0 0.0
        %3902 = vmatprep.subr.mxu0 0.0
        %3903 = vmatpush1.msra.mxu0 0.0
        %3904 = vmatprep.subr.mxu0 0.0
        %3905 = vmatpush1.msra.mxu0 0.0
        %3906 = vmatprep.subr.mxu0 0.0
        %3907 = vmatpush1.msra.mxu0 0.0
        %3908 = vmatprep.subr.mxu0 0.0
        %3909 = vmatpush1.msra.mxu0 0.0
        %3910 = vmatprep.subr.mxu0 0.0
        %3911 = vmatpush1.msra.mxu0 0.0
        %3912 = vmatprep.subr.mxu0 0.0
        %3913 = vmatpush1.msra.mxu0 0.0
        %3914 = vmatprep.subr.mxu0 0.0
        %3915 = vmatpush1.msra.mxu0 0.0
        %3916 = vmatprep.subr.mxu0 0.0
        %3917 = vmatpush1.msra.mxu0 0.0
        %3918 = vmatprep.subr.mxu0 0.0
        %3919 = vmatpush1.msra.mxu0 0.0
        %3920 = vmatprep.subr.mxu0 0.0
        %3921 = vmatpush1.msra.mxu0 0.0
        %3922 = vmatprep.subr.mxu0 0.0
        %3923 = vmatpush1.msra.mxu0 0.0
        %3924 = vmatprep.subr.mxu0 0.0
        %3925 = vmatpush1.msra.mxu0 0.0
        %3926 = vmatprep.subr.mxu0 0.0
        %3927 = vmatpush1.msra.mxu0 0.0
        %3928 = vmatprep.subr.mxu0 0.0
        %3929 = vmatpush1.msra.mxu0 0.0
        %3930 = vmatprep.subr.mxu0 0.0
        %3931 = vmatpush1.msra.mxu0 0.0
        %3932 = vmatprep.subr.mxu0 0.0
        %3933 = vmatpush1.msra.mxu0 0.0
        %3934 = vmatprep.subr.mxu0 0.0
        %3935 = vmatpush1.msra.mxu0 0.0
        %3936 = vmatprep.subr.mxu0 0.0
        %3937 = vmatpush1.msra.mxu0 0.0
        %3938 = vmatprep.subr.mxu0 0.0
        %3939 = vmatpush1.msra.mxu0 0.0
        %3940 = vmatprep.subr.mxu0 0.0
        %3941 = vmatpush1.msra.mxu0 0.0
        %3942 = vmatprep.subr.mxu0 0.0
        %3943 = vmatpush1.msra.mxu0 0.0
        %3944 = vmatprep.subr.mxu0 0.0
        %3945 = vmatpush1.msra.mxu0 0.0
        %3946 = vmatprep.subr.mxu0 0.0
        %3947 = vmatpush1.msra.mxu0 0.0
        %3948 = vmatprep.subr.mxu0 0.0
        %3949 = vmatpush1.msra.mxu0 0.0
        %3950 = vmatprep.subr.mxu0 0.0
        %3951 = vmatpush1.msra.mxu0 0.0
        %3952 = vmatprep.subr.mxu0 0.0
        %3953 = vmatpush1.msra.mxu0 0.0
        %3954 = vmatprep.subr.mxu0 0.0
        %3955 = vmatpush1.msra.mxu0 0.0
        %3956 = vmatprep.mubr.f32.mxu0 0.0
        %3957 = vmatmul.mubr.f32.gmra.mrb[0].mxu0 %v3873
        %v3958 = vpop.f32.mrb[0].mxu0
        %v3959 = vadd.f32 %v3855, %v3958
        %v3960 = vpop.f32.mrb[0].mxu0
        %v3961 = vadd.f32 %v3855, %v3960
        %3962 = vmatprep.mubr.f32.mxu0 0.0
        %3963 = vmatmul.mubr.f32.gmra.mrb[0].mxu0 %v3876
        %v3964 = vpop.f32.mrb[0].mxu0
        %v3965 = vadd.f32 %v3860, %v3964
        %v3966 = vpop.f32.mrb[0].mxu0
        %v3967 = vadd.f32 %v3860, %v3966
        %3968 = vmatprep.mubr.f32.mxu0 0.0
        %3969 = vmatmul.mubr.f32.gmra.mrb[0].mxu0 %v3879
        %v3970 = vpop.f32.mrb[0].mxu0
        %v3971 = vadd.f32 %v3865, %v3970
        %v3972 = vpop.f32.mrb[0].mxu0
        %v3973 = vadd.f32 %v3865, %v3972
        %3974 = vmatprep.mubr.f32.mxu0 0.0
        %3975 = vmatmul.mubr.f32.gmra.mrb[0].mxu0 %v3882
        %v3976 = vpop.f32.mrb[0].mxu0
        %v3977 = vadd.f32 %v3870, %v3976
        %v3978 = vpop.f32.mrb[0].mxu0
        %v3979 = vadd.f32 %v3870, %v3978
        %3980 = vdwg.mxu0
        %3981 = vmatprep.subr.mxu0 %v3823
        %3982 = vmatpush1.msra.mxu0 %v3822
        %3983 = vmatprep.subr.mxu0 %v3835
        %3984 = vmatpush1.msra.mxu0 %v3834
        %3985 = vmatprep.subr.mxu0 %v3843
        %3986 = vmatpush1.msra.mxu0 %v3842
        %3987 = vmatprep.subr.mxu0 %v3890
        %3988 = vmatpush1.msra.mxu0 %v3888
        %3989 = vmatprep.subr.mxu0 0.0
        %3990 = vmatpush1.msra.mxu0 0.0
        %3991 = vmatprep.subr.mxu0 0.0
        %3992 = vmatpush1.msra.mxu0 0.0
        %3993 = vmatprep.subr.mxu0 0.0
        %3994 = vmatpush1.msra.mxu0 0.0
        %3995 = vmatprep.subr.mxu0 0.0
        %3996 = vmatpush1.msra.mxu0 0.0
        %3997 = vmatprep.subr.mxu0 0.0
        %3998 = vmatpush1.msra.mxu0 0.0
        %3999 = vmatprep.subr.mxu0 0.0
        %4000 = vmatpush1.msra.mxu0 0.0
        %4001 = vmatprep.subr.mxu0 0.0
        %4002 = vmatpush1.msra.mxu0 0.0
        %4003 = vmatprep.subr.mxu0 0.0
        %4004 = vmatpush1.msra.mxu0 0.0
        %4005 = vmatprep.subr.mxu0 0.0
        %4006 = vmatpush1.msra.mxu0 0.0
        %4007 = vmatprep.subr.mxu0 0.0
        %4008 = vmatpush1.msra.mxu0 0.0
        %4009 = vmatprep.subr.mxu0 0.0
        %4010 = vmatpush1.msra.mxu0 0.0
        %4011 = vmatprep.subr.mxu0 0.0
        %4012 = vmatpush1.msra.mxu0 0.0
        %4013 = vmatprep.subr.mxu0 0.0
        %4014 = vmatpush1.msra.mxu0 0.0
        %4015 = vmatprep.subr.mxu0 0.0
        %4016 = vmatpush1.msra.mxu0 0.0
        %4017 = vmatprep.subr.mxu0 0.0
        %4018 = vmatpush1.msra.mxu0 0.0
        %4019 = vmatprep.subr.mxu0 0.0
        %4020 = vmatpush1.msra.mxu0 0.0
        %4021 = vmatprep.subr.mxu0 0.0
        %4022 = vmatpush1.msra.mxu0 0.0
        %4023 = vmatprep.subr.mxu0 0.0
        %4024 = vmatpush1.msra.mxu0 0.0
        %4025 = vmatprep.subr.mxu0 0.0
        %4026 = vmatpush1.msra.mxu0 0.0
        %4027 = vmatprep.subr.mxu0 0.0
        %4028 = vmatpush1.msra.mxu0 0.0
        %4029 = vmatprep.subr.mxu0 0.0
        %4030 = vmatpush1.msra.mxu0 0.0
        %4031 = vmatprep.subr.mxu0 0.0
        %4032 = vmatpush1.msra.mxu0 0.0
        %4033 = vmatprep.subr.mxu0 0.0
        %4034 = vmatpush1.msra.mxu0 0.0
        %4035 = vmatprep.subr.mxu0 0.0
        %4036 = vmatpush1.msra.mxu0 0.0
        %4037 = vmatprep.subr.mxu0 0.0
        %4038 = vmatpush1.msra.mxu0 0.0
        %4039 = vmatprep.subr.mxu0 0.0
        %4040 = vmatpush1.msra.mxu0 0.0
        %4041 = vmatprep.subr.mxu0 0.0
        %4042 = vmatpush1.msra.mxu0 0.0
        %4043 = vmatprep.subr.mxu0 0.0
        %4044 = vmatpush1.msra.mxu0 0.0
        %4045 = vmatprep.mubr.f32.mxu0 0.0
        %4046 = vmatmul.mubr.f32.gmra.mrb[0].mxu0 %v3873
        %v4047 = vpop.f32.mrb[0].mxu0
        %v4048 = vadd.f32 %v3855, %v4047
        %v4049 = vpop.f32.mrb[0].mxu0
        %v4050 = vadd.f32 %v3855, %v4049
        %4051 = vmatprep.mubr.f32.mxu0 0.0
        %4052 = vmatmul.mubr.f32.gmra.mrb[0].mxu0 %v3876
        %v4053 = vpop.f32.mrb[0].mxu0
        %v4054 = vadd.f32 %v3860, %v4053
        %v4055 = vpop.f32.mrb[0].mxu0
        %v4056 = vadd.f32 %v3860, %v4055
        %4057 = vmatprep.mubr.f32.mxu0 0.0
        %4058 = vmatmul.mubr.f32.gmra.mrb[0].mxu0 %v3879
        %v4059 = vpop.f32.mrb[0].mxu0
        %v4060 = vadd.f32 %v3865, %v4059
        %v4061 = vpop.f32.mrb[0].mxu0
        %v4062 = vadd.f32 %v3865, %v4061
        %4063 = vmatprep.mubr.f32.mxu0 0.0
        %4064 = vmatmul.mubr.f32.gmra.mrb[0].mxu0 %v3882
        %v4065 = vpop.f32.mrb[0].mxu0
        %v4066 = vadd.f32 %v3870, %v4065
        %v4067 = vpop.f32.mrb[0].mxu0
        %v4068 = vadd.f32 %v3870, %v4067
        %4069 = vdwg.mxu0
        %v4070 = vmax.f32 %v3959, 0.0
        %v4071 = vmax.f32 %v3961, 0.0
        %v4072 = vmax.f32 %v4048, 0.0
        %v4073 = vmax.f32 %v4050, 0.0
        %v4074 = vmax.f32 %v3965, 0.0
        %v4075 = vmax.f32 %v3967, 0.0
        %v4076 = vmax.f32 %v4054, 0.0
        %v4077 = vmax.f32 %v4056, 0.0
        %v4078 = vmax.f32 %v3971, 0.0
        %v4079 = vmax.f32 %v3973, 0.0
        %v4080 = vmax.f32 %v4060, 0.0
        %v4081 = vmax.f32 %v4062, 0.0
        %v4082 = vmax.f32 %v3977, 0.0
        %v4083 = vmax.f32 %v3979, 0.0
        %v4084 = vmax.f32 %v4066, 0.0
        %v4085 = vmax.f32 %v4068, 0.0
        %v4086 = vadd.f32 %v4070, %v4071
        %4087 = vadd.xlane.f32.xlu0 %v4086
        %v4088 = vpop.xlane.xlu0 %4087
        %v4089 = vadd.f32 %v4074, %v4075
        %4090 = vadd.xlane.f32.xlu0 %v4089
        %v4091 = vpop.xlane.xlu0 %4090
        %v4092 = vadd.f32 %v4078, %v4079
        %4093 = vadd.xlane.f32.xlu0 %v4092
        %v4094 = vpop.xlane.xlu0 %4093
        %v4095 = vadd.f32 %v4082, %v4083
        %4096 = vadd.xlane.f32.xlu0 %v4095
        %v4097 = vpop.xlane.xlu0 %4096
        %v4098 = vrcp.pop 256.0
        %v4099 = vmul.f32 %v4088, %v4098
        %v4100 = vmul.f32 %v4091, %v4098
        %v4101 = vmul.f32 %v4094, %v4098
        %v4102 = vmul.f32 %v4097, %v4098
        %v4103 = vld [vmem:[%s11] sm:$0xff]
        %v4104 = vld [vmem:[%s11 + $0x8] sm:$0xff]
        %v4105 = vld [vmem:[%s11 + $0x10] sm:$0xff]
        %v4106 = vld [vmem:[%s11 + $0x18] sm:$0xff]
        %v4107 = vmul.f32 %v4099, %v4103
        %v4108 = vmul.f32 %v4100, %v4104
        %v4109 = vmul.f32 %v4101, %v4105
        %v4110 = vmul.f32 %v4102, %v4106
        %v4111 = vadd.f32 %v4107, %v4108
        %v4112 = vadd.f32 %v4111, %v4109
        %v4113 = vadd.f32 %v4112, %v4110
        %v4114 = vrot.slane %v4113, 4
        %v4115 = vadd.f32 %v4113, %v4114
        %v4116 = vrot.slane %v4115, 2
        %v4117 = vadd.f32 %v4115, %v4116
        %v4118 = vrot.slane %v4117, 1
        %v4119 = vadd.f32 %v4117, %v4118
        %v4120 = vld [vmem:[%s12] sm:$0x1]
        %v4121 = vadd.f32 %v4119, %v4120
        %4122 = vst [vmem:[%s450] sm:$0x1] %v4121
        %v4123 = vadd.f32 %v4072, %v4073
        %4124 = vadd.xlane.f32.xlu0 %v4123
        %v4125 = vpop.xlane.xlu0 %4124
        %v4126 = vadd.f32 %v4076, %v4077
        %4127 = vadd.xlane.f32.xlu0 %v4126
        %v4128 = vpop.xlane.xlu0 %4127
        %v4129 = vadd.f32 %v4080, %v4081
        %4130 = vadd.xlane.f32.xlu0 %v4129
        %v4131 = vpop.xlane.xlu0 %4130
        %v4132 = vadd.f32 %v4084, %v4085
        %4133 = vadd.xlane.f32.xlu0 %v4132
        %v4134 = vpop.xlane.xlu0 %4133
        %v4135 = vmul.f32 %v4125, %v4098
        %v4136 = vmul.f32 %v4128, %v4098
        %v4137 = vmul.f32 %v4131, %v4098
        %v4138 = vmul.f32 %v4134, %v4098
        %v4139 = vld [vmem:[%s11] sm:$0xff]
        %v4140 = vld [vmem:[%s11 + $0x8] sm:$0xff]
        %v4141 = vld [vmem:[%s11 + $0x10] sm:$0xff]
        %v4142 = vld [vmem:[%s11 + $0x18] sm:$0xff]
        %v4143 = vmul.f32 %v4135, %v4139
        %v4144 = vmul.f32 %v4136, %v4140
        %v4145 = vmul.f32 %v4137, %v4141
        %v4146 = vmul.f32 %v4138, %v4142
        %v4147 = vadd.f32 %v4143, %v4144
        %v4148 = vadd.f32 %v4147, %v4145
        %v4149 = vadd.f32 %v4148, %v4146
        %v4150 = vrot.slane %v4149, 4
        %v4151 = vadd.f32 %v4149, %v4150
        %v4152 = vrot.slane %v4151, 2
        %v4153 = vadd.f32 %v4151, %v4152
        %v4154 = vrot.slane %v4153, 1
        %v4155 = vadd.f32 %v4153, %v4154
        %v4156 = vld [vmem:[%s12] sm:$0x1]
        %v4157 = vadd.f32 %v4155, %v4156
        %s4158 = scalar_lea.vmem %s450, 1 [#allocation2]
        %4159 = vst [vmem:[%s4158] sm:$0x1] %v4157
        %s4160 = sand.u32 %s318, 1
        %s4161 = scalar_lea.sflag [#allocation3], %s4160
        %s4162 = sand.u32 %s318, 1
        %s4163 = smul.addr %s4162, 2
        %s4164 = scalar_lea.vmem [#allocation2], %s4163
        // Predicated region
        $region73: #{p2p_forward.1} parent=71 // pred_check
          %p4165 = pneg %p328
        $region74: #{p2p_forward.1} parent=71 // pred_check_branch
          %4167 = sbr.rel (%p4165) target = $region76
        $region75: #{p2p_forward.1} parent=71 // pred_region
          %s4168 = smul.u32 2, %s27
          %s4170 = ssub.s32 32, 32
          %4171 = vsyncadd %s4161, %s4170
          %s4172 = smul.addr %s4168, 16
          %s4173 = scalar_lea.hbm %s13, %s4172
          %s4174 = sshll.u32 %s4164, 4
          %s4175 = int_to_ptr.vmem [resolvable:$true] %s4174
          %4180 = dma.vmem_to_hbm [thread:$0]  %s4175, 32, %s4173, %s4161, 16, 16, 1
        $region76: #{p2p_forward.1} parent=71 // pred_fallthru
          _
      $region72: #{p2p_forward.1} parent=5 // pred_fallthru
        _
      %p4181 = scmp.le.s32.totalorder 2, %s22
      // Predicated region
      $region77: #{p2p_forward.1} parent=5 // pred_check
        %p4182 = pneg %p4181
      $region78: #{p2p_forward.1} parent=5 // pred_check_branch
        %4184 = sbr.rel (%p4182) target = $region80
      $region79: #{p2p_forward.1} parent=5 // pred_region
        %s4185 = ssub.s32 %s22, 2
        // Predicated region
        $region81: #{p2p_forward.1} parent=79 // pred_check
          %p4186 = pneg %p334
        $region82: #{p2p_forward.1} parent=79 // pred_check_branch
          %4188 = sbr.rel (%p4186) target = $region84
        $region83: #{p2p_forward.1} parent=79 // pred_region
          %s4189 = sand.u32 %s319, 1
          %s4190 = scalar_lea.sflag [#allocation3], %s4189
          %s4191 = sand.u32 %s319, 1
          %s4192 = smul.addr %s4191, 2
          %s4193 = scalar_lea.vmem [#allocation2], %s4192
          %4194 = dma.done %s4190, 32
        $region84: #{p2p_forward.1} parent=79 // pred_fallthru
          _
      $region80: #{p2p_forward.1} parent=5 // pred_fallthru
        _
    $region6: #{p2p_forward.1} parent=1 // loop_footer
      %s26 = sadd.s32 1, %s22
    $region7: #{p2p_forward.1} parent=1 // loop_footer_branch
      %21 = sbr.rel target = $region3
    $region8: #{p2p_forward.1} parent=1 // loop_exit
      _
    %4195 = vsyncpa [#allocation3], 1
    %s4196 = scalar_lea.sflag [#allocation3], 1
    %4197 = vsyncpa %s4196, 1

</llo_original>
